<compile_context>
chip_gen: v7x
topology: tpu7x:2x2x1
jax: 0.10.0
libtpu: 0.0.40
codegen_flags: <defaults>
</compile_context>

<pallas_src>
import functools
import math

import jax
import jax.numpy as jnp
from jax.experimental import pallas as pl
from jax.experimental.pallas import tpu as pltpu

# ----------------------------- small ViT config -----------------------------
IMG = 16            # image spatial size
PATCH = 4           # patch size (kernel == stride)
CHANNELS = 3        # RGB pixel_values
HIDDEN = 32         # hidden_size
HEADS = 2
HEAD_DIM = HIDDEN // HEADS
MLP = 4 * HIDDEN    # intermediate_size
LAYERS = 2          # encoder depth (ViT-base has 12; scaled down)
N_PATCHES = (IMG // PATCH) ** 2
SEQ = N_PATCHES + 1                 # +1 CLS token
PATCH_DIM = CHANNELS * PATCH * PATCH
PITCH_CLASSES = 5
ROLL_CLASSES = 7
HEAD_PACK = 128                     # lane-dense packed logits [pitch|roll|pad]
LN_EPS = 1e-12                      # HF ViT layer_norm_eps
BATCH = 2
LANES = 128

# ------------------------- packed-slab layout constants ----------------------
# Global weight slab (bf16): patch embedding + packed classifier heads.
WG_PATCH = 0                                   # rows [0:48), cols [0:32)
WG_HEADS = PATCH_DIM                           # rows [48:80), cols [0:128)
WG_ROWS = PATCH_DIM + HIDDEN                   # 80

# Per-layer weight slab (bf16), shape (LAYERS, WL_ROWS, 128).
WL_QKV = 0                                     # (32,  96)
WL_WO = WL_QKV + HIDDEN                        # (32,  32)
WL_W1 = WL_WO + HIDDEN                         # (32, 128)
WL_W2 = WL_W1 + HIDDEN                         # (128, 32)
WL_ROWS = WL_W2 + MLP                          # 224

# Bias / LN slab (f32), shape (BIAS_ROWS, 128).
R_POS = 0                                      # rows [0:17), cols [0:32)
R_LNF_G = SEQ                                  # 17
R_LNF_B = SEQ + 1                              # 18
R_BHEADS = SEQ + 2                             # 19
BIAS_LAYER_BASE = SEQ + 3                      # 20
BIAS_LAYER_ROWS = 8                            # ln1_g, ln1_b, b_qkv, bo, ln2_g, ln2_b, b1, b2
BIAS_ROWS = 40                                 # 20 + 2*8 = 36, padded to 40 (x8)


# ------------------------------ kernel helpers -------------------------------
def _layer_norm(x, gamma, beta):
    mean = jnp.mean(x, axis=-1, keepdims=True)
    var = jnp.mean((x - mean) ** 2, axis=-1, keepdims=True)
    return (x - mean) * jax.lax.rsqrt(var + LN_EPS) * gamma + beta


def _gelu(x):
    # TODO(synk): HF ViT uses exact (erf) GELU; tanh approximation kept because
    # tanh maps directly onto the TPU EUP (difference vs erf GELU ~1e-3).
    c = math.sqrt(2.0 / math.pi)
    return 0.5 * x * (1.0 + jnp.tanh(c * (x + 0.044715 * x * x * x)))


def _bf16(x):
    return x.astype(jnp.bfloat16)


# --------------------------- fully fused ViT kernel ---------------------------
def vit_fused_kernel(patches_ref, wg_ref, wl_ref, bias_ref, out_ref):
    n_b = patches_ref.shape[0]          # batch elements handled by this step

    # ---- unpack packed slabs (static slices) ----
    patch_w = wg_ref[WG_PATCH:WG_PATCH + PATCH_DIM, 0:HIDDEN]        # bf16 (48,32)
    w_heads = wg_ref[WG_HEADS:WG_HEADS + HIDDEN, 0:HEAD_PACK]        # bf16 (32,128)

    pos_fold = bias_ref[R_POS:R_POS + SEQ, 0:HIDDEN]                 # f32 (17,32)
    lnf_g = bias_ref[R_LNF_G:R_LNF_G + 1, 0:HIDDEN]
    lnf_b = bias_ref[R_LNF_B:R_LNF_B + 1, 0:HIDDEN]
    b_heads = bias_ref[R_BHEADS:R_BHEADS + 1, 0:HEAD_PACK]

    # ---- patch embedding for all batch rows in one MXU push ----
    patches = patches_ref[...].reshape(n_b * N_PATCHES, PATCH_DIM)   # f32
    emb = jnp.dot(_bf16(patches), patch_w,
                  preferred_element_type=jnp.float32)                # (n_b*16, 32)

    # Prepend the CLS row per batch element.  Row 0 of pos_fold already holds
    # cls_token + pos[0]; rows 1: hold pos[1:] + patch_bias (folded on host).
    chunks = []
    for b in range(n_b):
        e_b = emb[b * N_PATCHES:(b + 1) * N_PATCHES, :]
        x_b = jnp.concatenate(
            [jnp.zeros((1, HIDDEN), jnp.float32), e_b], axis=0) + pos_fold
        chunks.append(x_b)
    x = jnp.concatenate(chunks, axis=0)                              # (n_b*SEQ, 32)

    scale = 1.0 / math.sqrt(HEAD_DIM)
    for l in range(LAYERS):                                          # static unroll
        wl = wl_ref[l]                                               # bf16 (224,128)
        w_qkv = wl[WL_QKV:WL_QKV + HIDDEN, 0:3 * HIDDEN]
        wo = wl[WL_WO:WL_WO + HIDDEN, 0:HIDDEN]
        w1 = wl[WL_W1:WL_W1 + HIDDEN, 0:MLP]
        w2 = wl[WL_W2:WL_W2 + MLP, 0:HIDDEN]

        base = BIAS_LAYER_BASE + l * BIAS_LAYER_ROWS
        bl = bias_ref[base:base + BIAS_LAYER_ROWS, :]                # f32 (8,128)
        ln1_g = bl[0:1, 0:HIDDEN]
        ln1_b = bl[1:2, 0:HIDDEN]
        b_qkv = bl[2:3, 0:3 * HIDDEN]
        bo = bl[3:4, 0:HIDDEN]
        ln2_g = bl[4:5, 0:HIDDEN]
        ln2_b = bl[5:6, 0:HIDDEN]
        b1 = bl[6:7, 0:MLP]
        b2 = bl[7:8, 0:HIDDEN]

        # --- pre-LN multi-head self-attention (fused QKV over all batch rows) ---
        h = _layer_norm(x, ln1_g, ln1_b)
        qkv = (jnp.dot(_bf16(h), w_qkv, preferred_element_type=jnp.float32)
               + b_qkv)                                              # (n_b*SEQ, 96)

        attn_chunks = []
        for b in range(n_b):                                         # static unroll
            qkv_b = qkv[b * SEQ:(b + 1) * SEQ, :]
            ctx_heads = []
            for hd in range(HEADS):                                  # static unroll
                lo, hi = hd * HEAD_DIM, (hd + 1) * HEAD_DIM
                q_h = qkv_b[:, lo:hi]
                k_h = qkv_b[:, HIDDEN + lo:HIDDEN + hi]
                v_h = qkv_b[:, 2 * HIDDEN + lo:2 * HIDDEN + hi]
                scores = jax.lax.dot_general(
                    q_h, k_h, (((1,), (1,)), ((), ())),
                    preferred_element_type=jnp.float32) * scale      # (S, S)
                m = jnp.max(scores, axis=-1, keepdims=True)
                p = jnp.exp(scores - m)
                # EUP approx reciprocal instead of a VALU divide
                p = p * pl.reciprocal(jnp.sum(p, axis=-1, keepdims=True),
                                      approx=True)
                ctx_heads.append(jnp.dot(p, v_h,
                                         preferred_element_type=jnp.float32))
            # lane-concat heads -> single Wo matmul (half the MXU drains)
            ctx = jnp.concatenate(ctx_heads, axis=1)                 # (S, 32)
            attn_chunks.append(jnp.dot(_bf16(ctx), wo,
                                       preferred_element_type=jnp.float32))
        attn = jnp.concatenate(attn_chunks, axis=0)                  # (n_b*SEQ, 32)
        x = x + attn + bo                                            # residual 1

        # --- pre-LN MLP over all batch rows ---
        h2 = _layer_norm(x, ln2_g, ln2_b)
        m1 = _gelu(jnp.dot(_bf16(h2), w1,
                           preferred_element_type=jnp.float32) + b1)
        x = x + jnp.dot(_bf16(m1), w2,
                        preferred_element_type=jnp.float32) + b2     # residual 2

    # --- final LN on the CLS rows + packed classifier heads (lane-dense) ---
    cls_rows = [x[b * SEQ:b * SEQ + 1, :] for b in range(n_b)]
    cls = jnp.concatenate(cls_rows, axis=0)                          # (n_b, 32)
    feat = _layer_norm(cls, lnf_g, lnf_b)
    logits = (jnp.dot(_bf16(feat), w_heads,
                      preferred_element_type=jnp.float32) + b_heads)  # (n_b, 128)
    out_ref[...] = logits.reshape(n_b, 1, HEAD_PACK).astype(out_ref.dtype)


# ------------------------------ pallas wrapper --------------------------------
def extract_patches(x):
    # x: (B, C, H, W) NCHW -> (B, N, C*ph*pw); flatten order (C, ph, pw)
    # matches the flattened Conv2d(kernel=stride=PATCH) weight layout.
    B, C, H, W = x.shape
    gh, gw = H // PATCH, W // PATCH
    p = x.reshape(B, C, gh, PATCH, gw, PATCH)
    p = p.transpose(0, 2, 4, 1, 3, 5)          # (B, gh, gw, C, ph, pw)
    return p.reshape(B, gh * gw, C * PATCH * PATCH)


def _num_tensorcores_hint():
    """Best-effort: 1 TC per chip on v5e/v6e, 2 elsewhere (v4/v5p/v7x)."""
    try:
        kind = jax.devices()[0].device_kind.lower()
    except Exception:
        return 2
    if ("v5e" in kind) or ("v5 lite" in kind) or ("v5lite" in kind) or ("v6" in kind):
        return 1
    return 2


def _batch_tile(batch):
    """Batch elements per grid step.

    Single-TC chips: fold the whole batch into one step (better MXU row fill,
    no per-step overhead).  Dual-TC chips: keep a >=2-wide parallel grid so
    the second TensorCore gets work.
    """
    ncores = _num_tensorcores_hint()
    if ncores <= 1:
        return batch
    tile = max(1, batch // ncores)
    while batch % tile:
        tile -= 1
    return tile


@functools.partial(jax.jit, static_argnames=("b_tile", "single_buffer"))
def vit_forward(x, params, b_tile=1, single_buffer=True):
    B = x.shape[0]
    patches = extract_patches(x)                       # (B, N_PATCHES, PATCH_DIM)

    def const_spec(arr):
        nd = arr.ndim
        idx = lambda g: (0,) * nd
        if single_buffer:
            # grid-invariant block: no point double-buffering it
            return pl.BlockSpec(arr.shape, idx, pipeline_mode=pl.Buffered(1))
        return pl.BlockSpec(arr.shape, idx)

    packed = pl.pallas_call(
        vit_fused_kernel,
        out_shape=jax.ShapeDtypeStruct((B, 1, HEAD_PACK), jnp.float32),
        grid=(B // b_tile,),
        in_specs=[
            pl.BlockSpec((b_tile, N_PATCHES, PATCH_DIM), lambda g: (g, 0, 0)),
            const_spec(params["w_glob"]),
            const_spec(params["w_layer"]),
            const_spec(params["bias"]),
        ],
        out_specs=pl.BlockSpec((b_tile, 1, HEAD_PACK), lambda g: (g, 0, 0)),
        compiler_params=pltpu.CompilerParams(dimension_semantics=("parallel",)),
    )(patches, params["w_glob"], params["w_layer"], params["bias"])

    packed = packed[:, 0, :]                           # (B, 128)
    pitch_logits = packed[:, :PITCH_CLASSES]
    roll_logits = packed[:, PITCH_CLASSES:PITCH_CLASSES + ROLL_CLASSES]
    return pitch_logits, roll_logits


# --------------------------------- params -------------------------------------
def init_params(key):
    def take():
        nonlocal key
        key, sub = jax.random.split(key)
        return sub

    def rnd(shape, scale=0.02):
        return (scale * jax.random.normal(take(), shape)).astype(jnp.float32)

    # raw parameters (same init scheme as the original version)
    patch_w = rnd((PATCH_DIM, HIDDEN))
    patch_b = jnp.zeros((1, HIDDEN), jnp.float32)
    cls = rnd((1, HIDDEN))
    pos = rnd((SEQ, HIDDEN))
    # Fold CLS token into row 0 and the patch-embed bias into rows 1: of the
    # positional slab -- pure parameter transform, lets the kernel add a
    # single bias matrix after the patch-embed matmul.
    pos_fold = jnp.concatenate([pos[0:1] + cls, pos[1:] + patch_b], axis=0)

    wp = rnd((HIDDEN, PITCH_CLASSES))
    wr = rnd((HIDDEN, ROLL_CLASSES))
    w_heads = jnp.zeros((HIDDEN, HEAD_PACK), jnp.float32)
    w_heads = w_heads.at[:, :PITCH_CLASSES].set(wp)
    w_heads = w_heads.at[:, PITCH_CLASSES:PITCH_CLASSES + ROLL_CLASSES].set(wr)

    # ---- global matmul-weight slab (bf16) ----
    w_glob = jnp.zeros((WG_ROWS, LANES), jnp.float32)
    w_glob = w_glob.at[WG_PATCH:WG_PATCH + PATCH_DIM, 0:HIDDEN].set(patch_w)
    w_glob = w_glob.at[WG_HEADS:WG_HEADS + HIDDEN, 0:HEAD_PACK].set(w_heads)

    # ---- per-layer matmul-weight slab (bf16) + bias/LN slab (f32) ----
    w_layer = jnp.zeros((LAYERS, WL_ROWS, LANES), jnp.float32)
    bias = jnp.zeros((BIAS_ROWS, LANES), jnp.float32)
    bias = bias.at[R_POS:R_POS + SEQ, 0:HIDDEN].set(pos_fold)
    bias = bias.at[R_LNF_G, 0:HIDDEN].set(1.0)          # final LN gamma
    # final LN beta, classifier biases: zero rows already

    for l in range(LAYERS):
        wq, wk, wv = rnd((HIDDEN, HIDDEN)), rnd((HIDDEN, HIDDEN)), rnd((HIDDEN, HIDDEN))
        w_qkv = jnp.concatenate([wq, wk, wv], axis=1)    # (32, 96)
        wo = rnd((HIDDEN, HIDDEN))
        w1 = rnd((HIDDEN, MLP))
        w2 = rnd((MLP, HIDDEN))
        w_layer = w_layer.at[l, WL_QKV:WL_QKV + HIDDEN, 0:3 * HIDDEN].set(w_qkv)
        w_layer = w_layer.at[l, WL_WO:WL_WO + HIDDEN, 0:HIDDEN].set(wo)
        w_layer = w_layer.at[l, WL_W1:WL_W1 + HIDDEN, 0:MLP].set(w1)
        w_layer = w_layer.at[l, WL_W2:WL_W2 + MLP, 0:HIDDEN].set(w2)

        base = BIAS_LAYER_BASE + l * BIAS_LAYER_ROWS
        bias = bias.at[base + 0, 0:HIDDEN].set(1.0)      # ln1 gamma
        bias = bias.at[base + 4, 0:HIDDEN].set(1.0)      # ln2 gamma
        # ln betas, attention/MLP biases stay zero (same init as before)

    return {
        "w_glob": w_glob.astype(jnp.bfloat16),
        "w_layer": w_layer.astype(jnp.bfloat16),
        "bias": bias.astype(jnp.float32),
    }


if __name__ == "__main__":
    key = jax.random.PRNGKey(0)
    key, xk = jax.random.split(key)
    x = jax.random.normal(xk, (BATCH, CHANNELS, IMG, IMG), dtype=jnp.float32)
    params = init_params(key)

    b_tile = _batch_tile(BATCH)
    try:
        pitch_logits, roll_logits = vit_forward(x, params, b_tile=b_tile,
                                                single_buffer=True)
        jax.block_until_ready((pitch_logits, roll_logits))
    except Exception:
        # Fallback for JAX versions without BlockSpec pipeline_mode/Buffered(1).
        pitch_logits, roll_logits = vit_forward(x, params, b_tile=b_tile,
                                                single_buffer=False)
        jax.block_until_ready((pitch_logits, roll_logits))

    assert pitch_logits.shape == (BATCH, PITCH_CLASSES)
    assert roll_logits.shape == (BATCH, ROLL_CLASSES)
    assert bool(jnp.all(jnp.isfinite(pitch_logits)))
    assert bool(jnp.all(jnp.isfinite(roll_logits)))
    print("KERNEL_OK")
</pallas_src>

<mosaic_0001>
module attributes {stable_mosaic.version = 11 : i64} {
  func.func @vit_fused_kernel(%arg0: i32, %arg1: memref<1x16x48xf32, #tpu.memory_space<vmem>>, %arg2: memref<80x128xbf16, #tpu.memory_space<vmem>>, %arg3: memref<2x224x128xbf16, #tpu.memory_space<vmem>>, %arg4: memref<40x128xf32, #tpu.memory_space<vmem>>, %arg5: memref<1x1x128xf32, #tpu.memory_space<vmem>>) attributes {dimension_semantics = [#tpu.dimension_semantics<parallel>], iteration_bounds = array<i64: 2>, scalar_prefetch = 0 : i64, scratch_operands = 0 : i64, tpu.core_type = #tpu.core_type<tc>, window_params = [{transform_indices = @transform_0, window_bounds = array<i64: 1, 16, 48>}, {pipeline_mode = #tpu.pipeline_mode<synchronous>, transform_indices = @transform_1, window_bounds = array<i64: 80, 128>}, {pipeline_mode = #tpu.pipeline_mode<synchronous>, transform_indices = @transform_2, window_bounds = array<i64: 2, 224, 128>}, {pipeline_mode = #tpu.pipeline_mode<synchronous>, transform_indices = @transform_3, window_bounds = array<i64: 40, 128>}, {transform_indices = @transform_4, window_bounds = array<i64: 1, 1, 128>}]} {
    %c0 = arith.constant 0 : index
    %c0_0 = arith.constant 0 : index
    %0 = vector.load %arg2[%c0, %c0_0] : memref<80x128xbf16, #tpu.memory_space<vmem>>, vector<48x32xbf16>
    %c48 = arith.constant 48 : index
    %c0_1 = arith.constant 0 : index
    %1 = vector.load %arg2[%c48, %c0_1] : memref<80x128xbf16, #tpu.memory_space<vmem>>, vector<32x128xbf16>
    %c0_2 = arith.constant 0 : index
    %c0_3 = arith.constant 0 : index
    %2 = vector.load %arg4[%c0_2, %c0_3] : memref<40x128xf32, #tpu.memory_space<vmem>>, vector<17x32xf32>
    %c17 = arith.constant 17 : index
    %c0_4 = arith.constant 0 : index
    %3 = vector.load %arg4[%c17, %c0_4] : memref<40x128xf32, #tpu.memory_space<vmem>>, vector<1x32xf32>
    %c18 = arith.constant 18 : index
    %c0_5 = arith.constant 0 : index
    %4 = vector.load %arg4[%c18, %c0_5] : memref<40x128xf32, #tpu.memory_space<vmem>>, vector<1x32xf32>
    %c19 = arith.constant 19 : index
    %c0_6 = arith.constant 0 : index
    %5 = vector.load %arg4[%c19, %c0_6] : memref<40x128xf32, #tpu.memory_space<vmem>>, vector<1x128xf32>
    %c0_7 = arith.constant 0 : index
    %c0_8 = arith.constant 0 : index
    %c0_9 = arith.constant 0 : index
    %6 = vector.load %arg1[%c0_7, %c0_8, %c0_9] : memref<1x16x48xf32, #tpu.memory_space<vmem>>, vector<1x16x48xf32>
    %7 = vector.shape_cast %6 : vector<1x16x48xf32> to vector<16x48xf32>
    %8 = arith.truncf %7 : vector<16x48xf32> to vector<16x48xbf16>
    %cst = arith.constant dense<0.000000e+00> : vector<16x32xf32>
    %9 = tpu.matmul %8, %0, %cst {dimension_numbers = #tpu.dot_dimension_numbers<[1], [0], [0], [1], [0, 0, 1, 1], [], []>} : vector<16x48xbf16>, vector<48x32xbf16>, vector<16x32xf32> -> vector<16x32xf32>
    %cst_10 = arith.constant 0.000000e+00 : f32
    %10 = vector.broadcast %cst_10 : f32 to vector<1x32xf32>
    %11 = tpu.concatenate %10, %9 in 0 : vector<1x32xf32>, vector<16x32xf32> -> vector<17x32xf32>
    %12 = arith.addf %11, %2 : vector<17x32xf32>
    %c0_11 = arith.constant 0 : index
    %c0_12 = arith.constant 0 : index
    %c0_13 = arith.constant 0 : index
    %13 = vector.load %arg3[%c0_11, %c0_12, %c0_13] : memref<2x224x128xbf16, #tpu.memory_space<vmem>>, vector<1x224x128xbf16>
    %14 = vector.shape_cast %13 : vector<1x224x128xbf16> to vector<224x128xbf16>
    %15 = vector.extract_strided_slice %14 {offsets = [0, 0], sizes = [32, 96], strides = [1, 1]} : vector<224x128xbf16> to vector<32x96xbf16>
    %16 = vector.extract_strided_slice %14 {offsets = [32, 0], sizes = [32, 32], strides = [1, 1]} : vector<224x128xbf16> to vector<32x32xbf16>
    %17 = vector.extract_strided_slice %14 {offsets = [64, 0], sizes = [32, 128], strides = [1, 1]} : vector<224x128xbf16> to vector<32x128xbf16>
    %18 = vector.extract_strided_slice %14 {offsets = [96, 0], sizes = [128, 32], strides = [1, 1]} : vector<224x128xbf16> to vector<128x32xbf16>
    %c20 = arith.constant 20 : index
    %c0_14 = arith.constant 0 : index
    %19 = vector.load %arg4[%c20, %c0_14] : memref<40x128xf32, #tpu.memory_space<vmem>>, vector<8x128xf32>
    %20 = vector.extract_strided_slice %19 {offsets = [0, 0], sizes = [1, 32], strides = [1, 1]} : vector<8x128xf32> to vector<1x32xf32>
    %21 = vector.extract_strided_slice %19 {offsets = [1, 0], sizes = [1, 32], strides = [1, 1]} : vector<8x128xf32> to vector<1x32xf32>
    %22 = vector.extract_strided_slice %19 {offsets = [2, 0], sizes = [1, 96], strides = [1, 1]} : vector<8x128xf32> to vector<1x96xf32>
    %23 = vector.extract_strided_slice %19 {offsets = [3, 0], sizes = [1, 32], strides = [1, 1]} : vector<8x128xf32> to vector<1x32xf32>
    %24 = vector.extract_strided_slice %19 {offsets = [4, 0], sizes = [1, 32], strides = [1, 1]} : vector<8x128xf32> to vector<1x32xf32>
    %25 = vector.extract_strided_slice %19 {offsets = [5, 0], sizes = [1, 32], strides = [1, 1]} : vector<8x128xf32> to vector<1x32xf32>
    %26 = vector.extract_strided_slice %19 {offsets = [6, 0], sizes = [1, 128], strides = [1, 1]} : vector<8x128xf32> to vector<1x128xf32>
    %27 = vector.extract_strided_slice %19 {offsets = [7, 0], sizes = [1, 32], strides = [1, 1]} : vector<8x128xf32> to vector<1x32xf32>
    %cst_15 = arith.constant dense<0.000000e+00> : vector<17xf32>
    %28 = vector.multi_reduction <add>, %12, %cst_15 [1] : vector<17x32xf32> to vector<17xf32>
    %29 = vector.shape_cast %28 : vector<17xf32> to vector<17x1xf32>
    %cst_16 = arith.constant 3.200000e+01 : f32
    %30 = vector.broadcast %cst_16 : f32 to vector<17x1xf32>
    %31 = arith.divf %29, %30 : vector<17x1xf32>
    %32 = vector.broadcast %31 : vector<17x1xf32> to vector<17x32xf32>
    %33 = arith.subf %12, %32 : vector<17x32xf32>
    %34 = arith.mulf %33, %33 : vector<17x32xf32>
    %cst_17 = arith.constant dense<0.000000e+00> : vector<17xf32>
    %35 = vector.multi_reduction <add>, %34, %cst_17 [1] : vector<17x32xf32> to vector<17xf32>
    %36 = vector.shape_cast %35 : vector<17xf32> to vector<17x1xf32>
    %cst_18 = arith.constant 3.200000e+01 : f32
    %37 = vector.broadcast %cst_18 : f32 to vector<17x1xf32>
    %38 = arith.divf %36, %37 : vector<17x1xf32>
    %39 = vector.broadcast %31 : vector<17x1xf32> to vector<17x32xf32>
    %40 = arith.subf %12, %39 : vector<17x32xf32>
    %cst_19 = arith.constant 9.99999996E-13 : f32
    %41 = vector.broadcast %cst_19 : f32 to vector<17x1xf32>
    %42 = arith.addf %38, %41 : vector<17x1xf32>
    %43 = math.rsqrt %42 : vector<17x1xf32>
    %44 = vector.broadcast %43 : vector<17x1xf32> to vector<17x32xf32>
    %45 = arith.mulf %40, %44 : vector<17x32xf32>
    %46 = vector.broadcast %20 : vector<1x32xf32> to vector<17x32xf32>
    %47 = arith.mulf %45, %46 : vector<17x32xf32>
    %48 = vector.broadcast %21 : vector<1x32xf32> to vector<17x32xf32>
    %49 = arith.addf %47, %48 : vector<17x32xf32>
    %50 = arith.truncf %49 : vector<17x32xf32> to vector<17x32xbf16>
    %cst_20 = arith.constant dense<0.000000e+00> : vector<17x96xf32>
    %51 = tpu.matmul %50, %15, %cst_20 {dimension_numbers = #tpu.dot_dimension_numbers<[1], [0], [0], [1], [0, 0, 1, 1], [], []>} : vector<17x32xbf16>, vector<32x96xbf16>, vector<17x96xf32> -> vector<17x96xf32>
    %52 = vector.broadcast %22 : vector<1x96xf32> to vector<17x96xf32>
    %53 = arith.addf %51, %52 : vector<17x96xf32>
    %54 = vector.extract_strided_slice %53 {offsets = [0, 0], sizes = [17, 16], strides = [1, 1]} : vector<17x96xf32> to vector<17x16xf32>
    %55 = vector.extract_strided_slice %53 {offsets = [0, 32], sizes = [17, 16], strides = [1, 1]} : vector<17x96xf32> to vector<17x16xf32>
    %56 = vector.extract_strided_slice %53 {offsets = [0, 64], sizes = [17, 16], strides = [1, 1]} : vector<17x96xf32> to vector<17x16xf32>
    %cst_21 = arith.constant dense<0.000000e+00> : vector<17x17xf32>
    %57 = tpu.matmul %54, %55, %cst_21 {dimension_numbers = #tpu.dot_dimension_numbers<[1], [1], [0], [0], [0, 0, 1, 0], [], []>} : vector<17x16xf32>, vector<17x16xf32>, vector<17x17xf32> -> vector<17x17xf32>
    %cst_22 = arith.constant 2.500000e-01 : f32
    %58 = vector.broadcast %cst_22 : f32 to vector<17x17xf32>
    %59 = arith.mulf %57, %58 : vector<17x17xf32>
    %cst_23 = arith.constant dense<0xFF800000> : vector<17xf32>
    %60 = vector.multi_reduction <maximumf>, %59, %cst_23 [1] : vector<17x17xf32> to vector<17xf32>
    %61 = vector.shape_cast %60 : vector<17xf32> to vector<17x1xf32>
    %62 = vector.broadcast %61 : vector<17x1xf32> to vector<17x17xf32>
    %63 = arith.subf %59, %62 : vector<17x17xf32>
    %64 = math.exp %63 : vector<17x17xf32>
    %cst_24 = arith.constant dense<0.000000e+00> : vector<17xf32>
    %65 = vector.multi_reduction <add>, %64, %cst_24 [1] : vector<17x17xf32> to vector<17xf32>
    %66 = vector.shape_cast %65 : vector<17xf32> to vector<17x1xf32>
    %67 = tpu.reciprocal %66 {approx = true} : vector<17x1xf32> -> vector<17x1xf32>
    %68 = vector.broadcast %67 : vector<17x1xf32> to vector<17x17xf32>
    %69 = arith.mulf %64, %68 : vector<17x17xf32>
    %cst_25 = arith.constant dense<0.000000e+00> : vector<17x16xf32>
    %70 = tpu.matmul %69, %56, %cst_25 {dimension_numbers = #tpu.dot_dimension_numbers<[1], [0], [0], [1], [0, 0, 1, 1], [], []>} : vector<17x17xf32>, vector<17x16xf32>, vector<17x16xf32> -> vector<17x16xf32>
    %71 = vector.extract_strided_slice %53 {offsets = [0, 16], sizes = [17, 16], strides = [1, 1]} : vector<17x96xf32> to vector<17x16xf32>
    %72 = vector.extract_strided_slice %53 {offsets = [0, 48], sizes = [17, 16], strides = [1, 1]} : vector<17x96xf32> to vector<17x16xf32>
    %73 = vector.extract_strided_slice %53 {offsets = [0, 80], sizes = [17, 16], strides = [1, 1]} : vector<17x96xf32> to vector<17x16xf32>
    %cst_26 = arith.constant dense<0.000000e+00> : vector<17x17xf32>
    %74 = tpu.matmul %71, %72, %cst_26 {dimension_numbers = #tpu.dot_dimension_numbers<[1], [1], [0], [0], [0, 0, 1, 0], [], []>} : vector<17x16xf32>, vector<17x16xf32>, vector<17x17xf32> -> vector<17x17xf32>
    %cst_27 = arith.constant 2.500000e-01 : f32
    %75 = vector.broadcast %cst_27 : f32 to vector<17x17xf32>
    %76 = arith.mulf %74, %75 : vector<17x17xf32>
    %cst_28 = arith.constant dense<0xFF800000> : vector<17xf32>
    %77 = vector.multi_reduction <maximumf>, %76, %cst_28 [1] : vector<17x17xf32> to vector<17xf32>
    %78 = vector.shape_cast %77 : vector<17xf32> to vector<17x1xf32>
    %79 = vector.broadcast %78 : vector<17x1xf32> to vector<17x17xf32>
    %80 = arith.subf %76, %79 : vector<17x17xf32>
    %81 = math.exp %80 : vector<17x17xf32>
    %cst_29 = arith.constant dense<0.000000e+00> : vector<17xf32>
    %82 = vector.multi_reduction <add>, %81, %cst_29 [1] : vector<17x17xf32> to vector<17xf32>
    %83 = vector.shape_cast %82 : vector<17xf32> to vector<17x1xf32>
    %84 = tpu.reciprocal %83 {approx = true} : vector<17x1xf32> -> vector<17x1xf32>
    %85 = vector.broadcast %84 : vector<17x1xf32> to vector<17x17xf32>
    %86 = arith.mulf %81, %85 : vector<17x17xf32>
    %cst_30 = arith.constant dense<0.000000e+00> : vector<17x16xf32>
    %87 = tpu.matmul %86, %73, %cst_30 {dimension_numbers = #tpu.dot_dimension_numbers<[1], [0], [0], [1], [0, 0, 1, 1], [], []>} : vector<17x17xf32>, vector<17x16xf32>, vector<17x16xf32> -> vector<17x16xf32>
    %88 = tpu.concatenate %70, %87 in 1 : vector<17x16xf32>, vector<17x16xf32> -> vector<17x32xf32>
    %89 = arith.truncf %88 : vector<17x32xf32> to vector<17x32xbf16>
    %cst_31 = arith.constant dense<0.000000e+00> : vector<17x32xf32>
    %90 = tpu.matmul %89, %16, %cst_31 {dimension_numbers = #tpu.dot_dimension_numbers<[1], [0], [0], [1], [0, 0, 1, 1], [], []>} : vector<17x32xbf16>, vector<32x32xbf16>, vector<17x32xf32> -> vector<17x32xf32>
    %91 = arith.addf %12, %90 : vector<17x32xf32>
    %92 = vector.broadcast %23 : vector<1x32xf32> to vector<17x32xf32>
    %93 = arith.addf %91, %92 : vector<17x32xf32>
    %cst_32 = arith.constant dense<0.000000e+00> : vector<17xf32>
    %94 = vector.multi_reduction <add>, %93, %cst_32 [1] : vector<17x32xf32> to vector<17xf32>
    %95 = vector.shape_cast %94 : vector<17xf32> to vector<17x1xf32>
    %cst_33 = arith.constant 3.200000e+01 : f32
    %96 = vector.broadcast %cst_33 : f32 to vector<17x1xf32>
    %97 = arith.divf %95, %96 : vector<17x1xf32>
    %98 = vector.broadcast %97 : vector<17x1xf32> to vector<17x32xf32>
    %99 = arith.subf %93, %98 : vector<17x32xf32>
    %100 = arith.mulf %99, %99 : vector<17x32xf32>
    %cst_34 = arith.constant dense<0.000000e+00> : vector<17xf32>
    %101 = vector.multi_reduction <add>, %100, %cst_34 [1] : vector<17x32xf32> to vector<17xf32>
    %102 = vector.shape_cast %101 : vector<17xf32> to vector<17x1xf32>
    %cst_35 = arith.constant 3.200000e+01 : f32
    %103 = vector.broadcast %cst_35 : f32 to vector<17x1xf32>
    %104 = arith.divf %102, %103 : vector<17x1xf32>
    %105 = vector.broadcast %97 : vector<17x1xf32> to vector<17x32xf32>
    %106 = arith.subf %93, %105 : vector<17x32xf32>
    %cst_36 = arith.constant 9.99999996E-13 : f32
    %107 = vector.broadcast %cst_36 : f32 to vector<17x1xf32>
    %108 = arith.addf %104, %107 : vector<17x1xf32>
    %109 = math.rsqrt %108 : vector<17x1xf32>
    %110 = vector.broadcast %109 : vector<17x1xf32> to vector<17x32xf32>
    %111 = arith.mulf %106, %110 : vector<17x32xf32>
    %112 = vector.broadcast %24 : vector<1x32xf32> to vector<17x32xf32>
    %113 = arith.mulf %111, %112 : vector<17x32xf32>
    %114 = vector.broadcast %25 : vector<1x32xf32> to vector<17x32xf32>
    %115 = arith.addf %113, %114 : vector<17x32xf32>
    %116 = arith.truncf %115 : vector<17x32xf32> to vector<17x32xbf16>
    %cst_37 = arith.constant dense<0.000000e+00> : vector<17x128xf32>
    %117 = tpu.matmul %116, %17, %cst_37 {dimension_numbers = #tpu.dot_dimension_numbers<[1], [0], [0], [1], [0, 0, 1, 1], [], []>} : vector<17x32xbf16>, vector<32x128xbf16>, vector<17x128xf32> -> vector<17x128xf32>
    %118 = vector.broadcast %26 : vector<1x128xf32> to vector<17x128xf32>
    %119 = arith.addf %117, %118 : vector<17x128xf32>
    %cst_38 = arith.constant 5.000000e-01 : f32
    %120 = vector.broadcast %cst_38 : f32 to vector<17x128xf32>
    %121 = arith.mulf %120, %119 : vector<17x128xf32>
    %cst_39 = arith.constant 4.471500e-02 : f32
    %122 = vector.broadcast %cst_39 : f32 to vector<17x128xf32>
    %123 = arith.mulf %122, %119 : vector<17x128xf32>
    %124 = arith.mulf %123, %119 : vector<17x128xf32>
    %125 = arith.mulf %124, %119 : vector<17x128xf32>
    %126 = arith.addf %119, %125 : vector<17x128xf32>
    %cst_40 = arith.constant 0.797884583 : f32
    %127 = vector.broadcast %cst_40 : f32 to vector<17x128xf32>
    %128 = arith.mulf %127, %126 : vector<17x128xf32>
    %129 = math.tanh %128 : vector<17x128xf32>
    %cst_41 = arith.constant 1.000000e+00 : f32
    %130 = vector.broadcast %cst_41 : f32 to vector<17x128xf32>
    %131 = arith.addf %130, %129 : vector<17x128xf32>
    %132 = arith.mulf %121, %131 : vector<17x128xf32>
    %133 = arith.truncf %132 : vector<17x128xf32> to vector<17x128xbf16>
    %cst_42 = arith.constant dense<0.000000e+00> : vector<17x32xf32>
    %134 = tpu.matmul %133, %18, %cst_42 {dimension_numbers = #tpu.dot_dimension_numbers<[1], [0], [0], [1], [0, 0, 1, 1], [], []>} : vector<17x128xbf16>, vector<128x32xbf16>, vector<17x32xf32> -> vector<17x32xf32>
    %135 = arith.addf %93, %134 : vector<17x32xf32>
    %136 = vector.broadcast %27 : vector<1x32xf32> to vector<17x32xf32>
    %137 = arith.addf %135, %136 : vector<17x32xf32>
    %c1 = arith.constant 1 : index
    %c0_43 = arith.constant 0 : index
    %c0_44 = arith.constant 0 : index
    %138 = vector.load %arg3[%c1, %c0_43, %c0_44] : memref<2x224x128xbf16, #tpu.memory_space<vmem>>, vector<1x224x128xbf16>
    %139 = vector.shape_cast %138 : vector<1x224x128xbf16> to vector<224x128xbf16>
    %140 = vector.extract_strided_slice %139 {offsets = [0, 0], sizes = [32, 96], strides = [1, 1]} : vector<224x128xbf16> to vector<32x96xbf16>
    %141 = vector.extract_strided_slice %139 {offsets = [32, 0], sizes = [32, 32], strides = [1, 1]} : vector<224x128xbf16> to vector<32x32xbf16>
    %142 = vector.extract_strided_slice %139 {offsets = [64, 0], sizes = [32, 128], strides = [1, 1]} : vector<224x128xbf16> to vector<32x128xbf16>
    %143 = vector.extract_strided_slice %139 {offsets = [96, 0], sizes = [128, 32], strides = [1, 1]} : vector<224x128xbf16> to vector<128x32xbf16>
    %c28 = arith.constant 28 : index
    %c0_45 = arith.constant 0 : index
    %144 = vector.load %arg4[%c28, %c0_45] : memref<40x128xf32, #tpu.memory_space<vmem>>, vector<8x128xf32>
    %145 = vector.extract_strided_slice %144 {offsets = [0, 0], sizes = [1, 32], strides = [1, 1]} : vector<8x128xf32> to vector<1x32xf32>
    %146 = vector.extract_strided_slice %144 {offsets = [1, 0], sizes = [1, 32], strides = [1, 1]} : vector<8x128xf32> to vector<1x32xf32>
    %147 = vector.extract_strided_slice %144 {offsets = [2, 0], sizes = [1, 96], strides = [1, 1]} : vector<8x128xf32> to vector<1x96xf32>
    %148 = vector.extract_strided_slice %144 {offsets = [3, 0], sizes = [1, 32], strides = [1, 1]} : vector<8x128xf32> to vector<1x32xf32>
    %149 = vector.extract_strided_slice %144 {offsets = [4, 0], sizes = [1, 32], strides = [1, 1]} : vector<8x128xf32> to vector<1x32xf32>
    %150 = vector.extract_strided_slice %144 {offsets = [5, 0], sizes = [1, 32], strides = [1, 1]} : vector<8x128xf32> to vector<1x32xf32>
    %151 = vector.extract_strided_slice %144 {offsets = [6, 0], sizes = [1, 128], strides = [1, 1]} : vector<8x128xf32> to vector<1x128xf32>
    %152 = vector.extract_strided_slice %144 {offsets = [7, 0], sizes = [1, 32], strides = [1, 1]} : vector<8x128xf32> to vector<1x32xf32>
    %cst_46 = arith.constant dense<0.000000e+00> : vector<17xf32>
    %153 = vector.multi_reduction <add>, %137, %cst_46 [1] : vector<17x32xf32> to vector<17xf32>
    %154 = vector.shape_cast %153 : vector<17xf32> to vector<17x1xf32>
    %cst_47 = arith.constant 3.200000e+01 : f32
    %155 = vector.broadcast %cst_47 : f32 to vector<17x1xf32>
    %156 = arith.divf %154, %155 : vector<17x1xf32>
    %157 = vector.broadcast %156 : vector<17x1xf32> to vector<17x32xf32>
    %158 = arith.subf %137, %157 : vector<17x32xf32>
    %159 = arith.mulf %158, %158 : vector<17x32xf32>
    %cst_48 = arith.constant dense<0.000000e+00> : vector<17xf32>
    %160 = vector.multi_reduction <add>, %159, %cst_48 [1] : vector<17x32xf32> to vector<17xf32>
    %161 = vector.shape_cast %160 : vector<17xf32> to vector<17x1xf32>
    %cst_49 = arith.constant 3.200000e+01 : f32
    %162 = vector.broadcast %cst_49 : f32 to vector<17x1xf32>
    %163 = arith.divf %161, %162 : vector<17x1xf32>
    %164 = vector.broadcast %156 : vector<17x1xf32> to vector<17x32xf32>
    %165 = arith.subf %137, %164 : vector<17x32xf32>
    %cst_50 = arith.constant 9.99999996E-13 : f32
    %166 = vector.broadcast %cst_50 : f32 to vector<17x1xf32>
    %167 = arith.addf %163, %166 : vector<17x1xf32>
    %168 = math.rsqrt %167 : vector<17x1xf32>
    %169 = vector.broadcast %168 : vector<17x1xf32> to vector<17x32xf32>
    %170 = arith.mulf %165, %169 : vector<17x32xf32>
    %171 = vector.broadcast %145 : vector<1x32xf32> to vector<17x32xf32>
    %172 = arith.mulf %170, %171 : vector<17x32xf32>
    %173 = vector.broadcast %146 : vector<1x32xf32> to vector<17x32xf32>
    %174 = arith.addf %172, %173 : vector<17x32xf32>
    %175 = arith.truncf %174 : vector<17x32xf32> to vector<17x32xbf16>
    %cst_51 = arith.constant dense<0.000000e+00> : vector<17x96xf32>
    %176 = tpu.matmul %175, %140, %cst_51 {dimension_numbers = #tpu.dot_dimension_numbers<[1], [0], [0], [1], [0, 0, 1, 1], [], []>} : vector<17x32xbf16>, vector<32x96xbf16>, vector<17x96xf32> -> vector<17x96xf32>
    %177 = vector.broadcast %147 : vector<1x96xf32> to vector<17x96xf32>
    %178 = arith.addf %176, %177 : vector<17x96xf32>
    %179 = vector.extract_strided_slice %178 {offsets = [0, 0], sizes = [17, 16], strides = [1, 1]} : vector<17x96xf32> to vector<17x16xf32>
    %180 = vector.extract_strided_slice %178 {offsets = [0, 32], sizes = [17, 16], strides = [1, 1]} : vector<17x96xf32> to vector<17x16xf32>
    %181 = vector.extract_strided_slice %178 {offsets = [0, 64], sizes = [17, 16], strides = [1, 1]} : vector<17x96xf32> to vector<17x16xf32>
    %cst_52 = arith.constant dense<0.000000e+00> : vector<17x17xf32>
    %182 = tpu.matmul %179, %180, %cst_52 {dimension_numbers = #tpu.dot_dimension_numbers<[1], [1], [0], [0], [0, 0, 1, 0], [], []>} : vector<17x16xf32>, vector<17x16xf32>, vector<17x17xf32> -> vector<17x17xf32>
    %cst_53 = arith.constant 2.500000e-01 : f32
    %183 = vector.broadcast %cst_53 : f32 to vector<17x17xf32>
    %184 = arith.mulf %182, %183 : vector<17x17xf32>
    %cst_54 = arith.constant dense<0xFF800000> : vector<17xf32>
    %185 = vector.multi_reduction <maximumf>, %184, %cst_54 [1] : vector<17x17xf32> to vector<17xf32>
    %186 = vector.shape_cast %185 : vector<17xf32> to vector<17x1xf32>
    %187 = vector.broadcast %186 : vector<17x1xf32> to vector<17x17xf32>
    %188 = arith.subf %184, %187 : vector<17x17xf32>
    %189 = math.exp %188 : vector<17x17xf32>
    %cst_55 = arith.constant dense<0.000000e+00> : vector<17xf32>
    %190 = vector.multi_reduction <add>, %189, %cst_55 [1] : vector<17x17xf32> to vector<17xf32>
    %191 = vector.shape_cast %190 : vector<17xf32> to vector<17x1xf32>
    %192 = tpu.reciprocal %191 {approx = true} : vector<17x1xf32> -> vector<17x1xf32>
    %193 = vector.broadcast %192 : vector<17x1xf32> to vector<17x17xf32>
    %194 = arith.mulf %189, %193 : vector<17x17xf32>
    %cst_56 = arith.constant dense<0.000000e+00> : vector<17x16xf32>
    %195 = tpu.matmul %194, %181, %cst_56 {dimension_numbers = #tpu.dot_dimension_numbers<[1], [0], [0], [1], [0, 0, 1, 1], [], []>} : vector<17x17xf32>, vector<17x16xf32>, vector<17x16xf32> -> vector<17x16xf32>
    %196 = vector.extract_strided_slice %178 {offsets = [0, 16], sizes = [17, 16], strides = [1, 1]} : vector<17x96xf32> to vector<17x16xf32>
    %197 = vector.extract_strided_slice %178 {offsets = [0, 48], sizes = [17, 16], strides = [1, 1]} : vector<17x96xf32> to vector<17x16xf32>
    %198 = vector.extract_strided_slice %178 {offsets = [0, 80], sizes = [17, 16], strides = [1, 1]} : vector<17x96xf32> to vector<17x16xf32>
    %cst_57 = arith.constant dense<0.000000e+00> : vector<17x17xf32>
    %199 = tpu.matmul %196, %197, %cst_57 {dimension_numbers = #tpu.dot_dimension_numbers<[1], [1], [0], [0], [0, 0, 1, 0], [], []>} : vector<17x16xf32>, vector<17x16xf32>, vector<17x17xf32> -> vector<17x17xf32>
    %cst_58 = arith.constant 2.500000e-01 : f32
    %200 = vector.broadcast %cst_58 : f32 to vector<17x17xf32>
    %201 = arith.mulf %199, %200 : vector<17x17xf32>
    %cst_59 = arith.constant dense<0xFF800000> : vector<17xf32>
    %202 = vector.multi_reduction <maximumf>, %201, %cst_59 [1] : vector<17x17xf32> to vector<17xf32>
    %203 = vector.shape_cast %202 : vector<17xf32> to vector<17x1xf32>
    %204 = vector.broadcast %203 : vector<17x1xf32> to vector<17x17xf32>
    %205 = arith.subf %201, %204 : vector<17x17xf32>
    %206 = math.exp %205 : vector<17x17xf32>
    %cst_60 = arith.constant dense<0.000000e+00> : vector<17xf32>
    %207 = vector.multi_reduction <add>, %206, %cst_60 [1] : vector<17x17xf32> to vector<17xf32>
    %208 = vector.shape_cast %207 : vector<17xf32> to vector<17x1xf32>
    %209 = tpu.reciprocal %208 {approx = true} : vector<17x1xf32> -> vector<17x1xf32>
    %210 = vector.broadcast %209 : vector<17x1xf32> to vector<17x17xf32>
    %211 = arith.mulf %206, %210 : vector<17x17xf32>
    %cst_61 = arith.constant dense<0.000000e+00> : vector<17x16xf32>
    %212 = tpu.matmul %211, %198, %cst_61 {dimension_numbers = #tpu.dot_dimension_numbers<[1], [0], [0], [1], [0, 0, 1, 1], [], []>} : vector<17x17xf32>, vector<17x16xf32>, vector<17x16xf32> -> vector<17x16xf32>
    %213 = tpu.concatenate %195, %212 in 1 : vector<17x16xf32>, vector<17x16xf32> -> vector<17x32xf32>
    %214 = arith.truncf %213 : vector<17x32xf32> to vector<17x32xbf16>
    %cst_62 = arith.constant dense<0.000000e+00> : vector<17x32xf32>
    %215 = tpu.matmul %214, %141, %cst_62 {dimension_numbers = #tpu.dot_dimension_numbers<[1], [0], [0], [1], [0, 0, 1, 1], [], []>} : vector<17x32xbf16>, vector<32x32xbf16>, vector<17x32xf32> -> vector<17x32xf32>
    %216 = arith.addf %137, %215 : vector<17x32xf32>
    %217 = vector.broadcast %148 : vector<1x32xf32> to vector<17x32xf32>
    %218 = arith.addf %216, %217 : vector<17x32xf32>
    %cst_63 = arith.constant dense<0.000000e+00> : vector<17xf32>
    %219 = vector.multi_reduction <add>, %218, %cst_63 [1] : vector<17x32xf32> to vector<17xf32>
    %220 = vector.shape_cast %219 : vector<17xf32> to vector<17x1xf32>
    %cst_64 = arith.constant 3.200000e+01 : f32
    %221 = vector.broadcast %cst_64 : f32 to vector<17x1xf32>
    %222 = arith.divf %220, %221 : vector<17x1xf32>
    %223 = vector.broadcast %222 : vector<17x1xf32> to vector<17x32xf32>
    %224 = arith.subf %218, %223 : vector<17x32xf32>
    %225 = arith.mulf %224, %224 : vector<17x32xf32>
    %cst_65 = arith.constant dense<0.000000e+00> : vector<17xf32>
    %226 = vector.multi_reduction <add>, %225, %cst_65 [1] : vector<17x32xf32> to vector<17xf32>
    %227 = vector.shape_cast %226 : vector<17xf32> to vector<17x1xf32>
    %cst_66 = arith.constant 3.200000e+01 : f32
    %228 = vector.broadcast %cst_66 : f32 to vector<17x1xf32>
    %229 = arith.divf %227, %228 : vector<17x1xf32>
    %230 = vector.broadcast %222 : vector<17x1xf32> to vector<17x32xf32>
    %231 = arith.subf %218, %230 : vector<17x32xf32>
    %cst_67 = arith.constant 9.99999996E-13 : f32
    %232 = vector.broadcast %cst_67 : f32 to vector<17x1xf32>
    %233 = arith.addf %229, %232 : vector<17x1xf32>
    %234 = math.rsqrt %233 : vector<17x1xf32>
    %235 = vector.broadcast %234 : vector<17x1xf32> to vector<17x32xf32>
    %236 = arith.mulf %231, %235 : vector<17x32xf32>
    %237 = vector.broadcast %149 : vector<1x32xf32> to vector<17x32xf32>
    %238 = arith.mulf %236, %237 : vector<17x32xf32>
    %239 = vector.broadcast %150 : vector<1x32xf32> to vector<17x32xf32>
    %240 = arith.addf %238, %239 : vector<17x32xf32>
    %241 = arith.truncf %240 : vector<17x32xf32> to vector<17x32xbf16>
    %cst_68 = arith.constant dense<0.000000e+00> : vector<17x128xf32>
    %242 = tpu.matmul %241, %142, %cst_68 {dimension_numbers = #tpu.dot_dimension_numbers<[1], [0], [0], [1], [0, 0, 1, 1], [], []>} : vector<17x32xbf16>, vector<32x128xbf16>, vector<17x128xf32> -> vector<17x128xf32>
    %243 = vector.broadcast %151 : vector<1x128xf32> to vector<17x128xf32>
    %244 = arith.addf %242, %243 : vector<17x128xf32>
    %cst_69 = arith.constant 5.000000e-01 : f32
    %245 = vector.broadcast %cst_69 : f32 to vector<17x128xf32>
    %246 = arith.mulf %245, %244 : vector<17x128xf32>
    %cst_70 = arith.constant 4.471500e-02 : f32
    %247 = vector.broadcast %cst_70 : f32 to vector<17x128xf32>
    %248 = arith.mulf %247, %244 : vector<17x128xf32>
    %249 = arith.mulf %248, %244 : vector<17x128xf32>
    %250 = arith.mulf %249, %244 : vector<17x128xf32>
    %251 = arith.addf %244, %250 : vector<17x128xf32>
    %cst_71 = arith.constant 0.797884583 : f32
    %252 = vector.broadcast %cst_71 : f32 to vector<17x128xf32>
    %253 = arith.mulf %252, %251 : vector<17x128xf32>
    %254 = math.tanh %253 : vector<17x128xf32>
    %cst_72 = arith.constant 1.000000e+00 : f32
    %255 = vector.broadcast %cst_72 : f32 to vector<17x128xf32>
    %256 = arith.addf %255, %254 : vector<17x128xf32>
    %257 = arith.mulf %246, %256 : vector<17x128xf32>
    %258 = arith.truncf %257 : vector<17x128xf32> to vector<17x128xbf16>
    %cst_73 = arith.constant dense<0.000000e+00> : vector<17x32xf32>
    %259 = tpu.matmul %258, %143, %cst_73 {dimension_numbers = #tpu.dot_dimension_numbers<[1], [0], [0], [1], [0, 0, 1, 1], [], []>} : vector<17x128xbf16>, vector<128x32xbf16>, vector<17x32xf32> -> vector<17x32xf32>
    %260 = arith.addf %218, %259 : vector<17x32xf32>
    %261 = vector.broadcast %152 : vector<1x32xf32> to vector<17x32xf32>
    %262 = arith.addf %260, %261 : vector<17x32xf32>
    %263 = vector.extract_strided_slice %262 {offsets = [0, 0], sizes = [1, 32], strides = [1, 1]} : vector<17x32xf32> to vector<1x32xf32>
    %cst_74 = arith.constant dense<0.000000e+00> : vector<1xf32>
    %264 = vector.multi_reduction <add>, %263, %cst_74 [1] : vector<1x32xf32> to vector<1xf32>
    %265 = vector.shape_cast %264 : vector<1xf32> to vector<1x1xf32>
    %cst_75 = arith.constant 3.200000e+01 : f32
    %266 = vector.broadcast %cst_75 : f32 to vector<1x1xf32>
    %267 = arith.divf %265, %266 : vector<1x1xf32>
    %268 = vector.broadcast %267 : vector<1x1xf32> to vector<1x32xf32>
    %269 = arith.subf %263, %268 : vector<1x32xf32>
    %270 = arith.mulf %269, %269 : vector<1x32xf32>
    %cst_76 = arith.constant dense<0.000000e+00> : vector<1xf32>
    %271 = vector.multi_reduction <add>, %270, %cst_76 [1] : vector<1x32xf32> to vector<1xf32>
    %272 = vector.shape_cast %271 : vector<1xf32> to vector<1x1xf32>
    %cst_77 = arith.constant 3.200000e+01 : f32
    %273 = vector.broadcast %cst_77 : f32 to vector<1x1xf32>
    %274 = arith.divf %272, %273 : vector<1x1xf32>
    %275 = vector.broadcast %267 : vector<1x1xf32> to vector<1x32xf32>
    %276 = arith.subf %263, %275 : vector<1x32xf32>
    %cst_78 = arith.constant 9.99999996E-13 : f32
    %277 = vector.broadcast %cst_78 : f32 to vector<1x1xf32>
    %278 = arith.addf %274, %277 : vector<1x1xf32>
    %279 = math.rsqrt %278 : vector<1x1xf32>
    %280 = vector.broadcast %279 : vector<1x1xf32> to vector<1x32xf32>
    %281 = arith.mulf %276, %280 : vector<1x32xf32>
    %282 = arith.mulf %281, %3 : vector<1x32xf32>
    %283 = arith.addf %282, %4 : vector<1x32xf32>
    %284 = arith.truncf %283 : vector<1x32xf32> to vector<1x32xbf16>
    %cst_79 = arith.constant dense<0.000000e+00> : vector<1x128xf32>
    %285 = tpu.matmul %284, %1, %cst_79 {dimension_numbers = #tpu.dot_dimension_numbers<[1], [0], [0], [1], [0, 0, 1, 1], [], []>} : vector<1x32xbf16>, vector<32x128xbf16>, vector<1x128xf32> -> vector<1x128xf32>
    %286 = arith.addf %285, %5 : vector<1x128xf32>
    %287 = vector.shape_cast %286 : vector<1x128xf32> to vector<1x1x128xf32>
    %c0_80 = arith.constant 0 : index
    %c0_81 = arith.constant 0 : index
    %c0_82 = arith.constant 0 : index
    %288 = vector.load %arg5[%c0_80, %c0_81, %c0_82] : memref<1x1x128xf32, #tpu.memory_space<vmem>>, vector<1x1x128xf32>
    tpu.vector_store %arg5[%c0_80, %c0_81, %c0_82], %287 {strides = array<i32>} : memref<1x1x128xf32, #tpu.memory_space<vmem>>, vector<1x1x128xf32>,
    return
  }
  func.func @transform_0(%arg0: i32) -> (i32, i32, i32) {
    %c0_i32 = arith.constant 0 : i32
    %c0_i32_0 = arith.constant 0 : i32
    %c0_i32_1 = arith.constant 0 : i32
    return %arg0, %c0_i32, %c0_i32_0 : i32, i32, i32
  }
  func.func @transform_1(%arg0: i32) -> (i32, i32) {
    %c0_i32 = arith.constant 0 : i32
    %c0_i32_0 = arith.constant 0 : i32
    %c0_i32_1 = arith.constant 0 : i32
    return %c0_i32, %c0_i32_0 : i32, i32
  }
  func.func @transform_2(%arg0: i32) -> (i32, i32, i32) {
    %c0_i32 = arith.constant 0 : i32
    %c0_i32_0 = arith.constant 0 : i32
    %c0_i32_1 = arith.constant 0 : i32
    %c0_i32_2 = arith.constant 0 : i32
    return %c0_i32, %c0_i32_0, %c0_i32_1 : i32, i32, i32
  }
  func.func @transform_3(%arg0: i32) -> (i32, i32) {
    %c0_i32 = arith.constant 0 : i32
    %c0_i32_0 = arith.constant 0 : i32
    %c0_i32_1 = arith.constant 0 : i32
    return %c0_i32, %c0_i32_0 : i32, i32
  }
  func.func @transform_4(%arg0: i32) -> (i32, i32, i32) {
    %c0_i32 = arith.constant 0 : i32
    %c0_i32_0 = arith.constant 0 : i32
    %c0_i32_1 = arith.constant 0 : i32
    return %arg0, %c0_i32, %c0_i32_0 : i32, i32, i32
  }
}

module attributes {stable_mosaic.version = 11 : i64} {
  func.func @vit_fused_kernel(%arg0: i32, %arg1: memref<1x16x48xf32, #tpu.memory_space<vmem>>, %arg2: memref<80x128xbf16, #tpu.memory_space<vmem>>, %arg3: memref<2x224x128xbf16, #tpu.memory_space<vmem>>, %arg4: memref<40x128xf32, #tpu.memory_space<vmem>>, %arg5: memref<1x1x128xf32, #tpu.memory_space<vmem>>) attributes {dimension_semantics = [#tpu.dimension_semantics<parallel>], iteration_bounds = array<i64: 2>, scalar_prefetch = 0 : i64, scratch_operands = 0 : i64, tpu.core_type = #tpu.core_type<tc>, window_params = [{transform_indices = @transform_0, window_bounds = array<i64: 1, 16, 48>}, {pipeline_mode = #tpu.pipeline_mode<synchronous>, transform_indices = @transform_1, window_bounds = array<i64: 80, 128>}, {pipeline_mode = #tpu.pipeline_mode<synchronous>, transform_indices = @transform_2, window_bounds = array<i64: 2, 224, 128>}, {pipeline_mode = #tpu.pipeline_mode<synchronous>, transform_indices = @transform_3, window_bounds = array<i64: 40, 128>}, {transform_indices = @transform_4, window_bounds = array<i64: 1, 1, 128>}]} {
    %c0 = arith.constant 0 : index
    %c0_0 = arith.constant 0 : index
    %0 = vector.load %arg2[%c0, %c0_0] : memref<80x128xbf16, #tpu.memory_space<vmem>>, vector<48x32xbf16>
    %c48 = arith.constant 48 : index
    %c0_1 = arith.constant 0 : index
    %1 = vector.load %arg2[%c48, %c0_1] : memref<80x128xbf16, #tpu.memory_space<vmem>>, vector<32x128xbf16>
    %c0_2 = arith.constant 0 : index
    %c0_3 = arith.constant 0 : index
    %2 = vector.load %arg4[%c0_2, %c0_3] : memref<40x128xf32, #tpu.memory_space<vmem>>, vector<17x32xf32>
    %c17 = arith.constant 17 : index
    %c0_4 = arith.constant 0 : index
    %3 = vector.load %arg4[%c17, %c0_4] : memref<40x128xf32, #tpu.memory_space<vmem>>, vector<1x32xf32>
    %c18 = arith.constant 18 : index
    %c0_5 = arith.constant 0 : index
    %4 = vector.load %arg4[%c18, %c0_5] : memref<40x128xf32, #tpu.memory_space<vmem>>, vector<1x32xf32>
    %c19 = arith.constant 19 : index
    %c0_6 = arith.constant 0 : index
    %5 = vector.load %arg4[%c19, %c0_6] : memref<40x128xf32, #tpu.memory_space<vmem>>, vector<1x128xf32>
    %c0_7 = arith.constant 0 : index
    %c0_8 = arith.constant 0 : index
    %c0_9 = arith.constant 0 : index
    %6 = vector.load %arg1[%c0_7, %c0_8, %c0_9] : memref<1x16x48xf32, #tpu.memory_space<vmem>>, vector<1x16x48xf32>
    %7 = vector.shape_cast %6 : vector<1x16x48xf32> to vector<16x48xf32>
    %8 = arith.truncf %7 : vector<16x48xf32> to vector<16x48xbf16>
    %cst = arith.constant dense<0.000000e+00> : vector<16x32xf32>
    %9 = tpu.matmul %8, %0, %cst {dimension_numbers = #tpu.dot_dimension_numbers<[1], [0], [0], [1], [0, 0, 1, 1], [], []>} : vector<16x48xbf16>, vector<48x32xbf16>, vector<16x32xf32> -> vector<16x32xf32>
    %cst_10 = arith.constant 0.000000e+00 : f32
    %10 = vector.broadcast %cst_10 : f32 to vector<1x32xf32>
    %11 = tpu.concatenate %10, %9 in 0 : vector<1x32xf32>, vector<16x32xf32> -> vector<17x32xf32>
    %12 = arith.addf %11, %2 : vector<17x32xf32>
    %c0_11 = arith.constant 0 : index
    %c0_12 = arith.constant 0 : index
    %c0_13 = arith.constant 0 : index
    %13 = vector.load %arg3[%c0_11, %c0_12, %c0_13] : memref<2x224x128xbf16, #tpu.memory_space<vmem>>, vector<1x224x128xbf16>
    %14 = vector.shape_cast %13 : vector<1x224x128xbf16> to vector<224x128xbf16>
    %15 = vector.extract_strided_slice %14 {offsets = [0, 0], sizes = [32, 96], strides = [1, 1]} : vector<224x128xbf16> to vector<32x96xbf16>
    %16 = vector.extract_strided_slice %14 {offsets = [32, 0], sizes = [32, 32], strides = [1, 1]} : vector<224x128xbf16> to vector<32x32xbf16>
    %17 = vector.extract_strided_slice %14 {offsets = [64, 0], sizes = [32, 128], strides = [1, 1]} : vector<224x128xbf16> to vector<32x128xbf16>
    %18 = vector.extract_strided_slice %14 {offsets = [96, 0], sizes = [128, 32], strides = [1, 1]} : vector<224x128xbf16> to vector<128x32xbf16>
    %c20 = arith.constant 20 : index
    %c0_14 = arith.constant 0 : index
    %19 = vector.load %arg4[%c20, %c0_14] : memref<40x128xf32, #tpu.memory_space<vmem>>, vector<8x128xf32>
    %20 = vector.extract_strided_slice %19 {offsets = [0, 0], sizes = [1, 32], strides = [1, 1]} : vector<8x128xf32> to vector<1x32xf32>
    %21 = vector.extract_strided_slice %19 {offsets = [1, 0], sizes = [1, 32], strides = [1, 1]} : vector<8x128xf32> to vector<1x32xf32>
    %22 = vector.extract_strided_slice %19 {offsets = [2, 0], sizes = [1, 96], strides = [1, 1]} : vector<8x128xf32> to vector<1x96xf32>
    %23 = vector.extract_strided_slice %19 {offsets = [3, 0], sizes = [1, 32], strides = [1, 1]} : vector<8x128xf32> to vector<1x32xf32>
    %24 = vector.extract_strided_slice %19 {offsets = [4, 0], sizes = [1, 32], strides = [1, 1]} : vector<8x128xf32> to vector<1x32xf32>
    %25 = vector.extract_strided_slice %19 {offsets = [5, 0], sizes = [1, 32], strides = [1, 1]} : vector<8x128xf32> to vector<1x32xf32>
    %26 = vector.extract_strided_slice %19 {offsets = [6, 0], sizes = [1, 128], strides = [1, 1]} : vector<8x128xf32> to vector<1x128xf32>
    %27 = vector.extract_strided_slice %19 {offsets = [7, 0], sizes = [1, 32], strides = [1, 1]} : vector<8x128xf32> to vector<1x32xf32>
    %cst_15 = arith.constant dense<0.000000e+00> : vector<17xf32>
    %28 = vector.multi_reduction <add>, %12, %cst_15 [1] : vector<17x32xf32> to vector<17xf32>
    %29 = vector.shape_cast %28 : vector<17xf32> to vector<17x1xf32>
    %cst_16 = arith.constant 3.200000e+01 : f32
    %30 = vector.broadcast %cst_16 : f32 to vector<17x1xf32>
    %31 = arith.divf %29, %30 : vector<17x1xf32>
    %32 = vector.broadcast %31 : vector<17x1xf32> to vector<17x32xf32>
    %33 = arith.subf %12, %32 : vector<17x32xf32>
    %34 = arith.mulf %33, %33 : vector<17x32xf32>
    %cst_17 = arith.constant dense<0.000000e+00> : vector<17xf32>
    %35 = vector.multi_reduction <add>, %34, %cst_17 [1] : vector<17x32xf32> to vector<17xf32>
    %36 = vector.shape_cast %35 : vector<17xf32> to vector<17x1xf32>
    %cst_18 = arith.constant 3.200000e+01 : f32
    %37 = vector.broadcast %cst_18 : f32 to vector<17x1xf32>
    %38 = arith.divf %36, %37 : vector<17x1xf32>
    %39 = vector.broadcast %31 : vector<17x1xf32> to vector<17x32xf32>
    %40 = arith.subf %12, %39 : vector<17x32xf32>
    %cst_19 = arith.constant 9.99999996E-13 : f32
    %41 = vector.broadcast %cst_19 : f32 to vector<17x1xf32>
    %42 = arith.addf %38, %41 : vector<17x1xf32>
    %43 = math.rsqrt %42 : vector<17x1xf32>
    %44 = vector.broadcast %43 : vector<17x1xf32> to vector<17x32xf32>
    %45 = arith.mulf %40, %44 : vector<17x32xf32>
    %46 = vector.broadcast %20 : vector<1x32xf32> to vector<17x32xf32>
    %47 = arith.mulf %45, %46 : vector<17x32xf32>
    %48 = vector.broadcast %21 : vector<1x32xf32> to vector<17x32xf32>
    %49 = arith.addf %47, %48 : vector<17x32xf32>
    %50 = arith.truncf %49 : vector<17x32xf32> to vector<17x32xbf16>
    %cst_20 = arith.constant dense<0.000000e+00> : vector<17x96xf32>
    %51 = tpu.matmul %50, %15, %cst_20 {dimension_numbers = #tpu.dot_dimension_numbers<[1], [0], [0], [1], [0, 0, 1, 1], [], []>} : vector<17x32xbf16>, vector<32x96xbf16>, vector<17x96xf32> -> vector<17x96xf32>
    %52 = vector.broadcast %22 : vector<1x96xf32> to vector<17x96xf32>
    %53 = arith.addf %51, %52 : vector<17x96xf32>
    %54 = vector.extract_strided_slice %53 {offsets = [0, 0], sizes = [17, 16], strides = [1, 1]} : vector<17x96xf32> to vector<17x16xf32>
    %55 = vector.extract_strided_slice %53 {offsets = [0, 32], sizes = [17, 16], strides = [1, 1]} : vector<17x96xf32> to vector<17x16xf32>
    %56 = vector.extract_strided_slice %53 {offsets = [0, 64], sizes = [17, 16], strides = [1, 1]} : vector<17x96xf32> to vector<17x16xf32>
    %cst_21 = arith.constant dense<0.000000e+00> : vector<17x17xf32>
    %57 = tpu.matmul %54, %55, %cst_21 {dimension_numbers = #tpu.dot_dimension_numbers<[1], [1], [0], [0], [0, 0, 1, 0], [], []>} : vector<17x16xf32>, vector<17x16xf32>, vector<17x17xf32> -> vector<17x17xf32>
    %cst_22 = arith.constant 2.500000e-01 : f32
    %58 = vector.broadcast %cst_22 : f32 to vector<17x17xf32>
    %59 = arith.mulf %57, %58 : vector<17x17xf32>
    %cst_23 = arith.constant dense<0xFF800000> : vector<17xf32>
    %60 = vector.multi_reduction <maximumf>, %59, %cst_23 [1] : vector<17x17xf32> to vector<17xf32>
    %61 = vector.shape_cast %60 : vector<17xf32> to vector<17x1xf32>
    %62 = vector.broadcast %61 : vector<17x1xf32> to vector<17x17xf32>
    %63 = arith.subf %59, %62 : vector<17x17xf32>
    %64 = math.exp %63 : vector<17x17xf32>
    %cst_24 = arith.constant dense<0.000000e+00> : vector<17xf32>
    %65 = vector.multi_reduction <add>, %64, %cst_24 [1] : vector<17x17xf32> to vector<17xf32>
    %66 = vector.shape_cast %65 : vector<17xf32> to vector<17x1xf32>
    %67 = tpu.reciprocal %66 {approx = true} : vector<17x1xf32> -> vector<17x1xf32>
    %68 = vector.broadcast %67 : vector<17x1xf32> to vector<17x17xf32>
    %69 = arith.mulf %64, %68 : vector<17x17xf32>
    %cst_25 = arith.constant dense<0.000000e+00> : vector<17x16xf32>
    %70 = tpu.matmul %69, %56, %cst_25 {dimension_numbers = #tpu.dot_dimension_numbers<[1], [0], [0], [1], [0, 0, 1, 1], [], []>} : vector<17x17xf32>, vector<17x16xf32>, vector<17x16xf32> -> vector<17x16xf32>
    %71 = vector.extract_strided_slice %53 {offsets = [0, 16], sizes = [17, 16], strides = [1, 1]} : vector<17x96xf32> to vector<17x16xf32>
    %72 = vector.extract_strided_slice %53 {offsets = [0, 48], sizes = [17, 16], strides = [1, 1]} : vector<17x96xf32> to vector<17x16xf32>
    %73 = vector.extract_strided_slice %53 {offsets = [0, 80], sizes = [17, 16], strides = [1, 1]} : vector<17x96xf32> to vector<17x16xf32>
    %cst_26 = arith.constant dense<0.000000e+00> : vector<17x17xf32>
    %74 = tpu.matmul %71, %72, %cst_26 {dimension_numbers = #tpu.dot_dimension_numbers<[1], [1], [0], [0], [0, 0, 1, 0], [], []>} : vector<17x16xf32>, vector<17x16xf32>, vector<17x17xf32> -> vector<17x17xf32>
    %cst_27 = arith.constant 2.500000e-01 : f32
    %75 = vector.broadcast %cst_27 : f32 to vector<17x17xf32>
    %76 = arith.mulf %74, %75 : vector<17x17xf32>
    %cst_28 = arith.constant dense<0xFF800000> : vector<17xf32>
    %77 = vector.multi_reduction <maximumf>, %76, %cst_28 [1] : vector<17x17xf32> to vector<17xf32>
    %78 = vector.shape_cast %77 : vector<17xf32> to vector<17x1xf32>
    %79 = vector.broadcast %78 : vector<17x1xf32> to vector<17x17xf32>
    %80 = arith.subf %76, %79 : vector<17x17xf32>
    %81 = math.exp %80 : vector<17x17xf32>
    %cst_29 = arith.constant dense<0.000000e+00> : vector<17xf32>
    %82 = vector.multi_reduction <add>, %81, %cst_29 [1] : vector<17x17xf32> to vector<17xf32>
    %83 = vector.shape_cast %82 : vector<17xf32> to vector<17x1xf32>
    %84 = tpu.reciprocal %83 {approx = true} : vector<17x1xf32> -> vector<17x1xf32>
    %85 = vector.broadcast %84 : vector<17x1xf32> to vector<17x17xf32>
    %86 = arith.mulf %81, %85 : vector<17x17xf32>
    %cst_30 = arith.constant dense<0.000000e+00> : vector<17x16xf32>
    %87 = tpu.matmul %86, %73, %cst_30 {dimension_numbers = #tpu.dot_dimension_numbers<[1], [0], [0], [1], [0, 0, 1, 1], [], []>} : vector<17x17xf32>, vector<17x16xf32>, vector<17x16xf32> -> vector<17x16xf32>
    %88 = tpu.concatenate %70, %87 in 1 : vector<17x16xf32>, vector<17x16xf32> -> vector<17x32xf32>
    %89 = arith.truncf %88 : vector<17x32xf32> to vector<17x32xbf16>
    %cst_31 = arith.constant dense<0.000000e+00> : vector<17x32xf32>
    %90 = tpu.matmul %89, %16, %cst_31 {dimension_numbers = #tpu.dot_dimension_numbers<[1], [0], [0], [1], [0, 0, 1, 1], [], []>} : vector<17x32xbf16>, vector<32x32xbf16>, vector<17x32xf32> -> vector<17x32xf32>
    %91 = arith.addf %12, %90 : vector<17x32xf32>
    %92 = vector.broadcast %23 : vector<1x32xf32> to vector<17x32xf32>
    %93 = arith.addf %91, %92 : vector<17x32xf32>
    %cst_32 = arith.constant dense<0.000000e+00> : vector<17xf32>
    %94 = vector.multi_reduction <add>, %93, %cst_32 [1] : vector<17x32xf32> to vector<17xf32>
    %95 = vector.shape_cast %94 : vector<17xf32> to vector<17x1xf32>
    %cst_33 = arith.constant 3.200000e+01 : f32
    %96 = vector.broadcast %cst_33 : f32 to vector<17x1xf32>
    %97 = arith.divf %95, %96 : vector<17x1xf32>
    %98 = vector.broadcast %97 : vector<17x1xf32> to vector<17x32xf32>
    %99 = arith.subf %93, %98 : vector<17x32xf32>
    %100 = arith.mulf %99, %99 : vector<17x32xf32>
    %cst_34 = arith.constant dense<0.000000e+00> : vector<17xf32>
    %101 = vector.multi_reduction <add>, %100, %cst_34 [1] : vector<17x32xf32> to vector<17xf32>
    %102 = vector.shape_cast %101 : vector<17xf32> to vector<17x1xf32>
    %cst_35 = arith.constant 3.200000e+01 : f32
    %103 = vector.broadcast %cst_35 : f32 to vector<17x1xf32>
    %104 = arith.divf %102, %103 : vector<17x1xf32>
    %105 = vector.broadcast %97 : vector<17x1xf32> to vector<17x32xf32>
    %106 = arith.subf %93, %105 : vector<17x32xf32>
    %cst_36 = arith.constant 9.99999996E-13 : f32
    %107 = vector.broadcast %cst_36 : f32 to vector<17x1xf32>
    %108 = arith.addf %104, %107 : vector<17x1xf32>
    %109 = math.rsqrt %108 : vector<17x1xf32>
    %110 = vector.broadcast %109 : vector<17x1xf32> to vector<17x32xf32>
    %111 = arith.mulf %106, %110 : vector<17x32xf32>
    %112 = vector.broadcast %24 : vector<1x32xf32> to vector<17x32xf32>
    %113 = arith.mulf %111, %112 : vector<17x32xf32>
    %114 = vector.broadcast %25 : vector<1x32xf32> to vector<17x32xf32>
    %115 = arith.addf %113, %114 : vector<17x32xf32>
    %116 = arith.truncf %115 : vector<17x32xf32> to vector<17x32xbf16>
    %cst_37 = arith.constant dense<0.000000e+00> : vector<17x128xf32>
    %117 = tpu.matmul %116, %17, %cst_37 {dimension_numbers = #tpu.dot_dimension_numbers<[1], [0], [0], [1], [0, 0, 1, 1], [], []>} : vector<17x32xbf16>, vector<32x128xbf16>, vector<17x128xf32> -> vector<17x128xf32>
    %118 = vector.broadcast %26 : vector<1x128xf32> to vector<17x128xf32>
    %119 = arith.addf %117, %118 : vector<17x128xf32>
    %cst_38 = arith.constant 5.000000e-01 : f32
    %120 = vector.broadcast %cst_38 : f32 to vector<17x128xf32>
    %121 = arith.mulf %120, %119 : vector<17x128xf32>
    %cst_39 = arith.constant 4.471500e-02 : f32
    %122 = vector.broadcast %cst_39 : f32 to vector<17x128xf32>
    %123 = arith.mulf %122, %119 : vector<17x128xf32>
    %124 = arith.mulf %123, %119 : vector<17x128xf32>
    %125 = arith.mulf %124, %119 : vector<17x128xf32>
    %126 = arith.addf %119, %125 : vector<17x128xf32>
    %cst_40 = arith.constant 0.797884583 : f32
    %127 = vector.broadcast %cst_40 : f32 to vector<17x128xf32>
    %128 = arith.mulf %127, %126 : vector<17x128xf32>
    %129 = math.tanh %128 : vector<17x128xf32>
    %cst_41 = arith.constant 1.000000e+00 : f32
    %130 = vector.broadcast %cst_41 : f32 to vector<17x128xf32>
    %131 = arith.addf %130, %129 : vector<17x128xf32>
    %132 = arith.mulf %121, %131 : vector<17x128xf32>
    %133 = arith.truncf %132 : vector<17x128xf32> to vector<17x128xbf16>
    %cst_42 = arith.constant dense<0.000000e+00> : vector<17x32xf32>
    %134 = tpu.matmul %133, %18, %cst_42 {dimension_numbers = #tpu.dot_dimension_numbers<[1], [0], [0], [1], [0, 0, 1, 1], [], []>} : vector<17x128xbf16>, vector<128x32xbf16>, vector<17x32xf32> -> vector<17x32xf32>
    %135 = arith.addf %93, %134 : vector<17x32xf32>
    %136 = vector.broadcast %27 : vector<1x32xf32> to vector<17x32xf32>
    %137 = arith.addf %135, %136 : vector<17x32xf32>
    %c1 = arith.constant 1 : index
    %c0_43 = arith.constant 0 : index
    %c0_44 = arith.constant 0 : index
    %138 = vector.load %arg3[%c1, %c0_43, %c0_44] : memref<2x224x128xbf16, #tpu.memory_space<vmem>>, vector<1x224x128xbf16>
    %139 = vector.shape_cast %138 : vector<1x224x128xbf16> to vector<224x128xbf16>
    %140 = vector.extract_strided_slice %139 {offsets = [0, 0], sizes = [32, 96], strides = [1, 1]} : vector<224x128xbf16> to vector<32x96xbf16>
    %141 = vector.extract_strided_slice %139 {offsets = [32, 0], sizes = [32, 32], strides = [1, 1]} : vector<224x128xbf16> to vector<32x32xbf16>
    %142 = vector.extract_strided_slice %139 {offsets = [64, 0], sizes = [32, 128], strides = [1, 1]} : vector<224x128xbf16> to vector<32x128xbf16>
    %143 = vector.extract_strided_slice %139 {offsets = [96, 0], sizes = [128, 32], strides = [1, 1]} : vector<224x128xbf16> to vector<128x32xbf16>
    %c28 = arith.constant 28 : index
    %c0_45 = arith.constant 0 : index
    %144 = vector.load %arg4[%c28, %c0_45] : memref<40x128xf32, #tpu.memory_space<vmem>>, vector<8x128xf32>
    %145 = vector.extract_strided_slice %144 {offsets = [0, 0], sizes = [1, 32], strides = [1, 1]} : vector<8x128xf32> to vector<1x32xf32>
    %146 = vector.extract_strided_slice %144 {offsets = [1, 0], sizes = [1, 32], strides = [1, 1]} : vector<8x128xf32> to vector<1x32xf32>
    %147 = vector.extract_strided_slice %144 {offsets = [2, 0], sizes = [1, 96], strides = [1, 1]} : vector<8x128xf32> to vector<1x96xf32>
    %148 = vector.extract_strided_slice %144 {offsets = [3, 0], sizes = [1, 32], strides = [1, 1]} : vector<8x128xf32> to vector<1x32xf32>
    %149 = vector.extract_strided_slice %144 {offsets = [4, 0], sizes = [1, 32], strides = [1, 1]} : vector<8x128xf32> to vector<1x32xf32>
    %150 = vector.extract_strided_slice %144 {offsets = [5, 0], sizes = [1, 32], strides = [1, 1]} : vector<8x128xf32> to vector<1x32xf32>
    %151 = vector.extract_strided_slice %144 {offsets = [6, 0], sizes = [1, 128], strides = [1, 1]} : vector<8x128xf32> to vector<1x128xf32>
    %152 = vector.extract_strided_slice %144 {offsets = [7, 0], sizes = [1, 32], strides = [1, 1]} : vector<8x128xf32> to vector<1x32xf32>
    %cst_46 = arith.constant dense<0.000000e+00> : vector<17xf32>
    %153 = vector.multi_reduction <add>, %137, %cst_46 [1] : vector<17x32xf32> to vector<17xf32>
    %154 = vector.shape_cast %153 : vector<17xf32> to vector<17x1xf32>
    %cst_47 = arith.constant 3.200000e+01 : f32
    %155 = vector.broadcast %cst_47 : f32 to vector<17x1xf32>
    %156 = arith.divf %154, %155 : vector<17x1xf32>
    %157 = vector.broadcast %156 : vector<17x1xf32> to vector<17x32xf32>
    %158 = arith.subf %137, %157 : vector<17x32xf32>
    %159 = arith.mulf %158, %158 : vector<17x32xf32>
    %cst_48 = arith.constant dense<0.000000e+00> : vector<17xf32>
    %160 = vector.multi_reduction <add>, %159, %cst_48 [1] : vector<17x32xf32> to vector<17xf32>
    %161 = vector.shape_cast %160 : vector<17xf32> to vector<17x1xf32>
    %cst_49 = arith.constant 3.200000e+01 : f32
    %162 = vector.broadcast %cst_49 : f32 to vector<17x1xf32>
    %163 = arith.divf %161, %162 : vector<17x1xf32>
    %164 = vector.broadcast %156 : vector<17x1xf32> to vector<17x32xf32>
    %165 = arith.subf %137, %164 : vector<17x32xf32>
    %cst_50 = arith.constant 9.99999996E-13 : f32
    %166 = vector.broadcast %cst_50 : f32 to vector<17x1xf32>
    %167 = arith.addf %163, %166 : vector<17x1xf32>
    %168 = math.rsqrt %167 : vector<17x1xf32>
    %169 = vector.broadcast %168 : vector<17x1xf32> to vector<17x32xf32>
    %170 = arith.mulf %165, %169 : vector<17x32xf32>
    %171 = vector.broadcast %145 : vector<1x32xf32> to vector<17x32xf32>
    %172 = arith.mulf %170, %171 : vector<17x32xf32>
    %173 = vector.broadcast %146 : vector<1x32xf32> to vector<17x32xf32>
    %174 = arith.addf %172, %173 : vector<17x32xf32>
    %175 = arith.truncf %174 : vector<17x32xf32> to vector<17x32xbf16>
    %cst_51 = arith.constant dense<0.000000e+00> : vector<17x96xf32>
    %176 = tpu.matmul %175, %140, %cst_51 {dimension_numbers = #tpu.dot_dimension_numbers<[1], [0], [0], [1], [0, 0, 1, 1], [], []>} : vector<17x32xbf16>, vector<32x96xbf16>, vector<17x96xf32> -> vector<17x96xf32>
    %177 = vector.broadcast %147 : vector<1x96xf32> to vector<17x96xf32>
    %178 = arith.addf %176, %177 : vector<17x96xf32>
    %179 = vector.extract_strided_slice %178 {offsets = [0, 0], sizes = [17, 16], strides = [1, 1]} : vector<17x96xf32> to vector<17x16xf32>
    %180 = vector.extract_strided_slice %178 {offsets = [0, 32], sizes = [17, 16], strides = [1, 1]} : vector<17x96xf32> to vector<17x16xf32>
    %181 = vector.extract_strided_slice %178 {offsets = [0, 64], sizes = [17, 16], strides = [1, 1]} : vector<17x96xf32> to vector<17x16xf32>
    %cst_52 = arith.constant dense<0.000000e+00> : vector<17x17xf32>
    %182 = tpu.matmul %179, %180, %cst_52 {dimension_numbers = #tpu.dot_dimension_numbers<[1], [1], [0], [0], [0, 0, 1, 0], [], []>} : vector<17x16xf32>, vector<17x16xf32>, vector<17x17xf32> -> vector<17x17xf32>
    %cst_53 = arith.constant 2.500000e-01 : f32
    %183 = vector.broadcast %cst_53 : f32 to vector<17x17xf32>
    %184 = arith.mulf %182, %183 : vector<17x17xf32>
    %cst_54 = arith.constant dense<0xFF800000> : vector<17xf32>
    %185 = vector.multi_reduction <maximumf>, %184, %cst_54 [1] : vector<17x17xf32> to vector<17xf32>
    %186 = vector.shape_cast %185 : vector<17xf32> to vector<17x1xf32>
    %187 = vector.broadcast %186 : vector<17x1xf32> to vector<17x17xf32>
    %188 = arith.subf %184, %187 : vector<17x17xf32>
    %189 = math.exp %188 : vector<17x17xf32>
    %cst_55 = arith.constant dense<0.000000e+00> : vector<17xf32>
    %190 = vector.multi_reduction <add>, %189, %cst_55 [1] : vector<17x17xf32> to vector<17xf32>
    %191 = vector.shape_cast %190 : vector<17xf32> to vector<17x1xf32>
    %192 = tpu.reciprocal %191 {approx = true} : vector<17x1xf32> -> vector<17x1xf32>
    %193 = vector.broadcast %192 : vector<17x1xf32> to vector<17x17xf32>
    %194 = arith.mulf %189, %193 : vector<17x17xf32>
    %cst_56 = arith.constant dense<0.000000e+00> : vector<17x16xf32>
    %195 = tpu.matmul %194, %181, %cst_56 {dimension_numbers = #tpu.dot_dimension_numbers<[1], [0], [0], [1], [0, 0, 1, 1], [], []>} : vector<17x17xf32>, vector<17x16xf32>, vector<17x16xf32> -> vector<17x16xf32>
    %196 = vector.extract_strided_slice %178 {offsets = [0, 16], sizes = [17, 16], strides = [1, 1]} : vector<17x96xf32> to vector<17x16xf32>
    %197 = vector.extract_strided_slice %178 {offsets = [0, 48], sizes = [17, 16], strides = [1, 1]} : vector<17x96xf32> to vector<17x16xf32>
    %198 = vector.extract_strided_slice %178 {offsets = [0, 80], sizes = [17, 16], strides = [1, 1]} : vector<17x96xf32> to vector<17x16xf32>
    %cst_57 = arith.constant dense<0.000000e+00> : vector<17x17xf32>
    %199 = tpu.matmul %196, %197, %cst_57 {dimension_numbers = #tpu.dot_dimension_numbers<[1], [1], [0], [0], [0, 0, 1, 0], [], []>} : vector<17x16xf32>, vector<17x16xf32>, vector<17x17xf32> -> vector<17x17xf32>
    %cst_58 = arith.constant 2.500000e-01 : f32
    %200 = vector.broadcast %cst_58 : f32 to vector<17x17xf32>
    %201 = arith.mulf %199, %200 : vector<17x17xf32>
    %cst_59 = arith.constant dense<0xFF800000> : vector<17xf32>
    %202 = vector.multi_reduction <maximumf>, %201, %cst_59 [1] : vector<17x17xf32> to vector<17xf32>
    %203 = vector.shape_cast %202 : vector<17xf32> to vector<17x1xf32>
    %204 = vector.broadcast %203 : vector<17x1xf32> to vector<17x17xf32>
    %205 = arith.subf %201, %204 : vector<17x17xf32>
    %206 = math.exp %205 : vector<17x17xf32>
    %cst_60 = arith.constant dense<0.000000e+00> : vector<17xf32>
    %207 = vector.multi_reduction <add>, %206, %cst_60 [1] : vector<17x17xf32> to vector<17xf32>
    %208 = vector.shape_cast %207 : vector<17xf32> to vector<17x1xf32>
    %209 = tpu.reciprocal %208 {approx = true} : vector<17x1xf32> -> vector<17x1xf32>
    %210 = vector.broadcast %209 : vector<17x1xf32> to vector<17x17xf32>
    %211 = arith.mulf %206, %210 : vector<17x17xf32>
    %cst_61 = arith.constant dense<0.000000e+00> : vector<17x16xf32>
    %212 = tpu.matmul %211, %198, %cst_61 {dimension_numbers = #tpu.dot_dimension_numbers<[1], [0], [0], [1], [0, 0, 1, 1], [], []>} : vector<17x17xf32>, vector<17x16xf32>, vector<17x16xf32> -> vector<17x16xf32>
    %213 = tpu.concatenate %195, %212 in 1 : vector<17x16xf32>, vector<17x16xf32> -> vector<17x32xf32>
    %214 = arith.truncf %213 : vector<17x32xf32> to vector<17x32xbf16>
    %cst_62 = arith.constant dense<0.000000e+00> : vector<17x32xf32>
    %215 = tpu.matmul %214, %141, %cst_62 {dimension_numbers = #tpu.dot_dimension_numbers<[1], [0], [0], [1], [0, 0, 1, 1], [], []>} : vector<17x32xbf16>, vector<32x32xbf16>, vector<17x32xf32> -> vector<17x32xf32>
    %216 = arith.addf %137, %215 : vector<17x32xf32>
    %217 = vector.broadcast %148 : vector<1x32xf32> to vector<17x32xf32>
    %218 = arith.addf %216, %217 : vector<17x32xf32>
    %cst_63 = arith.constant dense<0.000000e+00> : vector<17xf32>
    %219 = vector.multi_reduction <add>, %218, %cst_63 [1] : vector<17x32xf32> to vector<17xf32>
    %220 = vector.shape_cast %219 : vector<17xf32> to vector<17x1xf32>
    %cst_64 = arith.constant 3.200000e+01 : f32
    %221 = vector.broadcast %cst_64 : f32 to vector<17x1xf32>
    %222 = arith.divf %220, %221 : vector<17x1xf32>
    %223 = vector.broadcast %222 : vector<17x1xf32> to vector<17x32xf32>
    %224 = arith.subf %218, %223 : vector<17x32xf32>
    %225 = arith.mulf %224, %224 : vector<17x32xf32>
    %cst_65 = arith.constant dense<0.000000e+00> : vector<17xf32>
    %226 = vector.multi_reduction <add>, %225, %cst_65 [1] : vector<17x32xf32> to vector<17xf32>
    %227 = vector.shape_cast %226 : vector<17xf32> to vector<17x1xf32>
    %cst_66 = arith.constant 3.200000e+01 : f32
    %228 = vector.broadcast %cst_66 : f32 to vector<17x1xf32>
    %229 = arith.divf %227, %228 : vector<17x1xf32>
    %230 = vector.broadcast %222 : vector<17x1xf32> to vector<17x32xf32>
    %231 = arith.subf %218, %230 : vector<17x32xf32>
    %cst_67 = arith.constant 9.99999996E-13 : f32
    %232 = vector.broadcast %cst_67 : f32 to vector<17x1xf32>
    %233 = arith.addf %229, %232 : vector<17x1xf32>
    %234 = math.rsqrt %233 : vector<17x1xf32>
    %235 = vector.broadcast %234 : vector<17x1xf32> to vector<17x32xf32>
    %236 = arith.mulf %231, %235 : vector<17x32xf32>
    %237 = vector.broadcast %149 : vector<1x32xf32> to vector<17x32xf32>
    %238 = arith.mulf %236, %237 : vector<17x32xf32>
    %239 = vector.broadcast %150 : vector<1x32xf32> to vector<17x32xf32>
    %240 = arith.addf %238, %239 : vector<17x32xf32>
    %241 = arith.truncf %240 : vector<17x32xf32> to vector<17x32xbf16>
    %cst_68 = arith.constant dense<0.000000e+00> : vector<17x128xf32>
    %242 = tpu.matmul %241, %142, %cst_68 {dimension_numbers = #tpu.dot_dimension_numbers<[1], [0], [0], [1], [0, 0, 1, 1], [], []>} : vector<17x32xbf16>, vector<32x128xbf16>, vector<17x128xf32> -> vector<17x128xf32>
    %243 = vector.broadcast %151 : vector<1x128xf32> to vector<17x128xf32>
    %244 = arith.addf %242, %243 : vector<17x128xf32>
    %cst_69 = arith.constant 5.000000e-01 : f32
    %245 = vector.broadcast %cst_69 : f32 to vector<17x128xf32>
    %246 = arith.mulf %245, %244 : vector<17x128xf32>
    %cst_70 = arith.constant 4.471500e-02 : f32
    %247 = vector.broadcast %cst_70 : f32 to vector<17x128xf32>
    %248 = arith.mulf %247, %244 : vector<17x128xf32>
    %249 = arith.mulf %248, %244 : vector<17x128xf32>
    %250 = arith.mulf %249, %244 : vector<17x128xf32>
    %251 = arith.addf %244, %250 : vector<17x128xf32>
    %cst_71 = arith.constant 0.797884583 : f32
    %252 = vector.broadcast %cst_71 : f32 to vector<17x128xf32>
    %253 = arith.mulf %252, %251 : vector<17x128xf32>
    %254 = math.tanh %253 : vector<17x128xf32>
    %cst_72 = arith.constant 1.000000e+00 : f32
    %255 = vector.broadcast %cst_72 : f32 to vector<17x128xf32>
    %256 = arith.addf %255, %254 : vector<17x128xf32>
    %257 = arith.mulf %246, %256 : vector<17x128xf32>
    %258 = arith.truncf %257 : vector<17x128xf32> to vector<17x128xbf16>
    %cst_73 = arith.constant dense<0.000000e+00> : vector<17x32xf32>
    %259 = tpu.matmul %258, %143, %cst_73 {dimension_numbers = #tpu.dot_dimension_numbers<[1], [0], [0], [1], [0, 0, 1, 1], [], []>} : vector<17x128xbf16>, vector<128x32xbf16>, vector<17x32xf32> -> vector<17x32xf32>
    %260 = arith.addf %218, %259 : vector<17x32xf32>
    %261 = vector.broadcast %152 : vector<1x32xf32> to vector<17x32xf32>
    %262 = arith.addf %260, %261 : vector<17x32xf32>
    %263 = vector.extract_strided_slice %262 {offsets = [0, 0], sizes = [1, 32], strides = [1, 1]} : vector<17x32xf32> to vector<1x32xf32>
    %cst_74 = arith.constant dense<0.000000e+00> : vector<1xf32>
    %264 = vector.multi_reduction <add>, %263, %cst_74 [1] : vector<1x32xf32> to vector<1xf32>
    %265 = vector.shape_cast %264 : vector<1xf32> to vector<1x1xf32>
    %cst_75 = arith.constant 3.200000e+01 : f32
    %266 = vector.broadcast %cst_75 : f32 to vector<1x1xf32>
    %267 = arith.divf %265, %266 : vector<1x1xf32>
    %268 = vector.broadcast %267 : vector<1x1xf32> to vector<1x32xf32>
    %269 = arith.subf %263, %268 : vector<1x32xf32>
    %270 = arith.mulf %269, %269 : vector<1x32xf32>
    %cst_76 = arith.constant dense<0.000000e+00> : vector<1xf32>
    %271 = vector.multi_reduction <add>, %270, %cst_76 [1] : vector<1x32xf32> to vector<1xf32>
    %272 = vector.shape_cast %271 : vector<1xf32> to vector<1x1xf32>
    %cst_77 = arith.constant 3.200000e+01 : f32
    %273 = vector.broadcast %cst_77 : f32 to vector<1x1xf32>
    %274 = arith.divf %272, %273 : vector<1x1xf32>
    %275 = vector.broadcast %267 : vector<1x1xf32> to vector<1x32xf32>
    %276 = arith.subf %263, %275 : vector<1x32xf32>
    %cst_78 = arith.constant 9.99999996E-13 : f32
    %277 = vector.broadcast %cst_78 : f32 to vector<1x1xf32>
    %278 = arith.addf %274, %277 : vector<1x1xf32>
    %279 = math.rsqrt %278 : vector<1x1xf32>
    %280 = vector.broadcast %279 : vector<1x1xf32> to vector<1x32xf32>
    %281 = arith.mulf %276, %280 : vector<1x32xf32>
    %282 = arith.mulf %281, %3 : vector<1x32xf32>
    %283 = arith.addf %282, %4 : vector<1x32xf32>
    %284 = arith.truncf %283 : vector<1x32xf32> to vector<1x32xbf16>
    %cst_79 = arith.constant dense<0.000000e+00> : vector<1x128xf32>
    %285 = tpu.matmul %284, %1, %cst_79 {dimension_numbers = #tpu.dot_dimension_numbers<[1], [0], [0], [1], [0, 0, 1, 1], [], []>} : vector<1x32xbf16>, vector<32x128xbf16>, vector<1x128xf32> -> vector<1x128xf32>
    %286 = arith.addf %285, %5 : vector<1x128xf32>
    %287 = vector.shape_cast %286 : vector<1x128xf32> to vector<1x1x128xf32>
    %c0_80 = arith.constant 0 : index
    %c0_81 = arith.constant 0 : index
    %c0_82 = arith.constant 0 : index
    %288 = vector.load %arg5[%c0_80, %c0_81, %c0_82] : memref<1x1x128xf32, #tpu.memory_space<vmem>>, vector<1x1x128xf32>
    tpu.vector_store %arg5[%c0_80, %c0_81, %c0_82], %287 {strides = array<i32>} : memref<1x1x128xf32, #tpu.memory_space<vmem>>, vector<1x1x128xf32>,
    return
  }
  func.func @transform_0(%arg0: i32) -> (i32, i32, i32) {
    %c0_i32 = arith.constant 0 : i32
    %c0_i32_0 = arith.constant 0 : i32
    %c0_i32_1 = arith.constant 0 : i32
    return %arg0, %c0_i32, %c0_i32_0 : i32, i32, i32
  }
  func.func @transform_1(%arg0: i32) -> (i32, i32) {
    %c0_i32 = arith.constant 0 : i32
    %c0_i32_0 = arith.constant 0 : i32
    %c0_i32_1 = arith.constant 0 : i32
    return %c0_i32, %c0_i32_0 : i32, i32
  }
  func.func @transform_2(%arg0: i32) -> (i32, i32, i32) {
    %c0_i32 = arith.constant 0 : i32
    %c0_i32_0 = arith.constant 0 : i32
    %c0_i32_1 = arith.constant 0 : i32
    %c0_i32_2 = arith.constant 0 : i32
    return %c0_i32, %c0_i32_0, %c0_i32_1 : i32, i32, i32
  }
  func.func @transform_3(%arg0: i32) -> (i32, i32) {
    %c0_i32 = arith.constant 0 : i32
    %c0_i32_0 = arith.constant 0 : i32
    %c0_i32_1 = arith.constant 0 : i32
    return %c0_i32, %c0_i32_0 : i32, i32
  }
  func.func @transform_4(%arg0: i32) -> (i32, i32, i32) {
    %c0_i32 = arith.constant 0 : i32
    %c0_i32_0 = arith.constant 0 : i32
    %c0_i32_1 = arith.constant 0 : i32
    return %arg0, %c0_i32, %c0_i32_0 : i32, i32, i32
  }
}

</mosaic_0001>

<llo_original>
// kernel: vit_forward.1
$region0: #{vit_forward.1}
  #allocation0 [shape = 'u32[]', space=smem, size = 0x4, offset = 0x4, fixed_abs, tag = 'smem constant byte address 0x4 - core index']
  #allocation1 [shape = 'u32[144,128]{1,0:T(1,128)}', space=vmem, size = 0x12000, scoped, tag = 'internal scratch']
  %s0 = inlined_call_operand.vmem [shape: f32[2,16,48], index: 0, kind: input, shape index: {}]
  %s1 = inlined_call_operand.vmem [shape: bf16[80,128], index: 1, kind: input, shape index: {}]
  %s2 = inlined_call_operand.vmem [shape: bf16[2,224,128], index: 2, kind: input, shape index: {}]
  %s3 = inlined_call_operand.vmem [shape: f32[40,128], index: 3, kind: input, shape index: {}]
  %s4 = inlined_call_operand.vmem [shape: f32[2,1,128], index: 4, kind: output, shape index: {}]
  %s5 = sld [smem:[#allocation0]]
  $region49: #{vit_forward.1} parent=0
    _
  %s7 = ssub.s32 1, %s5
  %s8 = scalar_select 0, %s7, %s5
  loop: start=0, step=1, limit=4
  $region2: #{vit_forward.1} parent=0 // loop_pre_header
    _
  $region3: #{vit_forward.1} parent=0 // loop_header
    %s10 = sphi 0, %s14
    %p11 = scmp.ge.s32.totalorder %s10, 4
    %s20 = sphi 0, %s22
    %s23 = sphi 0, %s20
    %s24 = sphi 0, %s23
    %s40 = sphi 0, %s24
    %s44 = sphi 0, %s44
    %s46 = sphi 0, %s44
    %s47 = sphi 0, %s46
    %s61 = sphi 0, %s47
    %s65 = sphi 0, %s65
    %s67 = sphi 0, %s65
    %s68 = sphi 0, %s67
    %s82 = sphi 0, %s68
    %s86 = sphi 0, %s86
    %s88 = sphi 0, %s86
    %s89 = sphi 0, %s88
    %s103 = sphi 0, %s89
    %s109 = sphi 0, %s111
    %s112 = sphi 0, %s109
    %s113 = sphi 0, %s112
    %s129 = sphi 0, %s113
  $region4: #{vit_forward.1} parent=0 // loop_header_branch
    %13 = sbr.rel (%p11) target = $region8
  $region5: #{vit_forward.1} parent=0 // loop_body
    %s15 = ssub.s32 %s10, 1
    %s16 = ssub.s32 %s10, 2
    %s17 = sadd.s32 %s10, 1
    %s18 = ssub.s32 %s10, %s17
    %p19 = scmp.eq.s32.totalorder %s18, 0
    %s21 = sadd.s32 %s20, 1
    %s22 = scalar_select %p19, %s20, %s21
    %p25 = pneg %p19
    %p26 = scmp.eq.s32.totalorder %s10, 1
    %p27 = por %p25, %p26
    %p28 = scmp.ne.s32.totalorder %s20, %s23
    %p29 = scmp.eq.s32.totalorder %s10, 0
    %p30 = por %p28, %p29
    %p31 = scmp.ne.s32.totalorder %s20, %s23
    %p32 = scmp.eq.s32.totalorder %s15, 1
    %p33 = por %p31, %p32
    %p34 = scmp.ne.s32.totalorder %s23, %s24
    %p35 = scmp.eq.s32.totalorder %s15, 0
    %p36 = por %p34, %p35
    %p37 = scmp.ne.s32.totalorder %s23, %s24
    %p38 = scmp.eq.s32.totalorder %s16, 1
    %p39 = por %p37, %p38
    %p41 = scmp.ne.s32.totalorder %s24, %s40
    %p42 = scmp.eq.s32.totalorder %s16, 0
    %p43 = por %p41, %p42
    %s45 = sadd.s32 %s44, 1
    %p48 = scmp.eq.s32.totalorder %s10, 1
    %p49 = scmp.ne.s32.totalorder %s44, %s46
    %p50 = scmp.eq.s32.totalorder %s10, 0
    %p51 = por %p49, %p50
    %p52 = scmp.ne.s32.totalorder %s44, %s46
    %p53 = scmp.eq.s32.totalorder %s15, 1
    %p54 = por %p52, %p53
    %p55 = scmp.ne.s32.totalorder %s46, %s47
    %p56 = scmp.eq.s32.totalorder %s15, 0
    %p57 = por %p55, %p56
    %p58 = scmp.ne.s32.totalorder %s46, %s47
    %p59 = scmp.eq.s32.totalorder %s16, 1
    %p60 = por %p58, %p59
    %p62 = scmp.ne.s32.totalorder %s47, %s61
    %p63 = scmp.eq.s32.totalorder %s16, 0
    %p64 = por %p62, %p63
    %s66 = sadd.s32 %s65, 1
    %p69 = scmp.eq.s32.totalorder %s10, 1
    %p70 = scmp.ne.s32.totalorder %s65, %s67
    %p71 = scmp.eq.s32.totalorder %s10, 0
    %p72 = por %p70, %p71
    %p73 = scmp.ne.s32.totalorder %s65, %s67
    %p74 = scmp.eq.s32.totalorder %s15, 1
    %p75 = por %p73, %p74
    %p76 = scmp.ne.s32.totalorder %s67, %s68
    %p77 = scmp.eq.s32.totalorder %s15, 0
    %p78 = por %p76, %p77
    %p79 = scmp.ne.s32.totalorder %s67, %s68
    %p80 = scmp.eq.s32.totalorder %s16, 1
    %p81 = por %p79, %p80
    %p83 = scmp.ne.s32.totalorder %s68, %s82
    %p84 = scmp.eq.s32.totalorder %s16, 0
    %p85 = por %p83, %p84
    %s87 = sadd.s32 %s86, 1
    %p90 = scmp.eq.s32.totalorder %s10, 1
    %p91 = scmp.ne.s32.totalorder %s86, %s88
    %p92 = scmp.eq.s32.totalorder %s10, 0
    %p93 = por %p91, %p92
    %p94 = scmp.ne.s32.totalorder %s86, %s88
    %p95 = scmp.eq.s32.totalorder %s15, 1
    %p96 = por %p94, %p95
    %p97 = scmp.ne.s32.totalorder %s88, %s89
    %p98 = scmp.eq.s32.totalorder %s15, 0
    %p99 = por %p97, %p98
    %p100 = scmp.ne.s32.totalorder %s88, %s89
    %p101 = scmp.eq.s32.totalorder %s16, 1
    %p102 = por %p100, %p101
    %p104 = scmp.ne.s32.totalorder %s89, %s103
    %p105 = scmp.eq.s32.totalorder %s16, 0
    %p106 = por %p104, %p105
    %s107 = ssub.s32 %s10, %s17
    %p108 = scmp.eq.s32.totalorder %s107, 0
    %s110 = sadd.s32 %s109, 1
    %s111 = scalar_select %p108, %s109, %s110
    %p114 = pneg %p108
    %p115 = scmp.eq.s32.totalorder %s10, 1
    %p116 = por %p114, %p115
    %p117 = scmp.ne.s32.totalorder %s109, %s112
    %p118 = scmp.eq.s32.totalorder %s10, 0
    %p119 = por %p117, %p118
    %p120 = scmp.ne.s32.totalorder %s109, %s112
    %p121 = scmp.eq.s32.totalorder %s15, 1
    %p122 = por %p120, %p121
    %p123 = scmp.ne.s32.totalorder %s112, %s113
    %p124 = scmp.eq.s32.totalorder %s15, 0
    %p125 = por %p123, %p124
    %p126 = scmp.ne.s32.totalorder %s112, %s113
    %p127 = scmp.eq.s32.totalorder %s16, 1
    %p128 = por %p126, %p127
    %p130 = scmp.ne.s32.totalorder %s113, %s129
    %p131 = scmp.eq.s32.totalorder %s16, 0
    %p132 = por %p130, %p131
    %p133 = scmp.le.s32.totalorder 1, %s10
    %p134 = scmp.lt.s32.totalorder %s10, 3
    %p135 = pnand %p133, %p134
    %p136 = pneg %p135
    // Predicated region
    $region9: #{vit_forward.1} parent=5 // pred_check
      _
    $region10: #{vit_forward.1} parent=5 // pred_check_branch
      %138 = sbr.rel (%p135) target = $region12
    $region11: #{vit_forward.1} parent=5 // pred_region
      %s139 = ssub.s32 %s10, 1
      // Predicated region
      $region13: #{vit_forward.1} parent=11 // pred_check
        %p140 = pneg %p57
      $region14: #{vit_forward.1} parent=11 // pred_check_branch
        %142 = sbr.rel (%p140) target = $region16
      $region15: #{vit_forward.1} parent=11 // pred_region
        _
      $region16: #{vit_forward.1} parent=11 // pred_fallthru
        _
      // Predicated region
      $region17: #{vit_forward.1} parent=11 // pred_check
        %p143 = pneg %p78
      $region18: #{vit_forward.1} parent=11 // pred_check_branch
        %145 = sbr.rel (%p143) target = $region20
      $region19: #{vit_forward.1} parent=11 // pred_region
        _
      $region20: #{vit_forward.1} parent=11 // pred_fallthru
        _
      // Predicated region
      $region21: #{vit_forward.1} parent=11 // pred_check
        %p146 = pneg %p99
      $region22: #{vit_forward.1} parent=11 // pred_check_branch
        %148 = sbr.rel (%p146) target = $region24
      $region23: #{vit_forward.1} parent=11 // pred_region
        _
      $region24: #{vit_forward.1} parent=11 // pred_fallthru
        _
    $region12: #{vit_forward.1} parent=5 // pred_fallthru
      _
    %p149 = scmp.lt.s32.totalorder %s10, 2
    // Predicated region
    $region25: #{vit_forward.1} parent=5 // pred_check
      %p150 = pneg %p149
    $region26: #{vit_forward.1} parent=5 // pred_check_branch
      %152 = sbr.rel (%p150) target = $region28
    $region27: #{vit_forward.1} parent=5 // pred_region
      // Predicated region
      $region29: #{vit_forward.1} parent=27 // pred_check
        %p153 = pneg %p30
      $region30: #{vit_forward.1} parent=27 // pred_check_branch
        %155 = sbr.rel (%p153) target = $region32
      $region31: #{vit_forward.1} parent=27 // pred_region
        %p156 = scmp.lt.s32.totalorder %s10, 1
        %s157 = scalar_select %p156, %s10, 1
        %s158 = smul.addr %s157, 2
        %s159 = smul.addr %s158, 8
        %s160 = scalar_lea.vmem %s0, %s159
      $region32: #{vit_forward.1} parent=27 // pred_fallthru
        _
    $region28: #{vit_forward.1} parent=5 // pred_fallthru
      _
    %p161 = scmp.le.s32.totalorder 1, %s10
    %p162 = scmp.lt.s32.totalorder %s10, 3
    %p163 = pnand %p161, %p162
    %p164 = pneg %p163
    // Predicated region
    $region33: #{vit_forward.1} parent=5 // pred_check
      _
    $region34: #{vit_forward.1} parent=5 // pred_check_branch
      %166 = sbr.rel (%p163) target = $region36
    $region35: #{vit_forward.1} parent=5 // pred_region
      %s167 = ssub.s32 %s10, 1
      %p168 = scmp.lt.s32.totalorder %s15, 1
      %s169 = scalar_select %p168, %s15, 1
      %s170 = smul.addr %s169, 2
      %s171 = smul.addr %s170, 8
      %s172 = scalar_lea.vmem %s0, %s171
      %p173 = pneg %p36
      %p174 = pneg %p33
      %p175 = pneg %p57
      %p176 = pneg %p54
      %p177 = pneg %p78
      %p178 = pneg %p75
      %p179 = pneg %p99
      %p180 = pneg %p96
      %p181 = pneg %p125
      %p182 = pneg %p122
      %p183 = scmp.lt.s32.totalorder %s15, 1
      %s184 = scalar_select %p183, %s15, 1
      %s185 = scalar_lea.vmem %s4, %s184
      %p186 = scmp.lt.s32.totalorder %s15, 1
      %s187 = scalar_select %p186, %s15, 1
      %s188 = smul.addr %s187, 2
      %s189 = smul.addr %s188, 8
      %s190 = scalar_lea.vmem %s0, %s189
      %p191 = scmp.lt.s32.totalorder %s15, 1
      %s192 = scalar_select %p191, %s15, 1
      %s193 = scalar_lea.vmem %s4, %s192
      %v195 = vld [vmem:[%s1] sm:$0xf]
      %v196 = vld [vmem:[%s1 + $0x4] sm:$0xf]
      %v197 = vld [vmem:[%s1 + $0x8] sm:$0xf]
      %v198 = vld [vmem:[%s1 + $0xc] sm:$0xf]
      %v199 = vld [vmem:[%s1 + $0x10] sm:$0xf]
      %v200 = vld [vmem:[%s1 + $0x14] sm:$0xf]
      %v201 = vld [vmem:[%s1 + $0x18] sm:$0xf]
      %v202 = vld [vmem:[%s1 + $0x1c] sm:$0xf]
      %v203 = vld [vmem:[%s1 + $0x20] sm:$0xf]
      %v204 = vld [vmem:[%s1 + $0x24] sm:$0xf]
      %v205 = vld [vmem:[%s3] sm:$0xff]
      %v206 = vld [vmem:[%s3 + $0x8] sm:$0xff]
      %v207 = vld [vmem:[%s3 + $0x10] sm:$0x1]
      %v208 = vld [vmem:[%s3 + $0x11] sm:$0x1]
      %v209 = vld [vmem:[%s3 + $0x12] sm:$0x1]
      %v210 = vld [vmem:[%s3 + $0x13] sm:$0x1]
      %v211 = vld [vmem:[%s190] sm:$0xff]
      %v212 = vld [vmem:[%s190 + $0x8] sm:$0xff]
      %v213 = vpack.c.bf16 %v212, %v211
      %v220 = vunpack.c.l.b16 %v195
      %v221 = vunpack.c.l.b16 %v196
      %v222 = vunpack.c.l.b16 %v197
      %v223 = vunpack.c.l.b16 %v198
      %v224 = vunpack.c.l.b16 %v199
      %v225 = vunpack.c.l.b16 %v200
      %v226 = vpack.c.b16 %v221, %v220
      %v227 = vpack.c.b16 %v223, %v222
      %v228 = vpack.c.b16 %v225, %v224
      %vm232 = vcmask 392192
      %v234 = vsel %vm232, %v213, 0
      %236 = vmatprep.subr.bf16.mxu0 0
      %237 = vmatpush1.bf16.msra.mxu0 %v226
      %238 = vmatprep.subr.bf16.mxu0 0
      %239 = vmatpush1.bf16.msra.mxu0 %v227
      %240 = vmatprep.subr.bf16.mxu0 0
      %241 = vmatpush1.bf16.msra.mxu0 %v228
      %242 = vmatprep.subr.bf16.mxu0 0
      %243 = vmatpush1.bf16.msra.mxu0 0
      %244 = vmatprep.subr.bf16.mxu0 0
      %245 = vmatpush1.bf16.msra.mxu0 0
      %246 = vmatprep.subr.bf16.mxu0 0
      %247 = vmatpush1.bf16.msra.mxu0 0
      %248 = vmatprep.subr.bf16.mxu0 0
      %249 = vmatpush1.bf16.msra.mxu0 0
      %250 = vmatprep.subr.bf16.mxu0 0
      %251 = vmatpush1.bf16.msra.mxu0 0
      %252 = vmatprep.subr.bf16.mxu0 0
      %253 = vmatpush1.bf16.msra.mxu0 0
      %254 = vmatprep.subr.bf16.mxu0 0
      %255 = vmatpush1.bf16.msra.mxu0 0
      %256 = vmatprep.subr.bf16.mxu0 0
      %257 = vmatpush1.bf16.msra.mxu0 0
      %258 = vmatprep.subr.bf16.mxu0 0
      %259 = vmatpush1.bf16.msra.mxu0 0
      %260 = vmatprep.subr.bf16.mxu0 0
      %261 = vmatpush1.bf16.msra.mxu0 0
      %262 = vmatprep.subr.bf16.mxu0 0
      %263 = vmatpush1.bf16.msra.mxu0 0
      %264 = vmatprep.subr.bf16.mxu0 0
      %265 = vmatpush1.bf16.msra.mxu0 0
      %266 = vmatprep.subr.bf16.mxu0 0
      %267 = vmatpush1.bf16.msra.mxu0 0
      %268 = vmatprep.mubr.bf16.mxu0 0
      %269 = vmatmul.mubr.bf16.gmra.mrb[0].mxu0 %v234
      %v270 = vpop.f32.mrb[0].mxu0
      %v271 = vadd.f32 0.0, %v270
      %v272 = vpop.f32.mrb[0].mxu0
      %v273 = vpop.f32.mrb[0].mxu0
      %v274 = vadd.f32 0.0, %v273
      %v275 = vpop.f32.mrb[0].mxu0
      %276 = vdwg.mxu0
      %vm279 = vcmask 1040384
      %v280 = vrot.slane %v271, 7
      %v281 = vrot.slane %v274, 7
      %v282 = vsel %vm279, %v280, %v281
      %v286 = vsel %vm279, 0.0, %v280
      %v287 = vadd.f32 %v286, %v205
      %v288 = vadd.f32 %v282, %v206
      %v289 = vadd.f32 %v281, %v207
      %v290 = vld [vmem:[%s2] sm:$0xf]
      %v291 = vld [vmem:[%s2 + $0x4] sm:$0xf]
      %v292 = vld [vmem:[%s2 + $0x8] sm:$0xf]
      %v293 = vld [vmem:[%s2 + $0xc] sm:$0xf]
      %v294 = vld [vmem:[%s2 + $0x10] sm:$0xf]
      %v295 = vld [vmem:[%s2 + $0x14] sm:$0xf]
      %v296 = vld [vmem:[%s2 + $0x18] sm:$0xf]
      %v297 = vld [vmem:[%s2 + $0x1c] sm:$0xf]
      %v298 = vld [vmem:[%s2 + $0x20] sm:$0xf]
      %v299 = vld [vmem:[%s2 + $0x24] sm:$0xf]
      %v300 = vld [vmem:[%s2 + $0x28] sm:$0xf]
      %v301 = vld [vmem:[%s2 + $0x2c] sm:$0xf]
      %v302 = vld [vmem:[%s2 + $0x30] sm:$0xf]
      %v303 = vld [vmem:[%s2 + $0x34] sm:$0xf]
      %v304 = vld [vmem:[%s2 + $0x38] sm:$0xf]
      %v305 = vld [vmem:[%s2 + $0x3c] sm:$0xf]
      %v306 = vld [vmem:[%s2 + $0x40] sm:$0xf]
      %v307 = vld [vmem:[%s2 + $0x44] sm:$0xf]
      %v308 = vld [vmem:[%s2 + $0x48] sm:$0xf]
      %v309 = vld [vmem:[%s2 + $0x4c] sm:$0xf]
      %v310 = vld [vmem:[%s2 + $0x50] sm:$0xf]
      %v311 = vld [vmem:[%s2 + $0x54] sm:$0xf]
      %v312 = vld [vmem:[%s2 + $0x58] sm:$0xf]
      %v313 = vld [vmem:[%s2 + $0x5c] sm:$0xf]
      %v314 = vld [vmem:[%s2 + $0x60] sm:$0xf]
      %v315 = vld [vmem:[%s2 + $0x64] sm:$0xf]
      %v316 = vld [vmem:[%s2 + $0x68] sm:$0xf]
      %v317 = vld [vmem:[%s2 + $0x6c] sm:$0xf]
      %v318 = vld [vmem:[%s3 + $0x14] sm:$0xff]
      %vm319 = vcmask 261120
      %v320 = vsel %vm319, %v287, 0.0
      %321 = vadd.xlane.f32.xlu0 %v320
      %v322 = vpop.xlane.xlu0 %321
      %v323 = vsel %vm319, %v288, 0.0
      %324 = vadd.xlane.f32.xlu0 %v323
      %v325 = vpop.xlane.xlu0 %324
      %vm326 = vcmask 253952
      %v327 = vsel %vm326, %v289, 0.0
      %328 = vadd.xlane.f32.xlu0 %v327
      %v329 = vpop.xlane.xlu0 %328
      %v330 = vrcp.pop 32.0
      %v331 = vmul.f32 %v322, %v330
      %v332 = vmul.f32 %v325, %v330
      %v333 = vmul.f32 %v329, %v330
      %v334 = vsub.f32 %v287, %v331
      %v335 = vsub.f32 %v288, %v332
      %v336 = vsub.f32 %v289, %v333
      %v337 = vmul.f32 %v334, %v334
      %v338 = vmul.f32 %v335, %v335
      %v339 = vmul.f32 %v336, %v336
      %v340 = vsel %vm319, %v337, 0.0
      %341 = vadd.xlane.f32.xlu0 %v340
      %v342 = vpop.xlane.xlu0 %341
      %v343 = vsel %vm319, %v338, 0.0
      %344 = vadd.xlane.f32.xlu0 %v343
      %v345 = vpop.xlane.xlu0 %344
      %v346 = vsel %vm326, %v339, 0.0
      %347 = vadd.xlane.f32.xlu0 %v346
      %v348 = vpop.xlane.xlu0 %347
      %v349 = vmul.f32 %v342, %v330
      %v350 = vmul.f32 %v345, %v330
      %v351 = vmul.f32 %v348, %v330
      %v352 = vadd.f32 %v349, 1e-12
      %v353 = vadd.f32 %v350, 1e-12
      %v354 = vadd.f32 %v351, 1e-12
      %v355 = vrsqrt.pop %v352
      %v356 = vrsqrt.pop %v353
      %v357 = vrsqrt.pop %v354
      %v358 = vmul.f32 %v334, %v355
      %v359 = vmul.f32 %v335, %v356
      %v360 = vmul.f32 %v336, %v357
      %v361 = vlaneseq
      %v362 = vshrl.u32 %v361, 7
      %v363 = vsub.s32 0, %v362
      %v364 = vrot.slane %v318, %v363
      %v365 = vmul.f32 %v358, %v364
      %v366 = vmul.f32 %v359, %v364
      %v367 = vmul.f32 %v360, %v364
      %v368 = vlaneseq
      %v369 = vshrl.u32 %v368, 7
      %v370 = vsub.s32 1, %v369
      %v371 = vrot.slane %v318, %v370
      %v372 = vadd.f32 %v365, %v371
      %v373 = vadd.f32 %v366, %v371
      %v374 = vadd.f32 %v367, %v371
      %v375 = vpack.c.bf16 %v373, %v372
      %v376 = vpack.c.bf16 %v374, %v374
      %v377 = vlaneseq
      %v378 = vshrl.u32 %v377, 7
      %v379 = vsub.s32 2, %v378
      %v380 = vrot.slane %v318, %v379
      %v385 = vunpack.c.l.b16 %v290
      %v386 = vunpack.c.l.b16 %v291
      %v387 = vunpack.c.l.b16 %v292
      %v388 = vunpack.c.l.b16 %v293
      %v389 = vpack.c.b16 %v386, %v385
      %v390 = vpack.c.b16 %v388, %v387
      %v394 = vsel %vm319, %v375, 0
      %v397 = vsel %vm319, %v376, 0
      %399 = vmatprep.subr.bf16.mxu0 0
      %400 = vmatpush1.bf16.msra.mxu0 %v389
      %401 = vmatprep.subr.bf16.mxu0 0
      %402 = vmatpush1.bf16.msra.mxu0 %v390
      %403 = vmatprep.subr.bf16.mxu0 0
      %404 = vmatpush1.bf16.msra.mxu0 0
      %405 = vmatprep.subr.bf16.mxu0 0
      %406 = vmatpush1.bf16.msra.mxu0 0
      %407 = vmatprep.subr.bf16.mxu0 0
      %408 = vmatpush1.bf16.msra.mxu0 0
      %409 = vmatprep.subr.bf16.mxu0 0
      %410 = vmatpush1.bf16.msra.mxu0 0
      %411 = vmatprep.subr.bf16.mxu0 0
      %412 = vmatpush1.bf16.msra.mxu0 0
      %413 = vmatprep.subr.bf16.mxu0 0
      %414 = vmatpush1.bf16.msra.mxu0 0
      %415 = vmatprep.subr.bf16.mxu0 0
      %416 = vmatpush1.bf16.msra.mxu0 0
      %417 = vmatprep.subr.bf16.mxu0 0
      %418 = vmatpush1.bf16.msra.mxu0 0
      %419 = vmatprep.subr.bf16.mxu0 0
      %420 = vmatpush1.bf16.msra.mxu0 0
      %421 = vmatprep.subr.bf16.mxu0 0
      %422 = vmatpush1.bf16.msra.mxu0 0
      %423 = vmatprep.subr.bf16.mxu0 0
      %424 = vmatpush1.bf16.msra.mxu0 0
      %425 = vmatprep.subr.bf16.mxu0 0
      %426 = vmatpush1.bf16.msra.mxu0 0
      %427 = vmatprep.subr.bf16.mxu0 0
      %428 = vmatpush1.bf16.msra.mxu0 0
      %429 = vmatprep.subr.bf16.mxu0 0
      %430 = vmatpush1.bf16.msra.mxu0 0
      %431 = vmatprep.mubr.bf16.mxu0 0
      %432 = vmatmul.mubr.bf16.gmra.mrb[0].mxu0 %v394
      %v433 = vpop.f32.mrb[0].mxu0
      %v434 = vadd.f32 %v380, %v433
      %v435 = vpop.f32.mrb[0].mxu0
      %v436 = vpop.f32.mrb[0].mxu0
      %v437 = vadd.f32 %v380, %v436
      %v438 = vpop.f32.mrb[0].mxu0
      %439 = vmatprep.mubr.bf16.mxu0 0
      %440 = vmatmul.mubr.bf16.gmra.mrb[0].mxu0 %v397
      %v441 = vpop.f32.mrb[0].mxu0
      %v442 = vadd.f32 %v380, %v441
      %v443 = vpop.f32.mrb[0].mxu0
      %v444 = vpop.f32.mrb[0].mxu0
      %v445 = vpop.f32.mrb[0].mxu0
      %446 = vdwg.mxu0
      %450 = vrot.lane.b32.xlu0 %v434, 96
      %v451 = vpop.permute.xlu0 %450
      %452 = vrot.lane.b32.xlu0 %v437, 96
      %v453 = vpop.permute.xlu0 %452
      %454 = vrot.lane.b32.xlu0 %v442, 96
      %v455 = vpop.permute.xlu0 %454
      %vm456 = vcmask 130048
      %v457 = vsel %vm456, %v434, 0
      %v459 = vsel %vm456, %v437, 0
      %v461 = vsel %vm456, %v442, 0
      %v463 = vsel %vm456, %v451, 0
      %v465 = vsel %vm456, %v453, 0
      %v467 = vsel %vm456, %v455, 0
      %469 = vmatprep.subr.mxu0 0.0
      %470 = vmatpush1.xpose.msra.mxu0 %v463
      %471 = vmatprep.subr.mxu0 0.0
      %472 = vmatpush1.xpose.msra.mxu0 %v465
      %473 = vmatprep.subr.mxu0 0.0
      %474 = vmatpush1.xpose.msra.mxu0 %v467
      %475 = vmatprep.subr.mxu0 0.0
      %476 = vmatpush1.xpose.msra.mxu0 0.0
      %477 = vmatprep.subr.mxu0 0.0
      %478 = vmatpush1.xpose.msra.mxu0 0.0
      %479 = vmatprep.subr.mxu0 0.0
      %480 = vmatpush1.xpose.msra.mxu0 0.0
      %481 = vmatprep.subr.mxu0 0.0
      %482 = vmatpush1.xpose.msra.mxu0 0.0
      %483 = vmatprep.subr.mxu0 0.0
      %484 = vmatpush1.xpose.msra.mxu0 0.0
      %485 = vmatprep.subr.mxu0 0.0
      %486 = vmatpush1.xpose.msra.mxu0 0.0
      %487 = vmatprep.subr.mxu0 0.0
      %488 = vmatpush1.xpose.msra.mxu0 0.0
      %489 = vmatprep.subr.mxu0 0.0
      %490 = vmatpush1.xpose.msra.mxu0 0.0
      %491 = vmatprep.subr.mxu0 0.0
      %492 = vmatpush1.xpose.msra.mxu0 0.0
      %493 = vmatprep.subr.mxu0 0.0
      %494 = vmatpush1.xpose.msra.mxu0 0.0
      %495 = vmatprep.subr.mxu0 0.0
      %496 = vmatpush1.xpose.msra.mxu0 0.0
      %497 = vmatprep.subr.mxu0 0.0
      %498 = vmatpush1.xpose.msra.mxu0 0.0
      %499 = vmatprep.subr.mxu0 0.0
      %500 = vmatpush1.xpose.msra.mxu0 0.0
      %501 = vmatprep.subr.mxu0 0.0
      %502 = vmatpush1.xpose.msra.mxu0 0.0
      %503 = vmatprep.subr.mxu0 0.0
      %504 = vmatpush1.xpose.msra.mxu0 0.0
      %505 = vmatprep.subr.mxu0 0.0
      %506 = vmatpush1.xpose.msra.mxu0 0.0
      %507 = vmatprep.subr.mxu0 0.0
      %508 = vmatpush1.xpose.msra.mxu0 0.0
      %509 = vmatprep.subr.mxu0 0.0
      %510 = vmatpush1.xpose.msra.mxu0 0.0
      %511 = vmatprep.subr.mxu0 0.0
      %512 = vmatpush1.xpose.msra.mxu0 0.0
      %513 = vmatprep.subr.mxu0 0.0
      %514 = vmatpush1.xpose.msra.mxu0 0.0
      %515 = vmatprep.subr.mxu0 0.0
      %516 = vmatpush1.xpose.msra.mxu0 0.0
      %517 = vmatprep.subr.mxu0 0.0
      %518 = vmatpush1.xpose.msra.mxu0 0.0
      %519 = vmatprep.subr.mxu0 0.0
      %520 = vmatpush1.xpose.msra.mxu0 0.0
      %521 = vmatprep.subr.mxu0 0.0
      %522 = vmatpush1.xpose.msra.mxu0 0.0
      %523 = vmatprep.subr.mxu0 0.0
      %524 = vmatpush1.xpose.msra.mxu0 0.0
      %525 = vmatprep.subr.mxu0 0.0
      %526 = vmatpush1.xpose.msra.mxu0 0.0
      %527 = vmatprep.subr.mxu0 0.0
      %528 = vmatpush1.xpose.msra.mxu0 0.0
      %529 = vmatprep.subr.mxu0 0.0
      %530 = vmatpush1.xpose.msra.mxu0 0.0
      %531 = vmatprep.subr.mxu0 0.0
      %532 = vmatpush1.xpose.msra.mxu0 0.0
      %533 = vmatprep.mubr.f32.mxu0 0.0
      %534 = vmatmul.mubr.f32.gmra.mrb[0].mxu0 %v457
      %v535 = vpop.f32.mrb[0].mxu0
      %v536 = vadd.f32 0.0, %v535
      %v537 = vpop.f32.mrb[0].mxu0
      %538 = vmatprep.mubr.f32.mxu0 0.0
      %539 = vmatmul.mubr.f32.gmra.mrb[0].mxu0 %v459
      %v540 = vpop.f32.mrb[0].mxu0
      %v541 = vadd.f32 0.0, %v540
      %v542 = vpop.f32.mrb[0].mxu0
      %543 = vmatprep.mubr.f32.mxu0 0.0
      %544 = vmatmul.mubr.f32.gmra.mrb[0].mxu0 %v461
      %v545 = vpop.f32.mrb[0].mxu0
      %v546 = vadd.f32 0.0, %v545
      %v547 = vpop.f32.mrb[0].mxu0
      %548 = vdwg.mxu0
      %v549 = vmul.f32 %v536, 0.25
      %v550 = vmul.f32 %v541, 0.25
      %v551 = vmul.f32 %v546, 0.25
      %vm552 = vcmask 138240
      %v553 = vsel %vm552, %v549, -inf
      %554 = vmax.xlane.f32.xlu0 %v553
      %v555 = vpop.xlane.xlu0 %554
      %v556 = vsel %vm552, %v550, -inf
      %557 = vmax.xlane.f32.xlu0 %v556
      %v558 = vpop.xlane.xlu0 %557
      %vm559 = vcmask 131072
      %v560 = vsel %vm559, %v551, -inf
      %561 = vmax.xlane.f32.xlu0 %v560
      %v562 = vpop.xlane.xlu0 %561
      %v563 = vsub.f32 %v549, %v555
      %v564 = vsub.f32 %v550, %v558
      %v565 = vsub.f32 %v551, %v562
      %v566 = vmul.f32 %v563, 1.442695
      %v567 = vpow.pop %v566
      %v568 = vmul.f32 %v564, 1.442695
      %v569 = vpow.pop %v568
      %v570 = vmul.f32 %v565, 1.442695
      %v571 = vpow.pop %v570
      %v572 = vsel %vm552, %v567, 0.0
      %573 = vadd.xlane.f32.xlu0 %v572
      %v574 = vpop.xlane.xlu0 %573
      %v575 = vsel %vm552, %v569, 0.0
      %576 = vadd.xlane.f32.xlu0 %v575
      %v577 = vpop.xlane.xlu0 %576
      %v578 = vsel %vm559, %v571, 0.0
      %579 = vadd.xlane.f32.xlu0 %v578
      %v580 = vpop.xlane.xlu0 %579
      %v581 = vrcp.pop %v574
      %v582 = vrcp.pop %v577
      %v583 = vrcp.pop %v580
      %v584 = vmul.f32 %v567, %v581
      %v585 = vmul.f32 %v569, %v582
      %v586 = vmul.f32 %v571, %v583
      %587 = vrot.lane.b32.xlu0 %v434, 64
      %v588 = vpop.permute.xlu0 %587
      %589 = vrot.lane.b32.xlu0 %v437, 64
      %v590 = vpop.permute.xlu0 %589
      %591 = vrot.lane.b32.xlu0 %v442, 64
      %v592 = vpop.permute.xlu0 %591
      %v596 = vsel %vm552, %v584, 0
      %v599 = vsel %vm552, %v585, 0
      %v602 = vsel %vm552, %v586, 0
      %v604 = vsel %vm279, %v592, 0
      %606 = vmatprep.subr.mxu0 0.0
      %607 = vmatpush1.msra.mxu0 %v588
      %608 = vmatprep.subr.mxu0 0.0
      %609 = vmatpush1.msra.mxu0 %v590
      %610 = vmatprep.subr.mxu0 0.0
      %611 = vmatpush1.msra.mxu0 %v604
      %612 = vmatprep.subr.mxu0 0.0
      %613 = vmatpush1.msra.mxu0 0.0
      %614 = vmatprep.subr.mxu0 0.0
      %615 = vmatpush1.msra.mxu0 0.0
      %616 = vmatprep.subr.mxu0 0.0
      %617 = vmatpush1.msra.mxu0 0.0
      %618 = vmatprep.subr.mxu0 0.0
      %619 = vmatpush1.msra.mxu0 0.0
      %620 = vmatprep.subr.mxu0 0.0
      %621 = vmatpush1.msra.mxu0 0.0
      %622 = vmatprep.subr.mxu0 0.0
      %623 = vmatpush1.msra.mxu0 0.0
      %624 = vmatprep.subr.mxu0 0.0
      %625 = vmatpush1.msra.mxu0 0.0
      %626 = vmatprep.subr.mxu0 0.0
      %627 = vmatpush1.msra.mxu0 0.0
      %628 = vmatprep.subr.mxu0 0.0
      %629 = vmatpush1.msra.mxu0 0.0
      %630 = vmatprep.subr.mxu0 0.0
      %631 = vmatpush1.msra.mxu0 0.0
      %632 = vmatprep.subr.mxu0 0.0
      %633 = vmatpush1.msra.mxu0 0.0
      %634 = vmatprep.subr.mxu0 0.0
      %635 = vmatpush1.msra.mxu0 0.0
      %636 = vmatprep.subr.mxu0 0.0
      %637 = vmatpush1.msra.mxu0 0.0
      %638 = vmatprep.subr.mxu0 0.0
      %639 = vmatpush1.msra.mxu0 0.0
      %640 = vmatprep.subr.mxu0 0.0
      %641 = vmatpush1.msra.mxu0 0.0
      %642 = vmatprep.subr.mxu0 0.0
      %643 = vmatpush1.msra.mxu0 0.0
      %644 = vmatprep.subr.mxu0 0.0
      %645 = vmatpush1.msra.mxu0 0.0
      %646 = vmatprep.subr.mxu0 0.0
      %647 = vmatpush1.msra.mxu0 0.0
      %648 = vmatprep.subr.mxu0 0.0
      %649 = vmatpush1.msra.mxu0 0.0
      %650 = vmatprep.subr.mxu0 0.0
      %651 = vmatpush1.msra.mxu0 0.0
      %652 = vmatprep.subr.mxu0 0.0
      %653 = vmatpush1.msra.mxu0 0.0
      %654 = vmatprep.subr.mxu0 0.0
      %655 = vmatpush1.msra.mxu0 0.0
      %656 = vmatprep.subr.mxu0 0.0
      %657 = vmatpush1.msra.mxu0 0.0
      %658 = vmatprep.subr.mxu0 0.0
      %659 = vmatpush1.msra.mxu0 0.0
      %660 = vmatprep.subr.mxu0 0.0
      %661 = vmatpush1.msra.mxu0 0.0
      %662 = vmatprep.subr.mxu0 0.0
      %663 = vmatpush1.msra.mxu0 0.0
      %664 = vmatprep.subr.mxu0 0.0
      %665 = vmatpush1.msra.mxu0 0.0
      %666 = vmatprep.subr.mxu0 0.0
      %667 = vmatpush1.msra.mxu0 0.0
      %668 = vmatprep.subr.mxu0 0.0
      %669 = vmatpush1.msra.mxu0 0.0
      %670 = vmatprep.mubr.f32.mxu0 0.0
      %671 = vmatmul.mubr.f32.gmra.mrb[0].mxu0 %v596
      %v672 = vpop.f32.mrb[0].mxu0
      %v673 = vadd.f32 0.0, %v672
      %v674 = vpop.f32.mrb[0].mxu0
      %675 = vmatprep.mubr.f32.mxu0 0.0
      %676 = vmatmul.mubr.f32.gmra.mrb[0].mxu0 %v599
      %v677 = vpop.f32.mrb[0].mxu0
      %v678 = vadd.f32 0.0, %v677
      %v679 = vpop.f32.mrb[0].mxu0
      %680 = vmatprep.mubr.f32.mxu0 0.0
      %681 = vmatmul.mubr.f32.gmra.mrb[0].mxu0 %v602
      %v682 = vpop.f32.mrb[0].mxu0
      %v683 = vadd.f32 0.0, %v682
      %v684 = vpop.f32.mrb[0].mxu0
      %685 = vdwg.mxu0
      %686 = vrot.lane.b32.xlu0 %v434, 112
      %v687 = vpop.permute.xlu0 %686
      %688 = vrot.lane.b32.xlu0 %v437, 112
      %v689 = vpop.permute.xlu0 %688
      %690 = vrot.lane.b32.xlu0 %v442, 112
      %v691 = vpop.permute.xlu0 %690
      %692 = vrot.lane.b32.xlu0 %v434, 80
      %v693 = vpop.permute.xlu0 %692
      %694 = vrot.lane.b32.xlu0 %v437, 80
      %v695 = vpop.permute.xlu0 %694
      %696 = vrot.lane.b32.xlu0 %v442, 80
      %v697 = vpop.permute.xlu0 %696
      %v698 = vsel %vm456, %v687, 0
      %v700 = vsel %vm456, %v689, 0
      %v702 = vsel %vm456, %v691, 0
      %v704 = vsel %vm456, %v693, 0
      %v706 = vsel %vm456, %v695, 0
      %v708 = vsel %vm456, %v697, 0
      %710 = vmatprep.subr.mxu0 0.0
      %711 = vmatpush1.xpose.msra.mxu0 %v704
      %712 = vmatprep.subr.mxu0 0.0
      %713 = vmatpush1.xpose.msra.mxu0 %v706
      %714 = vmatprep.subr.mxu0 0.0
      %715 = vmatpush1.xpose.msra.mxu0 %v708
      %716 = vmatprep.subr.mxu0 0.0
      %717 = vmatpush1.xpose.msra.mxu0 0.0
      %718 = vmatprep.subr.mxu0 0.0
      %719 = vmatpush1.xpose.msra.mxu0 0.0
      %720 = vmatprep.subr.mxu0 0.0
      %721 = vmatpush1.xpose.msra.mxu0 0.0
      %722 = vmatprep.subr.mxu0 0.0
      %723 = vmatpush1.xpose.msra.mxu0 0.0
      %724 = vmatprep.subr.mxu0 0.0
      %725 = vmatpush1.xpose.msra.mxu0 0.0
      %726 = vmatprep.subr.mxu0 0.0
      %727 = vmatpush1.xpose.msra.mxu0 0.0
      %728 = vmatprep.subr.mxu0 0.0
      %729 = vmatpush1.xpose.msra.mxu0 0.0
      %730 = vmatprep.subr.mxu0 0.0
      %731 = vmatpush1.xpose.msra.mxu0 0.0
      %732 = vmatprep.subr.mxu0 0.0
      %733 = vmatpush1.xpose.msra.mxu0 0.0
      %734 = vmatprep.subr.mxu0 0.0
      %735 = vmatpush1.xpose.msra.mxu0 0.0
      %736 = vmatprep.subr.mxu0 0.0
      %737 = vmatpush1.xpose.msra.mxu0 0.0
      %738 = vmatprep.subr.mxu0 0.0
      %739 = vmatpush1.xpose.msra.mxu0 0.0
      %740 = vmatprep.subr.mxu0 0.0
      %741 = vmatpush1.xpose.msra.mxu0 0.0
      %742 = vmatprep.subr.mxu0 0.0
      %743 = vmatpush1.xpose.msra.mxu0 0.0
      %744 = vmatprep.subr.mxu0 0.0
      %745 = vmatpush1.xpose.msra.mxu0 0.0
      %746 = vmatprep.subr.mxu0 0.0
      %747 = vmatpush1.xpose.msra.mxu0 0.0
      %748 = vmatprep.subr.mxu0 0.0
      %749 = vmatpush1.xpose.msra.mxu0 0.0
      %750 = vmatprep.subr.mxu0 0.0
      %751 = vmatpush1.xpose.msra.mxu0 0.0
      %752 = vmatprep.subr.mxu0 0.0
      %753 = vmatpush1.xpose.msra.mxu0 0.0
      %754 = vmatprep.subr.mxu0 0.0
      %755 = vmatpush1.xpose.msra.mxu0 0.0
      %756 = vmatprep.subr.mxu0 0.0
      %757 = vmatpush1.xpose.msra.mxu0 0.0
      %758 = vmatprep.subr.mxu0 0.0
      %759 = vmatpush1.xpose.msra.mxu0 0.0
      %760 = vmatprep.subr.mxu0 0.0
      %761 = vmatpush1.xpose.msra.mxu0 0.0
      %762 = vmatprep.subr.mxu0 0.0
      %763 = vmatpush1.xpose.msra.mxu0 0.0
      %764 = vmatprep.subr.mxu0 0.0
      %765 = vmatpush1.xpose.msra.mxu0 0.0
      %766 = vmatprep.subr.mxu0 0.0
      %767 = vmatpush1.xpose.msra.mxu0 0.0
      %768 = vmatprep.subr.mxu0 0.0
      %769 = vmatpush1.xpose.msra.mxu0 0.0
      %770 = vmatprep.subr.mxu0 0.0
      %771 = vmatpush1.xpose.msra.mxu0 0.0
      %772 = vmatprep.subr.mxu0 0.0
      %773 = vmatpush1.xpose.msra.mxu0 0.0
      %774 = vmatprep.mubr.f32.mxu0 0.0
      %775 = vmatmul.mubr.f32.gmra.mrb[0].mxu0 %v698
      %v776 = vpop.f32.mrb[0].mxu0
      %v777 = vadd.f32 0.0, %v776
      %v778 = vpop.f32.mrb[0].mxu0
      %779 = vmatprep.mubr.f32.mxu0 0.0
      %780 = vmatmul.mubr.f32.gmra.mrb[0].mxu0 %v700
      %v781 = vpop.f32.mrb[0].mxu0
      %v782 = vadd.f32 0.0, %v781
      %v783 = vpop.f32.mrb[0].mxu0
      %784 = vmatprep.mubr.f32.mxu0 0.0
      %785 = vmatmul.mubr.f32.gmra.mrb[0].mxu0 %v702
      %v786 = vpop.f32.mrb[0].mxu0
      %v787 = vadd.f32 0.0, %v786
      %v788 = vpop.f32.mrb[0].mxu0
      %789 = vdwg.mxu0
      %v790 = vmul.f32 %v777, 0.25
      %v791 = vmul.f32 %v782, 0.25
      %v792 = vmul.f32 %v787, 0.25
      %v793 = vsel %vm552, %v790, -inf
      %794 = vmax.xlane.f32.xlu0 %v793
      %v795 = vpop.xlane.xlu0 %794
      %v796 = vsel %vm552, %v791, -inf
      %797 = vmax.xlane.f32.xlu0 %v796
      %v798 = vpop.xlane.xlu0 %797
      %v799 = vsel %vm559, %v792, -inf
      %800 = vmax.xlane.f32.xlu0 %v799
      %v801 = vpop.xlane.xlu0 %800
      %v802 = vsub.f32 %v790, %v795
      %v803 = vsub.f32 %v791, %v798
      %v804 = vsub.f32 %v792, %v801
      %v805 = vmul.f32 %v802, 1.442695
      %v806 = vpow.pop %v805
      %v807 = vmul.f32 %v803, 1.442695
      %v808 = vpow.pop %v807
      %v809 = vmul.f32 %v804, 1.442695
      %v810 = vpow.pop %v809
      %v811 = vsel %vm552, %v806, 0.0
      %812 = vadd.xlane.f32.xlu0 %v811
      %v813 = vpop.xlane.xlu0 %812
      %v814 = vsel %vm552, %v808, 0.0
      %815 = vadd.xlane.f32.xlu0 %v814
      %v816 = vpop.xlane.xlu0 %815
      %v817 = vsel %vm559, %v810, 0.0
      %818 = vadd.xlane.f32.xlu0 %v817
      %v819 = vpop.xlane.xlu0 %818
      %v820 = vrcp.pop %v813
      %v821 = vrcp.pop %v816
      %v822 = vrcp.pop %v819
      %v823 = vmul.f32 %v806, %v820
      %v824 = vmul.f32 %v808, %v821
      %v825 = vmul.f32 %v810, %v822
      %826 = vrot.lane.b32.xlu0 %v434, 48
      %v827 = vpop.permute.xlu0 %826
      %828 = vrot.lane.b32.xlu0 %v437, 48
      %v829 = vpop.permute.xlu0 %828
      %830 = vrot.lane.b32.xlu0 %v442, 48
      %v831 = vpop.permute.xlu0 %830
      %v835 = vsel %vm552, %v823, 0
      %v838 = vsel %vm552, %v824, 0
      %v841 = vsel %vm552, %v825, 0
      %v843 = vsel %vm279, %v831, 0
      %845 = vmatprep.subr.mxu0 0.0
      %846 = vmatpush1.msra.mxu0 %v827
      %847 = vmatprep.subr.mxu0 0.0
      %848 = vmatpush1.msra.mxu0 %v829
      %849 = vmatprep.subr.mxu0 0.0
      %850 = vmatpush1.msra.mxu0 %v843
      %851 = vmatprep.subr.mxu0 0.0
      %852 = vmatpush1.msra.mxu0 0.0
      %853 = vmatprep.subr.mxu0 0.0
      %854 = vmatpush1.msra.mxu0 0.0
      %855 = vmatprep.subr.mxu0 0.0
      %856 = vmatpush1.msra.mxu0 0.0
      %857 = vmatprep.subr.mxu0 0.0
      %858 = vmatpush1.msra.mxu0 0.0
      %859 = vmatprep.subr.mxu0 0.0
      %860 = vmatpush1.msra.mxu0 0.0
      %861 = vmatprep.subr.mxu0 0.0
      %862 = vmatpush1.msra.mxu0 0.0
      %863 = vmatprep.subr.mxu0 0.0
      %864 = vmatpush1.msra.mxu0 0.0
      %865 = vmatprep.subr.mxu0 0.0
      %866 = vmatpush1.msra.mxu0 0.0
      %867 = vmatprep.subr.mxu0 0.0
      %868 = vmatpush1.msra.mxu0 0.0
      %869 = vmatprep.subr.mxu0 0.0
      %870 = vmatpush1.msra.mxu0 0.0
      %871 = vmatprep.subr.mxu0 0.0
      %872 = vmatpush1.msra.mxu0 0.0
      %873 = vmatprep.subr.mxu0 0.0
      %874 = vmatpush1.msra.mxu0 0.0
      %875 = vmatprep.subr.mxu0 0.0
      %876 = vmatpush1.msra.mxu0 0.0
      %877 = vmatprep.subr.mxu0 0.0
      %878 = vmatpush1.msra.mxu0 0.0
      %879 = vmatprep.subr.mxu0 0.0
      %880 = vmatpush1.msra.mxu0 0.0
      %881 = vmatprep.subr.mxu0 0.0
      %882 = vmatpush1.msra.mxu0 0.0
      %883 = vmatprep.subr.mxu0 0.0
      %884 = vmatpush1.msra.mxu0 0.0
      %885 = vmatprep.subr.mxu0 0.0
      %886 = vmatpush1.msra.mxu0 0.0
      %887 = vmatprep.subr.mxu0 0.0
      %888 = vmatpush1.msra.mxu0 0.0
      %889 = vmatprep.subr.mxu0 0.0
      %890 = vmatpush1.msra.mxu0 0.0
      %891 = vmatprep.subr.mxu0 0.0
      %892 = vmatpush1.msra.mxu0 0.0
      %893 = vmatprep.subr.mxu0 0.0
      %894 = vmatpush1.msra.mxu0 0.0
      %895 = vmatprep.subr.mxu0 0.0
      %896 = vmatpush1.msra.mxu0 0.0
      %897 = vmatprep.subr.mxu0 0.0
      %898 = vmatpush1.msra.mxu0 0.0
      %899 = vmatprep.subr.mxu0 0.0
      %900 = vmatpush1.msra.mxu0 0.0
      %901 = vmatprep.subr.mxu0 0.0
      %902 = vmatpush1.msra.mxu0 0.0
      %903 = vmatprep.subr.mxu0 0.0
      %904 = vmatpush1.msra.mxu0 0.0
      %905 = vmatprep.subr.mxu0 0.0
      %906 = vmatpush1.msra.mxu0 0.0
      %907 = vmatprep.subr.mxu0 0.0
      %908 = vmatpush1.msra.mxu0 0.0
      %909 = vmatprep.mubr.f32.mxu0 0.0
      %910 = vmatmul.mubr.f32.gmra.mrb[0].mxu0 %v835
      %v911 = vpop.f32.mrb[0].mxu0
      %v912 = vadd.f32 0.0, %v911
      %v913 = vpop.f32.mrb[0].mxu0
      %914 = vmatprep.mubr.f32.mxu0 0.0
      %915 = vmatmul.mubr.f32.gmra.mrb[0].mxu0 %v838
      %v916 = vpop.f32.mrb[0].mxu0
      %v917 = vadd.f32 0.0, %v916
      %v918 = vpop.f32.mrb[0].mxu0
      %919 = vmatprep.mubr.f32.mxu0 0.0
      %920 = vmatmul.mubr.f32.gmra.mrb[0].mxu0 %v841
      %v921 = vpop.f32.mrb[0].mxu0
      %v922 = vadd.f32 0.0, %v921
      %v923 = vpop.f32.mrb[0].mxu0
      %924 = vdwg.mxu0
      %928 = vrot.lane.b32.xlu0 %v912, 16
      %v929 = vpop.permute.xlu0 %928
      %930 = vrot.lane.b32.xlu0 %v917, 16
      %v931 = vpop.permute.xlu0 %930
      %932 = vrot.lane.b32.xlu0 %v922, 16
      %v933 = vpop.permute.xlu0 %932
      %v937 = vsel %vm456, %v673, %v929
      %v938 = vsel %vm456, %v678, %v931
      %v939 = vsel %vm456, %v683, %v933
      %v940 = vpack.c.bf16 %v938, %v937
      %v941 = vpack.c.bf16 %v939, %v939
      %v946 = vunpack.c.l.b16 %v294
      %v947 = vunpack.c.l.b16 %v295
      %v948 = vunpack.c.l.b16 %v296
      %v949 = vunpack.c.l.b16 %v297
      %v950 = vpack.c.b16 %v947, %v946
      %v951 = vpack.c.b16 %v949, %v948
      %v955 = vsel %vm319, %v940, 0
      %v958 = vsel %vm319, %v941, 0
      %960 = vmatprep.subr.bf16.mxu0 0
      %961 = vmatpush1.bf16.msra.mxu0 %v950
      %962 = vmatprep.subr.bf16.mxu0 0
      %963 = vmatpush1.bf16.msra.mxu0 %v951
      %964 = vmatprep.subr.bf16.mxu0 0
      %965 = vmatpush1.bf16.msra.mxu0 0
      %966 = vmatprep.subr.bf16.mxu0 0
      %967 = vmatpush1.bf16.msra.mxu0 0
      %968 = vmatprep.subr.bf16.mxu0 0
      %969 = vmatpush1.bf16.msra.mxu0 0
      %970 = vmatprep.subr.bf16.mxu0 0
      %971 = vmatpush1.bf16.msra.mxu0 0
      %972 = vmatprep.subr.bf16.mxu0 0
      %973 = vmatpush1.bf16.msra.mxu0 0
      %974 = vmatprep.subr.bf16.mxu0 0
      %975 = vmatpush1.bf16.msra.mxu0 0
      %976 = vmatprep.subr.bf16.mxu0 0
      %977 = vmatpush1.bf16.msra.mxu0 0
      %978 = vmatprep.subr.bf16.mxu0 0
      %979 = vmatpush1.bf16.msra.mxu0 0
      %980 = vmatprep.subr.bf16.mxu0 0
      %981 = vmatpush1.bf16.msra.mxu0 0
      %982 = vmatprep.subr.bf16.mxu0 0
      %983 = vmatpush1.bf16.msra.mxu0 0
      %984 = vmatprep.subr.bf16.mxu0 0
      %985 = vmatpush1.bf16.msra.mxu0 0
      %986 = vmatprep.subr.bf16.mxu0 0
      %987 = vmatpush1.bf16.msra.mxu0 0
      %988 = vmatprep.subr.bf16.mxu0 0
      %989 = vmatpush1.bf16.msra.mxu0 0
      %990 = vmatprep.subr.bf16.mxu0 0
      %991 = vmatpush1.bf16.msra.mxu0 0
      %992 = vmatprep.mubr.bf16.mxu0 0
      %993 = vmatmul.mubr.bf16.gmra.mrb[0].mxu0 %v955
      %v994 = vpop.f32.mrb[0].mxu0
      %v995 = vadd.f32 0.0, %v994
      %v996 = vpop.f32.mrb[0].mxu0
      %v997 = vpop.f32.mrb[0].mxu0
      %v998 = vadd.f32 0.0, %v997
      %v999 = vpop.f32.mrb[0].mxu0
      %1000 = vmatprep.mubr.bf16.mxu0 0
      %1001 = vmatmul.mubr.bf16.gmra.mrb[0].mxu0 %v958
      %v1002 = vpop.f32.mrb[0].mxu0
      %v1003 = vadd.f32 0.0, %v1002
      %v1004 = vpop.f32.mrb[0].mxu0
      %v1005 = vpop.f32.mrb[0].mxu0
      %v1006 = vpop.f32.mrb[0].mxu0
      %1007 = vdwg.mxu0
      %v1008 = vadd.f32 %v287, %v995
      %v1009 = vadd.f32 %v288, %v998
      %v1010 = vadd.f32 %v289, %v1003
      %v1011 = vlaneseq
      %v1012 = vshrl.u32 %v1011, 7
      %v1013 = vsub.s32 3, %v1012
      %v1014 = vrot.slane %v318, %v1013
      %v1015 = vadd.f32 %v1008, %v1014
      %v1016 = vadd.f32 %v1009, %v1014
      %v1017 = vadd.f32 %v1010, %v1014
      %v1018 = vsel %vm319, %v1015, 0.0
      %1019 = vadd.xlane.f32.xlu0 %v1018
      %v1020 = vpop.xlane.xlu0 %1019
      %v1021 = vsel %vm319, %v1016, 0.0
      %1022 = vadd.xlane.f32.xlu0 %v1021
      %v1023 = vpop.xlane.xlu0 %1022
      %v1024 = vsel %vm326, %v1017, 0.0
      %1025 = vadd.xlane.f32.xlu0 %v1024
      %v1026 = vpop.xlane.xlu0 %1025
      %v1027 = vmul.f32 %v1020, %v330
      %v1028 = vmul.f32 %v1023, %v330
      %v1029 = vmul.f32 %v1026, %v330
      %v1030 = vsub.f32 %v1015, %v1027
      %v1031 = vsub.f32 %v1016, %v1028
      %v1032 = vsub.f32 %v1017, %v1029
      %v1033 = vmul.f32 %v1030, %v1030
      %v1034 = vmul.f32 %v1031, %v1031
      %v1035 = vmul.f32 %v1032, %v1032
      %v1036 = vsel %vm319, %v1033, 0.0
      %1037 = vadd.xlane.f32.xlu0 %v1036
      %v1038 = vpop.xlane.xlu0 %1037
      %v1039 = vsel %vm319, %v1034, 0.0
      %1040 = vadd.xlane.f32.xlu0 %v1039
      %v1041 = vpop.xlane.xlu0 %1040
      %v1042 = vsel %vm326, %v1035, 0.0
      %1043 = vadd.xlane.f32.xlu0 %v1042
      %v1044 = vpop.xlane.xlu0 %1043
      %v1045 = vmul.f32 %v1038, %v330
      %v1046 = vmul.f32 %v1041, %v330
      %v1047 = vmul.f32 %v1044, %v330
      %v1048 = vadd.f32 %v1045, 1e-12
      %v1049 = vadd.f32 %v1046, 1e-12
      %v1050 = vadd.f32 %v1047, 1e-12
      %v1051 = vrsqrt.pop %v1048
      %v1052 = vrsqrt.pop %v1049
      %v1053 = vrsqrt.pop %v1050
      %v1054 = vmul.f32 %v1030, %v1051
      %v1055 = vmul.f32 %v1031, %v1052
      %v1056 = vmul.f32 %v1032, %v1053
      %v1057 = vlaneseq
      %v1058 = vshrl.u32 %v1057, 7
      %v1059 = vsub.s32 4, %v1058
      %v1060 = vrot.slane %v318, %v1059
      %v1061 = vmul.f32 %v1054, %v1060
      %v1062 = vmul.f32 %v1055, %v1060
      %v1063 = vmul.f32 %v1056, %v1060
      %v1064 = vlaneseq
      %v1065 = vshrl.u32 %v1064, 7
      %v1066 = vsub.s32 5, %v1065
      %v1067 = vrot.slane %v318, %v1066
      %v1068 = vadd.f32 %v1061, %v1067
      %v1069 = vadd.f32 %v1062, %v1067
      %v1070 = vadd.f32 %v1063, %v1067
      %v1071 = vpack.c.bf16 %v1069, %v1068
      %v1072 = vpack.c.bf16 %v1070, %v1070
      %v1073 = vlaneseq
      %v1074 = vshrl.u32 %v1073, 7
      %v1075 = vsub.s32 6, %v1074
      %v1076 = vrot.slane %v318, %v1075
      %v1081 = vunpack.c.l.b16 %v298
      %v1082 = vunpack.c.l.b16 %v299
      %v1083 = vunpack.c.l.b16 %v300
      %v1084 = vunpack.c.l.b16 %v301
      %v1085 = vpack.c.b16 %v1082, %v1081
      %v1086 = vpack.c.b16 %v1084, %v1083
      %v1090 = vsel %vm319, %v1071, 0
      %v1093 = vsel %vm319, %v1072, 0
      %1095 = vmatprep.subr.bf16.mxu0 0
      %1096 = vmatpush1.bf16.msra.mxu0 %v1085
      %1097 = vmatprep.subr.bf16.mxu0 0
      %1098 = vmatpush1.bf16.msra.mxu0 %v1086
      %1099 = vmatprep.subr.bf16.mxu0 0
      %1100 = vmatpush1.bf16.msra.mxu0 0
      %1101 = vmatprep.subr.bf16.mxu0 0
      %1102 = vmatpush1.bf16.msra.mxu0 0
      %1103 = vmatprep.subr.bf16.mxu0 0
      %1104 = vmatpush1.bf16.msra.mxu0 0
      %1105 = vmatprep.subr.bf16.mxu0 0
      %1106 = vmatpush1.bf16.msra.mxu0 0
      %1107 = vmatprep.subr.bf16.mxu0 0
      %1108 = vmatpush1.bf16.msra.mxu0 0
      %1109 = vmatprep.subr.bf16.mxu0 0
      %1110 = vmatpush1.bf16.msra.mxu0 0
      %1111 = vmatprep.subr.bf16.mxu0 0
      %1112 = vmatpush1.bf16.msra.mxu0 0
      %1113 = vmatprep.subr.bf16.mxu0 0
      %1114 = vmatpush1.bf16.msra.mxu0 0
      %1115 = vmatprep.subr.bf16.mxu0 0
      %1116 = vmatpush1.bf16.msra.mxu0 0
      %1117 = vmatprep.subr.bf16.mxu0 0
      %1118 = vmatpush1.bf16.msra.mxu0 0
      %1119 = vmatprep.subr.bf16.mxu0 0
      %1120 = vmatpush1.bf16.msra.mxu0 0
      %1121 = vmatprep.subr.bf16.mxu0 0
      %1122 = vmatpush1.bf16.msra.mxu0 0
      %1123 = vmatprep.subr.bf16.mxu0 0
      %1124 = vmatpush1.bf16.msra.mxu0 0
      %1125 = vmatprep.subr.bf16.mxu0 0
      %1126 = vmatpush1.bf16.msra.mxu0 0
      %1127 = vmatprep.mubr.bf16.mxu0 0
      %1128 = vmatmul.mubr.bf16.gmra.mrb[0].mxu0 %v1090
      %v1129 = vpop.f32.mrb[0].mxu0
      %v1130 = vadd.f32 %v1076, %v1129
      %v1131 = vpop.f32.mrb[0].mxu0
      %v1132 = vpop.f32.mrb[0].mxu0
      %v1133 = vadd.f32 %v1076, %v1132
      %v1134 = vpop.f32.mrb[0].mxu0
      %1135 = vmatprep.mubr.bf16.mxu0 0
      %1136 = vmatmul.mubr.bf16.gmra.mrb[0].mxu0 %v1093
      %v1137 = vpop.f32.mrb[0].mxu0
      %v1138 = vadd.f32 %v1076, %v1137
      %v1139 = vpop.f32.mrb[0].mxu0
      %v1140 = vpop.f32.mrb[0].mxu0
      %v1141 = vpop.f32.mrb[0].mxu0
      %1142 = vdwg.mxu0
      %v1143 = vmul.f32 %v1130, 0.5
      %v1144 = vmul.f32 %v1133, 0.5
      %v1145 = vmul.f32 %v1138, 0.5
      %v1146 = vmul.f32 %v1130, 0.044715
      %v1147 = vmul.f32 %v1133, 0.044715
      %v1148 = vmul.f32 %v1138, 0.044715
      %v1149 = vmul.f32 %v1146, %v1130
      %v1150 = vmul.f32 %v1147, %v1133
      %v1151 = vmul.f32 %v1148, %v1138
      %v1152 = vmul.f32 %v1149, %v1130
      %v1153 = vmul.f32 %v1150, %v1133
      %v1154 = vmul.f32 %v1151, %v1138
      %v1155 = vadd.f32 %v1130, %v1152
      %v1156 = vadd.f32 %v1133, %v1153
      %v1157 = vadd.f32 %v1138, %v1154
      %v1158 = vmul.f32 %v1155, 0.7978846
      %v1159 = vmul.f32 %v1156, 0.7978846
      %v1160 = vmul.f32 %v1157, 0.7978846
      %v1161 = vtanh.pop %v1158
      %v1162 = vtanh.pop %v1159
      %v1163 = vtanh.pop %v1160
      %v1164 = vadd.f32 %v1161, 1.0
      %v1165 = vadd.f32 %v1162, 1.0
      %v1166 = vadd.f32 %v1163, 1.0
      %v1167 = vmul.f32 %v1143, %v1164
      %v1168 = vmul.f32 %v1144, %v1165
      %v1169 = vmul.f32 %v1145, %v1166
      %v1170 = vpack.c.bf16 %v1168, %v1167
      %v1171 = vpack.c.bf16 %v1169, %v1169
      %v1188 = vunpack.c.l.b16 %v302
      %v1189 = vunpack.c.l.b16 %v303
      %v1190 = vunpack.c.l.b16 %v304
      %v1191 = vunpack.c.l.b16 %v305
      %v1192 = vunpack.c.l.b16 %v306
      %v1193 = vunpack.c.l.b16 %v307
      %v1194 = vunpack.c.l.b16 %v308
      %v1195 = vunpack.c.l.b16 %v309
      %v1196 = vunpack.c.l.b16 %v310
      %v1197 = vunpack.c.l.b16 %v311
      %v1198 = vunpack.c.l.b16 %v312
      %v1199 = vunpack.c.l.b16 %v313
      %v1200 = vunpack.c.l.b16 %v314
      %v1201 = vunpack.c.l.b16 %v315
      %v1202 = vunpack.c.l.b16 %v316
      %v1203 = vunpack.c.l.b16 %v317
      %v1204 = vpack.c.b16 %v1189, %v1188
      %v1205 = vpack.c.b16 %v1191, %v1190
      %v1206 = vpack.c.b16 %v1193, %v1192
      %v1207 = vpack.c.b16 %v1195, %v1194
      %v1208 = vpack.c.b16 %v1197, %v1196
      %v1209 = vpack.c.b16 %v1199, %v1198
      %v1210 = vpack.c.b16 %v1201, %v1200
      %v1211 = vpack.c.b16 %v1203, %v1202
      %1220 = vmatprep.subr.bf16.mxu0 0
      %1221 = vmatpush1.bf16.msra.mxu0 %v1204
      %1222 = vmatprep.subr.bf16.mxu0 0
      %1223 = vmatpush1.bf16.msra.mxu0 %v1205
      %1224 = vmatprep.subr.bf16.mxu0 0
      %1225 = vmatpush1.bf16.msra.mxu0 %v1206
      %1226 = vmatprep.subr.bf16.mxu0 0
      %1227 = vmatpush1.bf16.msra.mxu0 %v1207
      %1228 = vmatprep.subr.bf16.mxu0 0
      %1229 = vmatpush1.bf16.msra.mxu0 %v1208
      %1230 = vmatprep.subr.bf16.mxu0 0
      %1231 = vmatpush1.bf16.msra.mxu0 %v1209
      %1232 = vmatprep.subr.bf16.mxu0 0
      %1233 = vmatpush1.bf16.msra.mxu0 %v1210
      %1234 = vmatprep.subr.bf16.mxu0 0
      %1235 = vmatpush1.bf16.msra.mxu0 %v1211
      %1236 = vmatprep.subr.bf16.mxu0 0
      %1237 = vmatpush1.bf16.msra.mxu0 0
      %1238 = vmatprep.subr.bf16.mxu0 0
      %1239 = vmatpush1.bf16.msra.mxu0 0
      %1240 = vmatprep.subr.bf16.mxu0 0
      %1241 = vmatpush1.bf16.msra.mxu0 0
      %1242 = vmatprep.subr.bf16.mxu0 0
      %1243 = vmatpush1.bf16.msra.mxu0 0
      %1244 = vmatprep.subr.bf16.mxu0 0
      %1245 = vmatpush1.bf16.msra.mxu0 0
      %1246 = vmatprep.subr.bf16.mxu0 0
      %1247 = vmatpush1.bf16.msra.mxu0 0
      %1248 = vmatprep.subr.bf16.mxu0 0
      %1249 = vmatpush1.bf16.msra.mxu0 0
      %1250 = vmatprep.subr.bf16.mxu0 0
      %1251 = vmatpush1.bf16.msra.mxu0 0
      %1252 = vmatprep.mubr.bf16.mxu0 0
      %1253 = vmatmul.mubr.bf16.gmra.mrb[0].mxu0 %v1170
      %v1254 = vpop.f32.mrb[0].mxu0
      %v1255 = vadd.f32 0.0, %v1254
      %v1256 = vpop.f32.mrb[0].mxu0
      %v1257 = vpop.f32.mrb[0].mxu0
      %v1258 = vadd.f32 0.0, %v1257
      %v1259 = vpop.f32.mrb[0].mxu0
      %1260 = vmatprep.mubr.bf16.mxu0 0
      %1261 = vmatmul.mubr.bf16.gmra.mrb[0].mxu0 %v1171
      %v1262 = vpop.f32.mrb[0].mxu0
      %v1263 = vadd.f32 0.0, %v1262
      %v1264 = vpop.f32.mrb[0].mxu0
      %v1265 = vpop.f32.mrb[0].mxu0
      %v1266 = vpop.f32.mrb[0].mxu0
      %1267 = vdwg.mxu0
      %v1268 = vadd.f32 %v1015, %v1255
      %v1269 = vadd.f32 %v1016, %v1258
      %v1270 = vadd.f32 %v1017, %v1263
      %v1271 = vlaneseq
      %v1272 = vshrl.u32 %v1271, 7
      %v1273 = vsub.s32 7, %v1272
      %v1274 = vrot.slane %v318, %v1273
      %v1275 = vadd.f32 %v1268, %v1274
      %v1276 = vadd.f32 %v1269, %v1274
      %v1277 = vadd.f32 %v1270, %v1274
      %s1278 = scalar_lea.vmem %s2, 112
      %v1279 = vld [vmem:[%s1278] sm:$0xf]
      %v1280 = vld [vmem:[%s1278 + $0x4] sm:$0xf]
      %v1281 = vld [vmem:[%s1278 + $0x8] sm:$0xf]
      %v1282 = vld [vmem:[%s1278 + $0xc] sm:$0xf]
      %v1283 = vld [vmem:[%s1278 + $0x10] sm:$0xf]
      %v1284 = vld [vmem:[%s1278 + $0x14] sm:$0xf]
      %v1285 = vld [vmem:[%s1278 + $0x18] sm:$0xf]
      %v1286 = vld [vmem:[%s1278 + $0x1c] sm:$0xf]
      %v1287 = vld [vmem:[%s1278 + $0x20] sm:$0xf]
      %v1288 = vld [vmem:[%s1278 + $0x24] sm:$0xf]
      %v1289 = vld [vmem:[%s1278 + $0x28] sm:$0xf]
      %v1290 = vld [vmem:[%s1278 + $0x2c] sm:$0xf]
      %v1291 = vld [vmem:[%s1278 + $0x30] sm:$0xf]
      %v1292 = vld [vmem:[%s1278 + $0x34] sm:$0xf]
      %v1293 = vld [vmem:[%s1278 + $0x38] sm:$0xf]
      %v1294 = vld [vmem:[%s1278 + $0x3c] sm:$0xf]
      %v1295 = vld [vmem:[%s1278 + $0x40] sm:$0xf]
      %v1296 = vld [vmem:[%s1278 + $0x44] sm:$0xf]
      %v1297 = vld [vmem:[%s1278 + $0x48] sm:$0xf]
      %v1298 = vld [vmem:[%s1278 + $0x4c] sm:$0xf]
      %v1299 = vld [vmem:[%s1278 + $0x50] sm:$0xf]
      %v1300 = vld [vmem:[%s1278 + $0x54] sm:$0xf]
      %v1301 = vld [vmem:[%s1278 + $0x58] sm:$0xf]
      %v1302 = vld [vmem:[%s1278 + $0x5c] sm:$0xf]
      %v1303 = vld [vmem:[%s1278 + $0x60] sm:$0xf]
      %v1304 = vld [vmem:[%s1278 + $0x64] sm:$0xf]
      %v1305 = vld [vmem:[%s1278 + $0x68] sm:$0xf]
      %v1306 = vld [vmem:[%s1278 + $0x6c] sm:$0xf]
      %v1307 = vld [vmem:[%s3 + $0x1c] sm:$0xff]
      %v1308 = vsel %vm319, %v1275, 0.0
      %1309 = vadd.xlane.f32.xlu0 %v1308
      %v1310 = vpop.xlane.xlu0 %1309
      %v1311 = vsel %vm319, %v1276, 0.0
      %1312 = vadd.xlane.f32.xlu0 %v1311
      %v1313 = vpop.xlane.xlu0 %1312
      %v1314 = vsel %vm326, %v1277, 0.0
      %1315 = vadd.xlane.f32.xlu0 %v1314
      %v1316 = vpop.xlane.xlu0 %1315
      %v1317 = vmul.f32 %v1310, %v330
      %v1318 = vmul.f32 %v1313, %v330
      %v1319 = vmul.f32 %v1316, %v330
      %v1320 = vsub.f32 %v1275, %v1317
      %v1321 = vsub.f32 %v1276, %v1318
      %v1322 = vsub.f32 %v1277, %v1319
      %v1323 = vmul.f32 %v1320, %v1320
      %v1324 = vmul.f32 %v1321, %v1321
      %v1325 = vmul.f32 %v1322, %v1322
      %v1326 = vsel %vm319, %v1323, 0.0
      %1327 = vadd.xlane.f32.xlu0 %v1326
      %v1328 = vpop.xlane.xlu0 %1327
      %v1329 = vsel %vm319, %v1324, 0.0
      %1330 = vadd.xlane.f32.xlu0 %v1329
      %v1331 = vpop.xlane.xlu0 %1330
      %v1332 = vsel %vm326, %v1325, 0.0
      %1333 = vadd.xlane.f32.xlu0 %v1332
      %v1334 = vpop.xlane.xlu0 %1333
      %v1335 = vmul.f32 %v1328, %v330
      %v1336 = vmul.f32 %v1331, %v330
      %v1337 = vmul.f32 %v1334, %v330
      %v1338 = vadd.f32 %v1335, 1e-12
      %v1339 = vadd.f32 %v1336, 1e-12
      %v1340 = vadd.f32 %v1337, 1e-12
      %v1341 = vrsqrt.pop %v1338
      %v1342 = vrsqrt.pop %v1339
      %v1343 = vrsqrt.pop %v1340
      %v1344 = vmul.f32 %v1320, %v1341
      %v1345 = vmul.f32 %v1321, %v1342
      %v1346 = vmul.f32 %v1322, %v1343
      %v1347 = vlaneseq
      %v1348 = vshrl.u32 %v1347, 7
      %v1349 = vsub.s32 0, %v1348
      %v1350 = vrot.slane %v1307, %v1349
      %v1351 = vmul.f32 %v1344, %v1350
      %v1352 = vmul.f32 %v1345, %v1350
      %v1353 = vmul.f32 %v1346, %v1350
      %v1354 = vlaneseq
      %v1355 = vshrl.u32 %v1354, 7
      %v1356 = vsub.s32 1, %v1355
      %v1357 = vrot.slane %v1307, %v1356
      %v1358 = vadd.f32 %v1351, %v1357
      %v1359 = vadd.f32 %v1352, %v1357
      %v1360 = vadd.f32 %v1353, %v1357
      %v1361 = vpack.c.bf16 %v1359, %v1358
      %v1362 = vpack.c.bf16 %v1360, %v1360
      %v1363 = vlaneseq
      %v1364 = vshrl.u32 %v1363, 7
      %v1365 = vsub.s32 2, %v1364
      %v1366 = vrot.slane %v1307, %v1365
      %v1371 = vunpack.c.l.b16 %v1279
      %v1372 = vunpack.c.l.b16 %v1280
      %v1373 = vunpack.c.l.b16 %v1281
      %v1374 = vunpack.c.l.b16 %v1282
      %v1375 = vpack.c.b16 %v1372, %v1371
      %v1376 = vpack.c.b16 %v1374, %v1373
      %v1380 = vsel %vm319, %v1361, 0
      %v1383 = vsel %vm319, %v1362, 0
      %1385 = vmatprep.subr.bf16.mxu0 0
      %1386 = vmatpush1.bf16.msra.mxu0 %v1375
      %1387 = vmatprep.subr.bf16.mxu0 0
      %1388 = vmatpush1.bf16.msra.mxu0 %v1376
      %1389 = vmatprep.subr.bf16.mxu0 0
      %1390 = vmatpush1.bf16.msra.mxu0 0
      %1391 = vmatprep.subr.bf16.mxu0 0
      %1392 = vmatpush1.bf16.msra.mxu0 0
      %1393 = vmatprep.subr.bf16.mxu0 0
      %1394 = vmatpush1.bf16.msra.mxu0 0
      %1395 = vmatprep.subr.bf16.mxu0 0
      %1396 = vmatpush1.bf16.msra.mxu0 0
      %1397 = vmatprep.subr.bf16.mxu0 0
      %1398 = vmatpush1.bf16.msra.mxu0 0
      %1399 = vmatprep.subr.bf16.mxu0 0
      %1400 = vmatpush1.bf16.msra.mxu0 0
      %1401 = vmatprep.subr.bf16.mxu0 0
      %1402 = vmatpush1.bf16.msra.mxu0 0
      %1403 = vmatprep.subr.bf16.mxu0 0
      %1404 = vmatpush1.bf16.msra.mxu0 0
      %1405 = vmatprep.subr.bf16.mxu0 0
      %1406 = vmatpush1.bf16.msra.mxu0 0
      %1407 = vmatprep.subr.bf16.mxu0 0
      %1408 = vmatpush1.bf16.msra.mxu0 0
      %1409 = vmatprep.subr.bf16.mxu0 0
      %1410 = vmatpush1.bf16.msra.mxu0 0
      %1411 = vmatprep.subr.bf16.mxu0 0
      %1412 = vmatpush1.bf16.msra.mxu0 0
      %1413 = vmatprep.subr.bf16.mxu0 0
      %1414 = vmatpush1.bf16.msra.mxu0 0
      %1415 = vmatprep.subr.bf16.mxu0 0
      %1416 = vmatpush1.bf16.msra.mxu0 0
      %1417 = vmatprep.mubr.bf16.mxu0 0
      %1418 = vmatmul.mubr.bf16.gmra.mrb[0].mxu0 %v1380
      %v1419 = vpop.f32.mrb[0].mxu0
      %v1420 = vadd.f32 %v1366, %v1419
      %v1421 = vpop.f32.mrb[0].mxu0
      %v1422 = vpop.f32.mrb[0].mxu0
      %v1423 = vadd.f32 %v1366, %v1422
      %v1424 = vpop.f32.mrb[0].mxu0
      %1425 = vmatprep.mubr.bf16.mxu0 0
      %1426 = vmatmul.mubr.bf16.gmra.mrb[0].mxu0 %v1383
      %v1427 = vpop.f32.mrb[0].mxu0
      %v1428 = vadd.f32 %v1366, %v1427
      %v1429 = vpop.f32.mrb[0].mxu0
      %v1430 = vpop.f32.mrb[0].mxu0
      %v1431 = vpop.f32.mrb[0].mxu0
      %1432 = vdwg.mxu0
      %1436 = vrot.lane.b32.xlu0 %v1420, 96
      %v1437 = vpop.permute.xlu0 %1436
      %1438 = vrot.lane.b32.xlu0 %v1423, 96
      %v1439 = vpop.permute.xlu0 %1438
      %1440 = vrot.lane.b32.xlu0 %v1428, 96
      %v1441 = vpop.permute.xlu0 %1440
      %v1442 = vsel %vm456, %v1420, 0
      %v1444 = vsel %vm456, %v1423, 0
      %v1446 = vsel %vm456, %v1428, 0
      %v1448 = vsel %vm456, %v1437, 0
      %v1450 = vsel %vm456, %v1439, 0
      %v1452 = vsel %vm456, %v1441, 0
      %1454 = vmatprep.subr.mxu0 0.0
      %1455 = vmatpush1.xpose.msra.mxu0 %v1448
      %1456 = vmatprep.subr.mxu0 0.0
      %1457 = vmatpush1.xpose.msra.mxu0 %v1450
      %1458 = vmatprep.subr.mxu0 0.0
      %1459 = vmatpush1.xpose.msra.mxu0 %v1452
      %1460 = vmatprep.subr.mxu0 0.0
      %1461 = vmatpush1.xpose.msra.mxu0 0.0
      %1462 = vmatprep.subr.mxu0 0.0
      %1463 = vmatpush1.xpose.msra.mxu0 0.0
      %1464 = vmatprep.subr.mxu0 0.0
      %1465 = vmatpush1.xpose.msra.mxu0 0.0
      %1466 = vmatprep.subr.mxu0 0.0
      %1467 = vmatpush1.xpose.msra.mxu0 0.0
      %1468 = vmatprep.subr.mxu0 0.0
      %1469 = vmatpush1.xpose.msra.mxu0 0.0
      %1470 = vmatprep.subr.mxu0 0.0
      %1471 = vmatpush1.xpose.msra.mxu0 0.0
      %1472 = vmatprep.subr.mxu0 0.0
      %1473 = vmatpush1.xpose.msra.mxu0 0.0
      %1474 = vmatprep.subr.mxu0 0.0
      %1475 = vmatpush1.xpose.msra.mxu0 0.0
      %1476 = vmatprep.subr.mxu0 0.0
      %1477 = vmatpush1.xpose.msra.mxu0 0.0
      %1478 = vmatprep.subr.mxu0 0.0
      %1479 = vmatpush1.xpose.msra.mxu0 0.0
      %1480 = vmatprep.subr.mxu0 0.0
      %1481 = vmatpush1.xpose.msra.mxu0 0.0
      %1482 = vmatprep.subr.mxu0 0.0
      %1483 = vmatpush1.xpose.msra.mxu0 0.0
      %1484 = vmatprep.subr.mxu0 0.0
      %1485 = vmatpush1.xpose.msra.mxu0 0.0
      %1486 = vmatprep.subr.mxu0 0.0
      %1487 = vmatpush1.xpose.msra.mxu0 0.0
      %1488 = vmatprep.subr.mxu0 0.0
      %1489 = vmatpush1.xpose.msra.mxu0 0.0
      %1490 = vmatprep.subr.mxu0 0.0
      %1491 = vmatpush1.xpose.msra.mxu0 0.0
      %1492 = vmatprep.subr.mxu0 0.0
      %1493 = vmatpush1.xpose.msra.mxu0 0.0
      %1494 = vmatprep.subr.mxu0 0.0
      %1495 = vmatpush1.xpose.msra.mxu0 0.0
      %1496 = vmatprep.subr.mxu0 0.0
      %1497 = vmatpush1.xpose.msra.mxu0 0.0
      %1498 = vmatprep.subr.mxu0 0.0
      %1499 = vmatpush1.xpose.msra.mxu0 0.0
      %1500 = vmatprep.subr.mxu0 0.0
      %1501 = vmatpush1.xpose.msra.mxu0 0.0
      %1502 = vmatprep.subr.mxu0 0.0
      %1503 = vmatpush1.xpose.msra.mxu0 0.0
      %1504 = vmatprep.subr.mxu0 0.0
      %1505 = vmatpush1.xpose.msra.mxu0 0.0
      %1506 = vmatprep.subr.mxu0 0.0
      %1507 = vmatpush1.xpose.msra.mxu0 0.0
      %1508 = vmatprep.subr.mxu0 0.0
      %1509 = vmatpush1.xpose.msra.mxu0 0.0
      %1510 = vmatprep.subr.mxu0 0.0
      %1511 = vmatpush1.xpose.msra.mxu0 0.0
      %1512 = vmatprep.subr.mxu0 0.0
      %1513 = vmatpush1.xpose.msra.mxu0 0.0
      %1514 = vmatprep.subr.mxu0 0.0
      %1515 = vmatpush1.xpose.msra.mxu0 0.0
      %1516 = vmatprep.subr.mxu0 0.0
      %1517 = vmatpush1.xpose.msra.mxu0 0.0
      %1518 = vmatprep.mubr.f32.mxu0 0.0
      %1519 = vmatmul.mubr.f32.gmra.mrb[0].mxu0 %v1442
      %v1520 = vpop.f32.mrb[0].mxu0
      %v1521 = vadd.f32 0.0, %v1520
      %v1522 = vpop.f32.mrb[0].mxu0
      %1523 = vmatprep.mubr.f32.mxu0 0.0
      %1524 = vmatmul.mubr.f32.gmra.mrb[0].mxu0 %v1444
      %v1525 = vpop.f32.mrb[0].mxu0
      %v1526 = vadd.f32 0.0, %v1525
      %v1527 = vpop.f32.mrb[0].mxu0
      %1528 = vmatprep.mubr.f32.mxu0 0.0
      %1529 = vmatmul.mubr.f32.gmra.mrb[0].mxu0 %v1446
      %v1530 = vpop.f32.mrb[0].mxu0
      %v1531 = vadd.f32 0.0, %v1530
      %v1532 = vpop.f32.mrb[0].mxu0
      %1533 = vdwg.mxu0
      %v1534 = vmul.f32 %v1521, 0.25
      %v1535 = vmul.f32 %v1526, 0.25
      %v1536 = vmul.f32 %v1531, 0.25
      %v1537 = vsel %vm552, %v1534, -inf
      %1538 = vmax.xlane.f32.xlu0 %v1537
      %v1539 = vpop.xlane.xlu0 %1538
      %v1540 = vsel %vm552, %v1535, -inf
      %1541 = vmax.xlane.f32.xlu0 %v1540
      %v1542 = vpop.xlane.xlu0 %1541
      %v1543 = vsel %vm559, %v1536, -inf
      %1544 = vmax.xlane.f32.xlu0 %v1543
      %v1545 = vpop.xlane.xlu0 %1544
      %v1546 = vsub.f32 %v1534, %v1539
      %v1547 = vsub.f32 %v1535, %v1542
      %v1548 = vsub.f32 %v1536, %v1545
      %v1549 = vmul.f32 %v1546, 1.442695
      %v1550 = vpow.pop %v1549
      %v1551 = vmul.f32 %v1547, 1.442695
      %v1552 = vpow.pop %v1551
      %v1553 = vmul.f32 %v1548, 1.442695
      %v1554 = vpow.pop %v1553
      %v1555 = vsel %vm552, %v1550, 0.0
      %1556 = vadd.xlane.f32.xlu0 %v1555
      %v1557 = vpop.xlane.xlu0 %1556
      %v1558 = vsel %vm552, %v1552, 0.0
      %1559 = vadd.xlane.f32.xlu0 %v1558
      %v1560 = vpop.xlane.xlu0 %1559
      %v1561 = vsel %vm559, %v1554, 0.0
      %1562 = vadd.xlane.f32.xlu0 %v1561
      %v1563 = vpop.xlane.xlu0 %1562
      %v1564 = vrcp.pop %v1557
      %v1565 = vrcp.pop %v1560
      %v1566 = vrcp.pop %v1563
      %v1567 = vmul.f32 %v1550, %v1564
      %v1568 = vmul.f32 %v1552, %v1565
      %v1569 = vmul.f32 %v1554, %v1566
      %1570 = vrot.lane.b32.xlu0 %v1420, 64
      %v1571 = vpop.permute.xlu0 %1570
      %1572 = vrot.lane.b32.xlu0 %v1423, 64
      %v1573 = vpop.permute.xlu0 %1572
      %1574 = vrot.lane.b32.xlu0 %v1428, 64
      %v1575 = vpop.permute.xlu0 %1574
      %v1579 = vsel %vm552, %v1567, 0
      %v1582 = vsel %vm552, %v1568, 0
      %v1585 = vsel %vm552, %v1569, 0
      %v1587 = vsel %vm279, %v1575, 0
      %1589 = vmatprep.subr.mxu0 0.0
      %1590 = vmatpush1.msra.mxu0 %v1571
      %1591 = vmatprep.subr.mxu0 0.0
      %1592 = vmatpush1.msra.mxu0 %v1573
      %1593 = vmatprep.subr.mxu0 0.0
      %1594 = vmatpush1.msra.mxu0 %v1587
      %1595 = vmatprep.subr.mxu0 0.0
      %1596 = vmatpush1.msra.mxu0 0.0
      %1597 = vmatprep.subr.mxu0 0.0
      %1598 = vmatpush1.msra.mxu0 0.0
      %1599 = vmatprep.subr.mxu0 0.0
      %1600 = vmatpush1.msra.mxu0 0.0
      %1601 = vmatprep.subr.mxu0 0.0
      %1602 = vmatpush1.msra.mxu0 0.0
      %1603 = vmatprep.subr.mxu0 0.0
      %1604 = vmatpush1.msra.mxu0 0.0
      %1605 = vmatprep.subr.mxu0 0.0
      %1606 = vmatpush1.msra.mxu0 0.0
      %1607 = vmatprep.subr.mxu0 0.0
      %1608 = vmatpush1.msra.mxu0 0.0
      %1609 = vmatprep.subr.mxu0 0.0
      %1610 = vmatpush1.msra.mxu0 0.0
      %1611 = vmatprep.subr.mxu0 0.0
      %1612 = vmatpush1.msra.mxu0 0.0
      %1613 = vmatprep.subr.mxu0 0.0
      %1614 = vmatpush1.msra.mxu0 0.0
      %1615 = vmatprep.subr.mxu0 0.0
      %1616 = vmatpush1.msra.mxu0 0.0
      %1617 = vmatprep.subr.mxu0 0.0
      %1618 = vmatpush1.msra.mxu0 0.0
      %1619 = vmatprep.subr.mxu0 0.0
      %1620 = vmatpush1.msra.mxu0 0.0
      %1621 = vmatprep.subr.mxu0 0.0
      %1622 = vmatpush1.msra.mxu0 0.0
      %1623 = vmatprep.subr.mxu0 0.0
      %1624 = vmatpush1.msra.mxu0 0.0
      %1625 = vmatprep.subr.mxu0 0.0
      %1626 = vmatpush1.msra.mxu0 0.0
      %1627 = vmatprep.subr.mxu0 0.0
      %1628 = vmatpush1.msra.mxu0 0.0
      %1629 = vmatprep.subr.mxu0 0.0
      %1630 = vmatpush1.msra.mxu0 0.0
      %1631 = vmatprep.subr.mxu0 0.0
      %1632 = vmatpush1.msra.mxu0 0.0
      %1633 = vmatprep.subr.mxu0 0.0
      %1634 = vmatpush1.msra.mxu0 0.0
      %1635 = vmatprep.subr.mxu0 0.0
      %1636 = vmatpush1.msra.mxu0 0.0
      %1637 = vmatprep.subr.mxu0 0.0
      %1638 = vmatpush1.msra.mxu0 0.0
      %1639 = vmatprep.subr.mxu0 0.0
      %1640 = vmatpush1.msra.mxu0 0.0
      %1641 = vmatprep.subr.mxu0 0.0
      %1642 = vmatpush1.msra.mxu0 0.0
      %1643 = vmatprep.subr.mxu0 0.0
      %1644 = vmatpush1.msra.mxu0 0.0
      %1645 = vmatprep.subr.mxu0 0.0
      %1646 = vmatpush1.msra.mxu0 0.0
      %1647 = vmatprep.subr.mxu0 0.0
      %1648 = vmatpush1.msra.mxu0 0.0
      %1649 = vmatprep.subr.mxu0 0.0
      %1650 = vmatpush1.msra.mxu0 0.0
      %1651 = vmatprep.subr.mxu0 0.0
      %1652 = vmatpush1.msra.mxu0 0.0
      %1653 = vmatprep.mubr.f32.mxu0 0.0
      %1654 = vmatmul.mubr.f32.gmra.mrb[0].mxu0 %v1579
      %v1655 = vpop.f32.mrb[0].mxu0
      %v1656 = vadd.f32 0.0, %v1655
      %v1657 = vpop.f32.mrb[0].mxu0
      %1658 = vmatprep.mubr.f32.mxu0 0.0
      %1659 = vmatmul.mubr.f32.gmra.mrb[0].mxu0 %v1582
      %v1660 = vpop.f32.mrb[0].mxu0
      %v1661 = vadd.f32 0.0, %v1660
      %v1662 = vpop.f32.mrb[0].mxu0
      %1663 = vmatprep.mubr.f32.mxu0 0.0
      %1664 = vmatmul.mubr.f32.gmra.mrb[0].mxu0 %v1585
      %v1665 = vpop.f32.mrb[0].mxu0
      %v1666 = vadd.f32 0.0, %v1665
      %v1667 = vpop.f32.mrb[0].mxu0
      %1668 = vdwg.mxu0
      %1669 = vrot.lane.b32.xlu0 %v1420, 112
      %v1670 = vpop.permute.xlu0 %1669
      %1671 = vrot.lane.b32.xlu0 %v1423, 112
      %v1672 = vpop.permute.xlu0 %1671
      %1673 = vrot.lane.b32.xlu0 %v1428, 112
      %v1674 = vpop.permute.xlu0 %1673
      %1675 = vrot.lane.b32.xlu0 %v1420, 80
      %v1676 = vpop.permute.xlu0 %1675
      %1677 = vrot.lane.b32.xlu0 %v1423, 80
      %v1678 = vpop.permute.xlu0 %1677
      %1679 = vrot.lane.b32.xlu0 %v1428, 80
      %v1680 = vpop.permute.xlu0 %1679
      %v1681 = vsel %vm456, %v1670, 0
      %v1683 = vsel %vm456, %v1672, 0
      %v1685 = vsel %vm456, %v1674, 0
      %v1687 = vsel %vm456, %v1676, 0
      %v1689 = vsel %vm456, %v1678, 0
      %v1691 = vsel %vm456, %v1680, 0
      %1693 = vmatprep.subr.mxu0 0.0
      %1694 = vmatpush1.xpose.msra.mxu0 %v1687
      %1695 = vmatprep.subr.mxu0 0.0
      %1696 = vmatpush1.xpose.msra.mxu0 %v1689
      %1697 = vmatprep.subr.mxu0 0.0
      %1698 = vmatpush1.xpose.msra.mxu0 %v1691
      %1699 = vmatprep.subr.mxu0 0.0
      %1700 = vmatpush1.xpose.msra.mxu0 0.0
      %1701 = vmatprep.subr.mxu0 0.0
      %1702 = vmatpush1.xpose.msra.mxu0 0.0
      %1703 = vmatprep.subr.mxu0 0.0
      %1704 = vmatpush1.xpose.msra.mxu0 0.0
      %1705 = vmatprep.subr.mxu0 0.0
      %1706 = vmatpush1.xpose.msra.mxu0 0.0
      %1707 = vmatprep.subr.mxu0 0.0
      %1708 = vmatpush1.xpose.msra.mxu0 0.0
      %1709 = vmatprep.subr.mxu0 0.0
      %1710 = vmatpush1.xpose.msra.mxu0 0.0
      %1711 = vmatprep.subr.mxu0 0.0
      %1712 = vmatpush1.xpose.msra.mxu0 0.0
      %1713 = vmatprep.subr.mxu0 0.0
      %1714 = vmatpush1.xpose.msra.mxu0 0.0
      %1715 = vmatprep.subr.mxu0 0.0
      %1716 = vmatpush1.xpose.msra.mxu0 0.0
      %1717 = vmatprep.subr.mxu0 0.0
      %1718 = vmatpush1.xpose.msra.mxu0 0.0
      %1719 = vmatprep.subr.mxu0 0.0
      %1720 = vmatpush1.xpose.msra.mxu0 0.0
      %1721 = vmatprep.subr.mxu0 0.0
      %1722 = vmatpush1.xpose.msra.mxu0 0.0
      %1723 = vmatprep.subr.mxu0 0.0
      %1724 = vmatpush1.xpose.msra.mxu0 0.0
      %1725 = vmatprep.subr.mxu0 0.0
      %1726 = vmatpush1.xpose.msra.mxu0 0.0
      %1727 = vmatprep.subr.mxu0 0.0
      %1728 = vmatpush1.xpose.msra.mxu0 0.0
      %1729 = vmatprep.subr.mxu0 0.0
      %1730 = vmatpush1.xpose.msra.mxu0 0.0
      %1731 = vmatprep.subr.mxu0 0.0
      %1732 = vmatpush1.xpose.msra.mxu0 0.0
      %1733 = vmatprep.subr.mxu0 0.0
      %1734 = vmatpush1.xpose.msra.mxu0 0.0
      %1735 = vmatprep.subr.mxu0 0.0
      %1736 = vmatpush1.xpose.msra.mxu0 0.0
      %1737 = vmatprep.subr.mxu0 0.0
      %1738 = vmatpush1.xpose.msra.mxu0 0.0
      %1739 = vmatprep.subr.mxu0 0.0
      %1740 = vmatpush1.xpose.msra.mxu0 0.0
      %1741 = vmatprep.subr.mxu0 0.0
      %1742 = vmatpush1.xpose.msra.mxu0 0.0
      %1743 = vmatprep.subr.mxu0 0.0
      %1744 = vmatpush1.xpose.msra.mxu0 0.0
      %1745 = vmatprep.subr.mxu0 0.0
      %1746 = vmatpush1.xpose.msra.mxu0 0.0
      %1747 = vmatprep.subr.mxu0 0.0
      %1748 = vmatpush1.xpose.msra.mxu0 0.0
      %1749 = vmatprep.subr.mxu0 0.0
      %1750 = vmatpush1.xpose.msra.mxu0 0.0
      %1751 = vmatprep.subr.mxu0 0.0
      %1752 = vmatpush1.xpose.msra.mxu0 0.0
      %1753 = vmatprep.subr.mxu0 0.0
      %1754 = vmatpush1.xpose.msra.mxu0 0.0
      %1755 = vmatprep.subr.mxu0 0.0
      %1756 = vmatpush1.xpose.msra.mxu0 0.0
      %1757 = vmatprep.mubr.f32.mxu0 0.0
      %1758 = vmatmul.mubr.f32.gmra.mrb[0].mxu0 %v1681
      %v1759 = vpop.f32.mrb[0].mxu0
      %v1760 = vadd.f32 0.0, %v1759
      %v1761 = vpop.f32.mrb[0].mxu0
      %1762 = vmatprep.mubr.f32.mxu0 0.0
      %1763 = vmatmul.mubr.f32.gmra.mrb[0].mxu0 %v1683
      %v1764 = vpop.f32.mrb[0].mxu0
      %v1765 = vadd.f32 0.0, %v1764
      %v1766 = vpop.f32.mrb[0].mxu0
      %1767 = vmatprep.mubr.f32.mxu0 0.0
      %1768 = vmatmul.mubr.f32.gmra.mrb[0].mxu0 %v1685
      %v1769 = vpop.f32.mrb[0].mxu0
      %v1770 = vadd.f32 0.0, %v1769
      %v1771 = vpop.f32.mrb[0].mxu0
      %1772 = vdwg.mxu0
      %v1773 = vmul.f32 %v1760, 0.25
      %v1774 = vmul.f32 %v1765, 0.25
      %v1775 = vmul.f32 %v1770, 0.25
      %v1776 = vsel %vm552, %v1773, -inf
      %1777 = vmax.xlane.f32.xlu0 %v1776
      %v1778 = vpop.xlane.xlu0 %1777
      %v1779 = vsel %vm552, %v1774, -inf
      %1780 = vmax.xlane.f32.xlu0 %v1779
      %v1781 = vpop.xlane.xlu0 %1780
      %v1782 = vsel %vm559, %v1775, -inf
      %1783 = vmax.xlane.f32.xlu0 %v1782
      %v1784 = vpop.xlane.xlu0 %1783
      %v1785 = vsub.f32 %v1773, %v1778
      %v1786 = vsub.f32 %v1774, %v1781
      %v1787 = vsub.f32 %v1775, %v1784
      %v1788 = vmul.f32 %v1785, 1.442695
      %v1789 = vpow.pop %v1788
      %v1790 = vmul.f32 %v1786, 1.442695
      %v1791 = vpow.pop %v1790
      %v1792 = vmul.f32 %v1787, 1.442695
      %v1793 = vpow.pop %v1792
      %v1794 = vsel %vm552, %v1789, 0.0
      %1795 = vadd.xlane.f32.xlu0 %v1794
      %v1796 = vpop.xlane.xlu0 %1795
      %v1797 = vsel %vm552, %v1791, 0.0
      %1798 = vadd.xlane.f32.xlu0 %v1797
      %v1799 = vpop.xlane.xlu0 %1798
      %v1800 = vsel %vm559, %v1793, 0.0
      %1801 = vadd.xlane.f32.xlu0 %v1800
      %v1802 = vpop.xlane.xlu0 %1801
      %v1803 = vrcp.pop %v1796
      %v1804 = vrcp.pop %v1799
      %v1805 = vrcp.pop %v1802
      %v1806 = vmul.f32 %v1789, %v1803
      %v1807 = vmul.f32 %v1791, %v1804
      %v1808 = vmul.f32 %v1793, %v1805
      %1809 = vrot.lane.b32.xlu0 %v1420, 48
      %v1810 = vpop.permute.xlu0 %1809
      %1811 = vrot.lane.b32.xlu0 %v1423, 48
      %v1812 = vpop.permute.xlu0 %1811
      %1813 = vrot.lane.b32.xlu0 %v1428, 48
      %v1814 = vpop.permute.xlu0 %1813
      %v1818 = vsel %vm552, %v1806, 0
      %v1821 = vsel %vm552, %v1807, 0
      %v1824 = vsel %vm552, %v1808, 0
      %v1826 = vsel %vm279, %v1814, 0
      %1828 = vmatprep.subr.mxu0 0.0
      %1829 = vmatpush1.msra.mxu0 %v1810
      %1830 = vmatprep.subr.mxu0 0.0
      %1831 = vmatpush1.msra.mxu0 %v1812
      %1832 = vmatprep.subr.mxu0 0.0
      %1833 = vmatpush1.msra.mxu0 %v1826
      %1834 = vmatprep.subr.mxu0 0.0
      %1835 = vmatpush1.msra.mxu0 0.0
      %1836 = vmatprep.subr.mxu0 0.0
      %1837 = vmatpush1.msra.mxu0 0.0
      %1838 = vmatprep.subr.mxu0 0.0
      %1839 = vmatpush1.msra.mxu0 0.0
      %1840 = vmatprep.subr.mxu0 0.0
      %1841 = vmatpush1.msra.mxu0 0.0
      %1842 = vmatprep.subr.mxu0 0.0
      %1843 = vmatpush1.msra.mxu0 0.0
      %1844 = vmatprep.subr.mxu0 0.0
      %1845 = vmatpush1.msra.mxu0 0.0
      %1846 = vmatprep.subr.mxu0 0.0
      %1847 = vmatpush1.msra.mxu0 0.0
      %1848 = vmatprep.subr.mxu0 0.0
      %1849 = vmatpush1.msra.mxu0 0.0
      %1850 = vmatprep.subr.mxu0 0.0
      %1851 = vmatpush1.msra.mxu0 0.0
      %1852 = vmatprep.subr.mxu0 0.0
      %1853 = vmatpush1.msra.mxu0 0.0
      %1854 = vmatprep.subr.mxu0 0.0
      %1855 = vmatpush1.msra.mxu0 0.0
      %1856 = vmatprep.subr.mxu0 0.0
      %1857 = vmatpush1.msra.mxu0 0.0
      %1858 = vmatprep.subr.mxu0 0.0
      %1859 = vmatpush1.msra.mxu0 0.0
      %1860 = vmatprep.subr.mxu0 0.0
      %1861 = vmatpush1.msra.mxu0 0.0
      %1862 = vmatprep.subr.mxu0 0.0
      %1863 = vmatpush1.msra.mxu0 0.0
      %1864 = vmatprep.subr.mxu0 0.0
      %1865 = vmatpush1.msra.mxu0 0.0
      %1866 = vmatprep.subr.mxu0 0.0
      %1867 = vmatpush1.msra.mxu0 0.0
      %1868 = vmatprep.subr.mxu0 0.0
      %1869 = vmatpush1.msra.mxu0 0.0
      %1870 = vmatprep.subr.mxu0 0.0
      %1871 = vmatpush1.msra.mxu0 0.0
      %1872 = vmatprep.subr.mxu0 0.0
      %1873 = vmatpush1.msra.mxu0 0.0
      %1874 = vmatprep.subr.mxu0 0.0
      %1875 = vmatpush1.msra.mxu0 0.0
      %1876 = vmatprep.subr.mxu0 0.0
      %1877 = vmatpush1.msra.mxu0 0.0
      %1878 = vmatprep.subr.mxu0 0.0
      %1879 = vmatpush1.msra.mxu0 0.0
      %1880 = vmatprep.subr.mxu0 0.0
      %1881 = vmatpush1.msra.mxu0 0.0
      %1882 = vmatprep.subr.mxu0 0.0
      %1883 = vmatpush1.msra.mxu0 0.0
      %1884 = vmatprep.subr.mxu0 0.0
      %1885 = vmatpush1.msra.mxu0 0.0
      %1886 = vmatprep.subr.mxu0 0.0
      %1887 = vmatpush1.msra.mxu0 0.0
      %1888 = vmatprep.subr.mxu0 0.0
      %1889 = vmatpush1.msra.mxu0 0.0
      %1890 = vmatprep.subr.mxu0 0.0
      %1891 = vmatpush1.msra.mxu0 0.0
      %1892 = vmatprep.mubr.f32.mxu0 0.0
      %1893 = vmatmul.mubr.f32.gmra.mrb[0].mxu0 %v1818
      %v1894 = vpop.f32.mrb[0].mxu0
      %v1895 = vadd.f32 0.0, %v1894
      %v1896 = vpop.f32.mrb[0].mxu0
      %1897 = vmatprep.mubr.f32.mxu0 0.0
      %1898 = vmatmul.mubr.f32.gmra.mrb[0].mxu0 %v1821
      %v1899 = vpop.f32.mrb[0].mxu0
      %v1900 = vadd.f32 0.0, %v1899
      %v1901 = vpop.f32.mrb[0].mxu0
      %1902 = vmatprep.mubr.f32.mxu0 0.0
      %1903 = vmatmul.mubr.f32.gmra.mrb[0].mxu0 %v1824
      %v1904 = vpop.f32.mrb[0].mxu0
      %v1905 = vadd.f32 0.0, %v1904
      %v1906 = vpop.f32.mrb[0].mxu0
      %1907 = vdwg.mxu0
      %1911 = vrot.lane.b32.xlu0 %v1895, 16
      %v1912 = vpop.permute.xlu0 %1911
      %1913 = vrot.lane.b32.xlu0 %v1900, 16
      %v1914 = vpop.permute.xlu0 %1913
      %1915 = vrot.lane.b32.xlu0 %v1905, 16
      %v1916 = vpop.permute.xlu0 %1915
      %v1920 = vsel %vm456, %v1656, %v1912
      %v1921 = vsel %vm456, %v1661, %v1914
      %v1922 = vsel %vm456, %v1666, %v1916
      %v1923 = vpack.c.bf16 %v1921, %v1920
      %v1924 = vpack.c.bf16 %v1922, %v1922
      %v1929 = vunpack.c.l.b16 %v1283
      %v1930 = vunpack.c.l.b16 %v1284
      %v1931 = vunpack.c.l.b16 %v1285
      %v1932 = vunpack.c.l.b16 %v1286
      %v1933 = vpack.c.b16 %v1930, %v1929
      %v1934 = vpack.c.b16 %v1932, %v1931
      %v1938 = vsel %vm319, %v1923, 0
      %v1941 = vsel %vm319, %v1924, 0
      %1943 = vmatprep.subr.bf16.mxu0 0
      %1944 = vmatpush1.bf16.msra.mxu0 %v1933
      %1945 = vmatprep.subr.bf16.mxu0 0
      %1946 = vmatpush1.bf16.msra.mxu0 %v1934
      %1947 = vmatprep.subr.bf16.mxu0 0
      %1948 = vmatpush1.bf16.msra.mxu0 0
      %1949 = vmatprep.subr.bf16.mxu0 0
      %1950 = vmatpush1.bf16.msra.mxu0 0
      %1951 = vmatprep.subr.bf16.mxu0 0
      %1952 = vmatpush1.bf16.msra.mxu0 0
      %1953 = vmatprep.subr.bf16.mxu0 0
      %1954 = vmatpush1.bf16.msra.mxu0 0
      %1955 = vmatprep.subr.bf16.mxu0 0
      %1956 = vmatpush1.bf16.msra.mxu0 0
      %1957 = vmatprep.subr.bf16.mxu0 0
      %1958 = vmatpush1.bf16.msra.mxu0 0
      %1959 = vmatprep.subr.bf16.mxu0 0
      %1960 = vmatpush1.bf16.msra.mxu0 0
      %1961 = vmatprep.subr.bf16.mxu0 0
      %1962 = vmatpush1.bf16.msra.mxu0 0
      %1963 = vmatprep.subr.bf16.mxu0 0
      %1964 = vmatpush1.bf16.msra.mxu0 0
      %1965 = vmatprep.subr.bf16.mxu0 0
      %1966 = vmatpush1.bf16.msra.mxu0 0
      %1967 = vmatprep.subr.bf16.mxu0 0
      %1968 = vmatpush1.bf16.msra.mxu0 0
      %1969 = vmatprep.subr.bf16.mxu0 0
      %1970 = vmatpush1.bf16.msra.mxu0 0
      %1971 = vmatprep.subr.bf16.mxu0 0
      %1972 = vmatpush1.bf16.msra.mxu0 0
      %1973 = vmatprep.subr.bf16.mxu0 0
      %1974 = vmatpush1.bf16.msra.mxu0 0
      %1975 = vmatprep.mubr.bf16.mxu0 0
      %1976 = vmatmul.mubr.bf16.gmra.mrb[0].mxu0 %v1938
      %v1977 = vpop.f32.mrb[0].mxu0
      %v1978 = vadd.f32 0.0, %v1977
      %v1979 = vpop.f32.mrb[0].mxu0
      %v1980 = vpop.f32.mrb[0].mxu0
      %v1981 = vadd.f32 0.0, %v1980
      %v1982 = vpop.f32.mrb[0].mxu0
      %1983 = vmatprep.mubr.bf16.mxu0 0
      %1984 = vmatmul.mubr.bf16.gmra.mrb[0].mxu0 %v1941
      %v1985 = vpop.f32.mrb[0].mxu0
      %v1986 = vadd.f32 0.0, %v1985
      %v1987 = vpop.f32.mrb[0].mxu0
      %v1988 = vpop.f32.mrb[0].mxu0
      %v1989 = vpop.f32.mrb[0].mxu0
      %1990 = vdwg.mxu0
      %v1991 = vadd.f32 %v1275, %v1978
      %v1992 = vadd.f32 %v1276, %v1981
      %v1993 = vadd.f32 %v1277, %v1986
      %v1994 = vlaneseq
      %v1995 = vshrl.u32 %v1994, 7
      %v1996 = vsub.s32 3, %v1995
      %v1997 = vrot.slane %v1307, %v1996
      %v1998 = vadd.f32 %v1991, %v1997
      %v1999 = vadd.f32 %v1992, %v1997
      %v2000 = vadd.f32 %v1993, %v1997
      %v2001 = vsel %vm319, %v1998, 0.0
      %2002 = vadd.xlane.f32.xlu0 %v2001
      %v2003 = vpop.xlane.xlu0 %2002
      %v2004 = vsel %vm319, %v1999, 0.0
      %2005 = vadd.xlane.f32.xlu0 %v2004
      %v2006 = vpop.xlane.xlu0 %2005
      %v2007 = vsel %vm326, %v2000, 0.0
      %2008 = vadd.xlane.f32.xlu0 %v2007
      %v2009 = vpop.xlane.xlu0 %2008
      %v2010 = vmul.f32 %v2003, %v330
      %v2011 = vmul.f32 %v2006, %v330
      %v2012 = vmul.f32 %v2009, %v330
      %v2013 = vsub.f32 %v1998, %v2010
      %v2014 = vsub.f32 %v1999, %v2011
      %v2015 = vsub.f32 %v2000, %v2012
      %v2016 = vmul.f32 %v2013, %v2013
      %v2017 = vmul.f32 %v2014, %v2014
      %v2018 = vmul.f32 %v2015, %v2015
      %v2019 = vsel %vm319, %v2016, 0.0
      %2020 = vadd.xlane.f32.xlu0 %v2019
      %v2021 = vpop.xlane.xlu0 %2020
      %v2022 = vsel %vm319, %v2017, 0.0
      %2023 = vadd.xlane.f32.xlu0 %v2022
      %v2024 = vpop.xlane.xlu0 %2023
      %v2025 = vsel %vm326, %v2018, 0.0
      %2026 = vadd.xlane.f32.xlu0 %v2025
      %v2027 = vpop.xlane.xlu0 %2026
      %v2028 = vmul.f32 %v2021, %v330
      %v2029 = vmul.f32 %v2024, %v330
      %v2030 = vmul.f32 %v2027, %v330
      %v2031 = vadd.f32 %v2028, 1e-12
      %v2032 = vadd.f32 %v2029, 1e-12
      %v2033 = vadd.f32 %v2030, 1e-12
      %v2034 = vrsqrt.pop %v2031
      %v2035 = vrsqrt.pop %v2032
      %v2036 = vrsqrt.pop %v2033
      %v2037 = vmul.f32 %v2013, %v2034
      %v2038 = vmul.f32 %v2014, %v2035
      %v2039 = vmul.f32 %v2015, %v2036
      %v2040 = vlaneseq
      %v2041 = vshrl.u32 %v2040, 7
      %v2042 = vsub.s32 4, %v2041
      %v2043 = vrot.slane %v1307, %v2042
      %v2044 = vmul.f32 %v2037, %v2043
      %v2045 = vmul.f32 %v2038, %v2043
      %v2046 = vmul.f32 %v2039, %v2043
      %v2047 = vlaneseq
      %v2048 = vshrl.u32 %v2047, 7
      %v2049 = vsub.s32 5, %v2048
      %v2050 = vrot.slane %v1307, %v2049
      %v2051 = vadd.f32 %v2044, %v2050
      %v2052 = vadd.f32 %v2045, %v2050
      %v2053 = vadd.f32 %v2046, %v2050
      %v2054 = vpack.c.bf16 %v2052, %v2051
      %v2055 = vpack.c.bf16 %v2053, %v2053
      %v2056 = vlaneseq
      %v2057 = vshrl.u32 %v2056, 7
      %v2058 = vsub.s32 6, %v2057
      %v2059 = vrot.slane %v1307, %v2058
      %v2064 = vunpack.c.l.b16 %v1287
      %v2065 = vunpack.c.l.b16 %v1288
      %v2066 = vunpack.c.l.b16 %v1289
      %v2067 = vunpack.c.l.b16 %v1290
      %v2068 = vpack.c.b16 %v2065, %v2064
      %v2069 = vpack.c.b16 %v2067, %v2066
      %v2073 = vsel %vm319, %v2054, 0
      %v2076 = vsel %vm319, %v2055, 0
      %2078 = vmatprep.subr.bf16.mxu0 0
      %2079 = vmatpush1.bf16.msra.mxu0 %v2068
      %2080 = vmatprep.subr.bf16.mxu0 0
      %2081 = vmatpush1.bf16.msra.mxu0 %v2069
      %2082 = vmatprep.subr.bf16.mxu0 0
      %2083 = vmatpush1.bf16.msra.mxu0 0
      %2084 = vmatprep.subr.bf16.mxu0 0
      %2085 = vmatpush1.bf16.msra.mxu0 0
      %2086 = vmatprep.subr.bf16.mxu0 0
      %2087 = vmatpush1.bf16.msra.mxu0 0
      %2088 = vmatprep.subr.bf16.mxu0 0
      %2089 = vmatpush1.bf16.msra.mxu0 0
      %2090 = vmatprep.subr.bf16.mxu0 0
      %2091 = vmatpush1.bf16.msra.mxu0 0
      %2092 = vmatprep.subr.bf16.mxu0 0
      %2093 = vmatpush1.bf16.msra.mxu0 0
      %2094 = vmatprep.subr.bf16.mxu0 0
      %2095 = vmatpush1.bf16.msra.mxu0 0
      %2096 = vmatprep.subr.bf16.mxu0 0
      %2097 = vmatpush1.bf16.msra.mxu0 0
      %2098 = vmatprep.subr.bf16.mxu0 0
      %2099 = vmatpush1.bf16.msra.mxu0 0
      %2100 = vmatprep.subr.bf16.mxu0 0
      %2101 = vmatpush1.bf16.msra.mxu0 0
      %2102 = vmatprep.subr.bf16.mxu0 0
      %2103 = vmatpush1.bf16.msra.mxu0 0
      %2104 = vmatprep.subr.bf16.mxu0 0
      %2105 = vmatpush1.bf16.msra.mxu0 0
      %2106 = vmatprep.subr.bf16.mxu0 0
      %2107 = vmatpush1.bf16.msra.mxu0 0
      %2108 = vmatprep.subr.bf16.mxu0 0
      %2109 = vmatpush1.bf16.msra.mxu0 0
      %2110 = vmatprep.mubr.bf16.mxu0 0
      %2111 = vmatmul.mubr.bf16.gmra.mrb[0].mxu0 %v2073
      %v2112 = vpop.f32.mrb[0].mxu0
      %v2113 = vadd.f32 %v2059, %v2112
      %v2114 = vpop.f32.mrb[0].mxu0
      %v2115 = vpop.f32.mrb[0].mxu0
      %v2116 = vadd.f32 %v2059, %v2115
      %v2117 = vpop.f32.mrb[0].mxu0
      %2118 = vmatprep.mubr.bf16.mxu0 0
      %2119 = vmatmul.mubr.bf16.gmra.mrb[0].mxu0 %v2076
      %v2120 = vpop.f32.mrb[0].mxu0
      %v2121 = vadd.f32 %v2059, %v2120
      %v2122 = vpop.f32.mrb[0].mxu0
      %v2123 = vpop.f32.mrb[0].mxu0
      %v2124 = vpop.f32.mrb[0].mxu0
      %2125 = vdwg.mxu0
      %v2126 = vmul.f32 %v2113, 0.5
      %v2127 = vmul.f32 %v2116, 0.5
      %v2128 = vmul.f32 %v2121, 0.5
      %v2129 = vmul.f32 %v2113, 0.044715
      %v2130 = vmul.f32 %v2116, 0.044715
      %v2131 = vmul.f32 %v2121, 0.044715
      %v2132 = vmul.f32 %v2129, %v2113
      %v2133 = vmul.f32 %v2130, %v2116
      %v2134 = vmul.f32 %v2131, %v2121
      %v2135 = vmul.f32 %v2132, %v2113
      %v2136 = vmul.f32 %v2133, %v2116
      %v2137 = vmul.f32 %v2134, %v2121
      %v2138 = vadd.f32 %v2113, %v2135
      %v2139 = vadd.f32 %v2116, %v2136
      %v2140 = vadd.f32 %v2121, %v2137
      %v2141 = vmul.f32 %v2138, 0.7978846
      %v2142 = vmul.f32 %v2139, 0.7978846
      %v2143 = vmul.f32 %v2140, 0.7978846
      %v2144 = vtanh.pop %v2141
      %v2145 = vtanh.pop %v2142
      %v2146 = vtanh.pop %v2143
      %v2147 = vadd.f32 %v2144, 1.0
      %v2148 = vadd.f32 %v2145, 1.0
      %v2149 = vadd.f32 %v2146, 1.0
      %v2150 = vmul.f32 %v2126, %v2147
      %v2151 = vmul.f32 %v2127, %v2148
      %v2152 = vmul.f32 %v2128, %v2149
      %v2153 = vpack.c.bf16 %v2151, %v2150
      %v2154 = vpack.c.bf16 %v2152, %v2152
      %v2171 = vunpack.c.l.b16 %v1291
      %v2172 = vunpack.c.l.b16 %v1292
      %v2173 = vunpack.c.l.b16 %v1293
      %v2174 = vunpack.c.l.b16 %v1294
      %v2175 = vunpack.c.l.b16 %v1295
      %v2176 = vunpack.c.l.b16 %v1296
      %v2177 = vunpack.c.l.b16 %v1297
      %v2178 = vunpack.c.l.b16 %v1298
      %v2179 = vunpack.c.l.b16 %v1299
      %v2180 = vunpack.c.l.b16 %v1300
      %v2181 = vunpack.c.l.b16 %v1301
      %v2182 = vunpack.c.l.b16 %v1302
      %v2183 = vunpack.c.l.b16 %v1303
      %v2184 = vunpack.c.l.b16 %v1304
      %v2185 = vunpack.c.l.b16 %v1305
      %v2186 = vunpack.c.l.b16 %v1306
      %v2187 = vpack.c.b16 %v2172, %v2171
      %v2188 = vpack.c.b16 %v2174, %v2173
      %v2189 = vpack.c.b16 %v2176, %v2175
      %v2190 = vpack.c.b16 %v2178, %v2177
      %v2191 = vpack.c.b16 %v2180, %v2179
      %v2192 = vpack.c.b16 %v2182, %v2181
      %v2193 = vpack.c.b16 %v2184, %v2183
      %v2194 = vpack.c.b16 %v2186, %v2185
      %2203 = vmatprep.subr.bf16.mxu0 0
      %2204 = vmatpush1.bf16.msra.mxu0 %v2187
      %2205 = vmatprep.subr.bf16.mxu0 0
      %2206 = vmatpush1.bf16.msra.mxu0 %v2188
      %2207 = vmatprep.subr.bf16.mxu0 0
      %2208 = vmatpush1.bf16.msra.mxu0 %v2189
      %2209 = vmatprep.subr.bf16.mxu0 0
      %2210 = vmatpush1.bf16.msra.mxu0 %v2190
      %2211 = vmatprep.subr.bf16.mxu0 0
      %2212 = vmatpush1.bf16.msra.mxu0 %v2191
      %2213 = vmatprep.subr.bf16.mxu0 0
      %2214 = vmatpush1.bf16.msra.mxu0 %v2192
      %2215 = vmatprep.subr.bf16.mxu0 0
      %2216 = vmatpush1.bf16.msra.mxu0 %v2193
      %2217 = vmatprep.subr.bf16.mxu0 0
      %2218 = vmatpush1.bf16.msra.mxu0 %v2194
      %2219 = vmatprep.subr.bf16.mxu0 0
      %2220 = vmatpush1.bf16.msra.mxu0 0
      %2221 = vmatprep.subr.bf16.mxu0 0
      %2222 = vmatpush1.bf16.msra.mxu0 0
      %2223 = vmatprep.subr.bf16.mxu0 0
      %2224 = vmatpush1.bf16.msra.mxu0 0
      %2225 = vmatprep.subr.bf16.mxu0 0
      %2226 = vmatpush1.bf16.msra.mxu0 0
      %2227 = vmatprep.subr.bf16.mxu0 0
      %2228 = vmatpush1.bf16.msra.mxu0 0
      %2229 = vmatprep.subr.bf16.mxu0 0
      %2230 = vmatpush1.bf16.msra.mxu0 0
      %2231 = vmatprep.subr.bf16.mxu0 0
      %2232 = vmatpush1.bf16.msra.mxu0 0
      %2233 = vmatprep.subr.bf16.mxu0 0
      %2234 = vmatpush1.bf16.msra.mxu0 0
      %2235 = vmatprep.mubr.bf16.mxu0 0
      %2236 = vmatmul.mubr.bf16.gmra.mrb[0].mxu0 %v2153
      %v2237 = vpop.f32.mrb[0].mxu0
      %v2238 = vadd.f32 0.0, %v2237
      %v2239 = vpop.f32.mrb[0].mxu0
      %v2240 = vpop.f32.mrb[0].mxu0
      %v2241 = vpop.f32.mrb[0].mxu0
      %2242 = vmatprep.mubr.bf16.mxu0 0
      %2243 = vmatmul.mubr.bf16.gmra.mrb[0].mxu0 %v2154
      %v2244 = vpop.f32.mrb[0].mxu0
      %v2245 = vpop.f32.mrb[0].mxu0
      %v2246 = vpop.f32.mrb[0].mxu0
      %v2247 = vpop.f32.mrb[0].mxu0
      %2248 = vdwg.mxu0
      %v2249 = vadd.f32 %v1998, %v2238
      %v2250 = vlaneseq
      %v2251 = vshrl.u32 %v2250, 7
      %v2252 = vsub.s32 7, %v2251
      %v2253 = vrot.slane %v1307, %v2252
      %v2254 = vadd.f32 %v2249, %v2253
      %v2255 = vsel %vm326, %v2254, 0.0
      %2256 = vadd.xlane.f32.xlu0 %v2255
      %v2257 = vpop.xlane.xlu0 %2256
      %v2258 = vmul.f32 %v2257, %v330
      %v2259 = vsub.f32 %v2254, %v2258
      %v2260 = vmul.f32 %v2259, %v2259
      %v2261 = vsel %vm326, %v2260, 0.0
      %2262 = vadd.xlane.f32.xlu0 %v2261
      %v2263 = vpop.xlane.xlu0 %2262
      %v2264 = vmul.f32 %v2263, %v330
      %v2265 = vadd.f32 %v2264, 1e-12
      %v2266 = vrsqrt.pop %v2265
      %v2267 = vmul.f32 %v2259, %v2266
      %v2268 = vmul.f32 %v2267, %v208
      %v2269 = vadd.f32 %v2268, %v209
      %v2270 = vpack.c.bf16 %v2269, %v2269
      %v2275 = vunpack.c.l.b16 %v201
      %v2276 = vunpack.c.l.b16 %v202
      %v2277 = vunpack.c.l.b16 %v203
      %v2278 = vunpack.c.l.b16 %v204
      %v2279 = vpack.c.b16 %v2276, %v2275
      %v2280 = vpack.c.b16 %v2278, %v2277
      %v2284 = vsel %vm319, %v2270, 0
      %2286 = vmatprep.subr.bf16.mxu0 0
      %2287 = vmatpush1.bf16.msra.mxu0 %v2279
      %2288 = vmatprep.subr.bf16.mxu0 0
      %2289 = vmatpush1.bf16.msra.mxu0 %v2280
      %2290 = vmatprep.subr.bf16.mxu0 0
      %2291 = vmatpush1.bf16.msra.mxu0 0
      %2292 = vmatprep.subr.bf16.mxu0 0
      %2293 = vmatpush1.bf16.msra.mxu0 0
      %2294 = vmatprep.subr.bf16.mxu0 0
      %2295 = vmatpush1.bf16.msra.mxu0 0
      %2296 = vmatprep.subr.bf16.mxu0 0
      %2297 = vmatpush1.bf16.msra.mxu0 0
      %2298 = vmatprep.subr.bf16.mxu0 0
      %2299 = vmatpush1.bf16.msra.mxu0 0
      %2300 = vmatprep.subr.bf16.mxu0 0
      %2301 = vmatpush1.bf16.msra.mxu0 0
      %2302 = vmatprep.subr.bf16.mxu0 0
      %2303 = vmatpush1.bf16.msra.mxu0 0
      %2304 = vmatprep.subr.bf16.mxu0 0
      %2305 = vmatpush1.bf16.msra.mxu0 0
      %2306 = vmatprep.subr.bf16.mxu0 0
      %2307 = vmatpush1.bf16.msra.mxu0 0
      %2308 = vmatprep.subr.bf16.mxu0 0
      %2309 = vmatpush1.bf16.msra.mxu0 0
      %2310 = vmatprep.subr.bf16.mxu0 0
      %2311 = vmatpush1.bf16.msra.mxu0 0
      %2312 = vmatprep.subr.bf16.mxu0 0
      %2313 = vmatpush1.bf16.msra.mxu0 0
      %2314 = vmatprep.subr.bf16.mxu0 0
      %2315 = vmatpush1.bf16.msra.mxu0 0
      %2316 = vmatprep.subr.bf16.mxu0 0
      %2317 = vmatpush1.bf16.msra.mxu0 0
      %2318 = vmatprep.mubr.bf16.mxu0 0
      %2319 = vmatmul.mubr.bf16.gmra.mrb[0].mxu0 %v2284
      %v2320 = vpop.f32.mrb[0].mxu0
      %v2321 = vadd.f32 %v210, %v2320
      %v2322 = vpop.f32.mrb[0].mxu0
      %v2323 = vpop.f32.mrb[0].mxu0
      %v2324 = vpop.f32.mrb[0].mxu0
      %2325 = vdwg.mxu0
      %2326 = vst [vmem:[%s193] sm:$0x1] %v2321
      %p2327 = scmp.lt.s32.totalorder %s15, 1
      %s2328 = scalar_select %p2327, %s15, 1
      %s2329 = scalar_lea.vmem %s4, %s2328
      // Predicated region
      $region37: #{vit_forward.1} parent=35 // pred_check
        %p2330 = pneg %p122
      $region38: #{vit_forward.1} parent=35 // pred_check_branch
        %2332 = sbr.rel (%p2330) target = $region40
      $region39: #{vit_forward.1} parent=35 // pred_region
        _
      $region40: #{vit_forward.1} parent=35 // pred_fallthru
        _
    $region36: #{vit_forward.1} parent=5 // pred_fallthru
      _
    %p2333 = scmp.le.s32.totalorder 2, %s10
    // Predicated region
    $region41: #{vit_forward.1} parent=5 // pred_check
      %p2334 = pneg %p2333
    $region42: #{vit_forward.1} parent=5 // pred_check_branch
      %2336 = sbr.rel (%p2334) target = $region44
    $region43: #{vit_forward.1} parent=5 // pred_region
      %s2337 = ssub.s32 %s10, 2
      // Predicated region
      $region45: #{vit_forward.1} parent=43 // pred_check
        %p2338 = pneg %p128
      $region46: #{vit_forward.1} parent=43 // pred_check_branch
        %2340 = sbr.rel (%p2338) target = $region48
      $region47: #{vit_forward.1} parent=43 // pred_region
        %p2341 = scmp.lt.s32.totalorder %s16, 1
        %s2342 = scalar_select %p2341, %s16, 1
        %s2343 = scalar_lea.vmem %s4, %s2342
      $region48: #{vit_forward.1} parent=43 // pred_fallthru
        _
    $region44: #{vit_forward.1} parent=5 // pred_fallthru
      _
  $region6: #{vit_forward.1} parent=0 // loop_footer
    %s14 = sadd.s32 1, %s10
  $region7: #{vit_forward.1} parent=0 // loop_footer_branch
    %9 = sbr.rel target = $region3
  $region8: #{vit_forward.1} parent=0 // loop_exit
    _

// kernel: vit_forward.1
$region0: #{vit_forward.1}
  #allocation0 [shape = 'u32[]', space=smem, size = 0x4, offset = 0x4, fixed_abs, tag = 'smem constant byte address 0x4 - core index']
  #allocation1 [shape = 'u32[144,128]{1,0:T(1,128)}', space=vmem, size = 0x12000, scoped, tag = 'internal scratch']
  %s0 = inlined_call_operand.vmem [shape: f32[2,16,48], index: 0, kind: input, shape index: {}]
  %s1 = inlined_call_operand.vmem [shape: bf16[80,128], index: 1, kind: input, shape index: {}]
  %s2 = inlined_call_operand.vmem [shape: bf16[2,224,128], index: 2, kind: input, shape index: {}]
  %s3 = inlined_call_operand.vmem [shape: f32[40,128], index: 3, kind: input, shape index: {}]
  %s4 = inlined_call_operand.vmem [shape: f32[2,1,128], index: 4, kind: output, shape index: {}]
  %s5 = sld [smem:[#allocation0]]
  $region49: #{vit_forward.1} parent=0
    _
  %s7 = ssub.s32 1, %s5
  %s8 = scalar_select 0, %s7, %s5
  loop: start=0, step=1, limit=4
  $region2: #{vit_forward.1} parent=0 // loop_pre_header
    _
  $region3: #{vit_forward.1} parent=0 // loop_header
    %s10 = sphi 0, %s14
    %p11 = scmp.ge.s32.totalorder %s10, 4
    %s20 = sphi 0, %s22
    %s23 = sphi 0, %s20
    %s24 = sphi 0, %s23
    %s40 = sphi 0, %s24
    %s44 = sphi 0, %s44
    %s46 = sphi 0, %s44
    %s47 = sphi 0, %s46
    %s61 = sphi 0, %s47
    %s65 = sphi 0, %s65
    %s67 = sphi 0, %s65
    %s68 = sphi 0, %s67
    %s82 = sphi 0, %s68
    %s86 = sphi 0, %s86
    %s88 = sphi 0, %s86
    %s89 = sphi 0, %s88
    %s103 = sphi 0, %s89
    %s109 = sphi 0, %s111
    %s112 = sphi 0, %s109
    %s113 = sphi 0, %s112
    %s129 = sphi 0, %s113
  $region4: #{vit_forward.1} parent=0 // loop_header_branch
    %13 = sbr.rel (%p11) target = $region8
  $region5: #{vit_forward.1} parent=0 // loop_body
    %s15 = ssub.s32 %s10, 1
    %s16 = ssub.s32 %s10, 2
    %s17 = sadd.s32 %s10, 1
    %s18 = ssub.s32 %s10, %s17
    %p19 = scmp.eq.s32.totalorder %s18, 0
    %s21 = sadd.s32 %s20, 1
    %s22 = scalar_select %p19, %s20, %s21
    %p25 = pneg %p19
    %p26 = scmp.eq.s32.totalorder %s10, 1
    %p27 = por %p25, %p26
    %p28 = scmp.ne.s32.totalorder %s20, %s23
    %p29 = scmp.eq.s32.totalorder %s10, 0
    %p30 = por %p28, %p29
    %p31 = scmp.ne.s32.totalorder %s20, %s23
    %p32 = scmp.eq.s32.totalorder %s15, 1
    %p33 = por %p31, %p32
    %p34 = scmp.ne.s32.totalorder %s23, %s24
    %p35 = scmp.eq.s32.totalorder %s15, 0
    %p36 = por %p34, %p35
    %p37 = scmp.ne.s32.totalorder %s23, %s24
    %p38 = scmp.eq.s32.totalorder %s16, 1
    %p39 = por %p37, %p38
    %p41 = scmp.ne.s32.totalorder %s24, %s40
    %p42 = scmp.eq.s32.totalorder %s16, 0
    %p43 = por %p41, %p42
    %s45 = sadd.s32 %s44, 1
    %p48 = scmp.eq.s32.totalorder %s10, 1
    %p49 = scmp.ne.s32.totalorder %s44, %s46
    %p50 = scmp.eq.s32.totalorder %s10, 0
    %p51 = por %p49, %p50
    %p52 = scmp.ne.s32.totalorder %s44, %s46
    %p53 = scmp.eq.s32.totalorder %s15, 1
    %p54 = por %p52, %p53
    %p55 = scmp.ne.s32.totalorder %s46, %s47
    %p56 = scmp.eq.s32.totalorder %s15, 0
    %p57 = por %p55, %p56
    %p58 = scmp.ne.s32.totalorder %s46, %s47
    %p59 = scmp.eq.s32.totalorder %s16, 1
    %p60 = por %p58, %p59
    %p62 = scmp.ne.s32.totalorder %s47, %s61
    %p63 = scmp.eq.s32.totalorder %s16, 0
    %p64 = por %p62, %p63
    %s66 = sadd.s32 %s65, 1
    %p69 = scmp.eq.s32.totalorder %s10, 1
    %p70 = scmp.ne.s32.totalorder %s65, %s67
    %p71 = scmp.eq.s32.totalorder %s10, 0
    %p72 = por %p70, %p71
    %p73 = scmp.ne.s32.totalorder %s65, %s67
    %p74 = scmp.eq.s32.totalorder %s15, 1
    %p75 = por %p73, %p74
    %p76 = scmp.ne.s32.totalorder %s67, %s68
    %p77 = scmp.eq.s32.totalorder %s15, 0
    %p78 = por %p76, %p77
    %p79 = scmp.ne.s32.totalorder %s67, %s68
    %p80 = scmp.eq.s32.totalorder %s16, 1
    %p81 = por %p79, %p80
    %p83 = scmp.ne.s32.totalorder %s68, %s82
    %p84 = scmp.eq.s32.totalorder %s16, 0
    %p85 = por %p83, %p84
    %s87 = sadd.s32 %s86, 1
    %p90 = scmp.eq.s32.totalorder %s10, 1
    %p91 = scmp.ne.s32.totalorder %s86, %s88
    %p92 = scmp.eq.s32.totalorder %s10, 0
    %p93 = por %p91, %p92
    %p94 = scmp.ne.s32.totalorder %s86, %s88
    %p95 = scmp.eq.s32.totalorder %s15, 1
    %p96 = por %p94, %p95
    %p97 = scmp.ne.s32.totalorder %s88, %s89
    %p98 = scmp.eq.s32.totalorder %s15, 0
    %p99 = por %p97, %p98
    %p100 = scmp.ne.s32.totalorder %s88, %s89
    %p101 = scmp.eq.s32.totalorder %s16, 1
    %p102 = por %p100, %p101
    %p104 = scmp.ne.s32.totalorder %s89, %s103
    %p105 = scmp.eq.s32.totalorder %s16, 0
    %p106 = por %p104, %p105
    %s107 = ssub.s32 %s10, %s17
    %p108 = scmp.eq.s32.totalorder %s107, 0
    %s110 = sadd.s32 %s109, 1
    %s111 = scalar_select %p108, %s109, %s110
    %p114 = pneg %p108
    %p115 = scmp.eq.s32.totalorder %s10, 1
    %p116 = por %p114, %p115
    %p117 = scmp.ne.s32.totalorder %s109, %s112
    %p118 = scmp.eq.s32.totalorder %s10, 0
    %p119 = por %p117, %p118
    %p120 = scmp.ne.s32.totalorder %s109, %s112
    %p121 = scmp.eq.s32.totalorder %s15, 1
    %p122 = por %p120, %p121
    %p123 = scmp.ne.s32.totalorder %s112, %s113
    %p124 = scmp.eq.s32.totalorder %s15, 0
    %p125 = por %p123, %p124
    %p126 = scmp.ne.s32.totalorder %s112, %s113
    %p127 = scmp.eq.s32.totalorder %s16, 1
    %p128 = por %p126, %p127
    %p130 = scmp.ne.s32.totalorder %s113, %s129
    %p131 = scmp.eq.s32.totalorder %s16, 0
    %p132 = por %p130, %p131
    %p133 = scmp.le.s32.totalorder 1, %s10
    %p134 = scmp.lt.s32.totalorder %s10, 3
    %p135 = pnand %p133, %p134
    %p136 = pneg %p135
    // Predicated region
    $region9: #{vit_forward.1} parent=5 // pred_check
      _
    $region10: #{vit_forward.1} parent=5 // pred_check_branch
      %138 = sbr.rel (%p135) target = $region12
    $region11: #{vit_forward.1} parent=5 // pred_region
      %s139 = ssub.s32 %s10, 1
      // Predicated region
      $region13: #{vit_forward.1} parent=11 // pred_check
        %p140 = pneg %p57
      $region14: #{vit_forward.1} parent=11 // pred_check_branch
        %142 = sbr.rel (%p140) target = $region16
      $region15: #{vit_forward.1} parent=11 // pred_region
        _
      $region16: #{vit_forward.1} parent=11 // pred_fallthru
        _
      // Predicated region
      $region17: #{vit_forward.1} parent=11 // pred_check
        %p143 = pneg %p78
      $region18: #{vit_forward.1} parent=11 // pred_check_branch
        %145 = sbr.rel (%p143) target = $region20
      $region19: #{vit_forward.1} parent=11 // pred_region
        _
      $region20: #{vit_forward.1} parent=11 // pred_fallthru
        _
      // Predicated region
      $region21: #{vit_forward.1} parent=11 // pred_check
        %p146 = pneg %p99
      $region22: #{vit_forward.1} parent=11 // pred_check_branch
        %148 = sbr.rel (%p146) target = $region24
      $region23: #{vit_forward.1} parent=11 // pred_region
        _
      $region24: #{vit_forward.1} parent=11 // pred_fallthru
        _
    $region12: #{vit_forward.1} parent=5 // pred_fallthru
      _
    %p149 = scmp.lt.s32.totalorder %s10, 2
    // Predicated region
    $region25: #{vit_forward.1} parent=5 // pred_check
      %p150 = pneg %p149
    $region26: #{vit_forward.1} parent=5 // pred_check_branch
      %152 = sbr.rel (%p150) target = $region28
    $region27: #{vit_forward.1} parent=5 // pred_region
      // Predicated region
      $region29: #{vit_forward.1} parent=27 // pred_check
        %p153 = pneg %p30
      $region30: #{vit_forward.1} parent=27 // pred_check_branch
        %155 = sbr.rel (%p153) target = $region32
      $region31: #{vit_forward.1} parent=27 // pred_region
        %p156 = scmp.lt.s32.totalorder %s10, 1
        %s157 = scalar_select %p156, %s10, 1
        %s158 = smul.addr %s157, 2
        %s159 = smul.addr %s158, 8
        %s160 = scalar_lea.vmem %s0, %s159
      $region32: #{vit_forward.1} parent=27 // pred_fallthru
        _
    $region28: #{vit_forward.1} parent=5 // pred_fallthru
      _
    %p161 = scmp.le.s32.totalorder 1, %s10
    %p162 = scmp.lt.s32.totalorder %s10, 3
    %p163 = pnand %p161, %p162
    %p164 = pneg %p163
    // Predicated region
    $region33: #{vit_forward.1} parent=5 // pred_check
      _
    $region34: #{vit_forward.1} parent=5 // pred_check_branch
      %166 = sbr.rel (%p163) target = $region36
    $region35: #{vit_forward.1} parent=5 // pred_region
      %s167 = ssub.s32 %s10, 1
      %p168 = scmp.lt.s32.totalorder %s15, 1
      %s169 = scalar_select %p168, %s15, 1
      %s170 = smul.addr %s169, 2
      %s171 = smul.addr %s170, 8
      %s172 = scalar_lea.vmem %s0, %s171
      %p173 = pneg %p36
      %p174 = pneg %p33
      %p175 = pneg %p57
      %p176 = pneg %p54
      %p177 = pneg %p78
      %p178 = pneg %p75
      %p179 = pneg %p99
      %p180 = pneg %p96
      %p181 = pneg %p125
      %p182 = pneg %p122
      %p183 = scmp.lt.s32.totalorder %s15, 1
      %s184 = scalar_select %p183, %s15, 1
      %s185 = scalar_lea.vmem %s4, %s184
      %p186 = scmp.lt.s32.totalorder %s15, 1
      %s187 = scalar_select %p186, %s15, 1
      %s188 = smul.addr %s187, 2
      %s189 = smul.addr %s188, 8
      %s190 = scalar_lea.vmem %s0, %s189
      %p191 = scmp.lt.s32.totalorder %s15, 1
      %s192 = scalar_select %p191, %s15, 1
      %s193 = scalar_lea.vmem %s4, %s192
      %v195 = vld [vmem:[%s1] sm:$0xf]
      %v196 = vld [vmem:[%s1 + $0x4] sm:$0xf]
      %v197 = vld [vmem:[%s1 + $0x8] sm:$0xf]
      %v198 = vld [vmem:[%s1 + $0xc] sm:$0xf]
      %v199 = vld [vmem:[%s1 + $0x10] sm:$0xf]
      %v200 = vld [vmem:[%s1 + $0x14] sm:$0xf]
      %v201 = vld [vmem:[%s1 + $0x18] sm:$0xf]
      %v202 = vld [vmem:[%s1 + $0x1c] sm:$0xf]
      %v203 = vld [vmem:[%s1 + $0x20] sm:$0xf]
      %v204 = vld [vmem:[%s1 + $0x24] sm:$0xf]
      %v205 = vld [vmem:[%s3] sm:$0xff]
      %v206 = vld [vmem:[%s3 + $0x8] sm:$0xff]
      %v207 = vld [vmem:[%s3 + $0x10] sm:$0x1]
      %v208 = vld [vmem:[%s3 + $0x11] sm:$0x1]
      %v209 = vld [vmem:[%s3 + $0x12] sm:$0x1]
      %v210 = vld [vmem:[%s3 + $0x13] sm:$0x1]
      %v211 = vld [vmem:[%s190] sm:$0xff]
      %v212 = vld [vmem:[%s190 + $0x8] sm:$0xff]
      %v213 = vpack.c.bf16 %v212, %v211
      %v220 = vunpack.c.l.b16 %v195
      %v221 = vunpack.c.l.b16 %v196
      %v222 = vunpack.c.l.b16 %v197
      %v223 = vunpack.c.l.b16 %v198
      %v224 = vunpack.c.l.b16 %v199
      %v225 = vunpack.c.l.b16 %v200
      %v226 = vpack.c.b16 %v221, %v220
      %v227 = vpack.c.b16 %v223, %v222
      %v228 = vpack.c.b16 %v225, %v224
      %vm232 = vcmask 392192
      %v234 = vsel %vm232, %v213, 0
      %236 = vmatprep.subr.bf16.mxu0 0
      %237 = vmatpush1.bf16.msra.mxu0 %v226
      %238 = vmatprep.subr.bf16.mxu0 0
      %239 = vmatpush1.bf16.msra.mxu0 %v227
      %240 = vmatprep.subr.bf16.mxu0 0
      %241 = vmatpush1.bf16.msra.mxu0 %v228
      %242 = vmatprep.subr.bf16.mxu0 0
      %243 = vmatpush1.bf16.msra.mxu0 0
      %244 = vmatprep.subr.bf16.mxu0 0
      %245 = vmatpush1.bf16.msra.mxu0 0
      %246 = vmatprep.subr.bf16.mxu0 0
      %247 = vmatpush1.bf16.msra.mxu0 0
      %248 = vmatprep.subr.bf16.mxu0 0
      %249 = vmatpush1.bf16.msra.mxu0 0
      %250 = vmatprep.subr.bf16.mxu0 0
      %251 = vmatpush1.bf16.msra.mxu0 0
      %252 = vmatprep.subr.bf16.mxu0 0
      %253 = vmatpush1.bf16.msra.mxu0 0
      %254 = vmatprep.subr.bf16.mxu0 0
      %255 = vmatpush1.bf16.msra.mxu0 0
      %256 = vmatprep.subr.bf16.mxu0 0
      %257 = vmatpush1.bf16.msra.mxu0 0
      %258 = vmatprep.subr.bf16.mxu0 0
      %259 = vmatpush1.bf16.msra.mxu0 0
      %260 = vmatprep.subr.bf16.mxu0 0
      %261 = vmatpush1.bf16.msra.mxu0 0
      %262 = vmatprep.subr.bf16.mxu0 0
      %263 = vmatpush1.bf16.msra.mxu0 0
      %264 = vmatprep.subr.bf16.mxu0 0
      %265 = vmatpush1.bf16.msra.mxu0 0
      %266 = vmatprep.subr.bf16.mxu0 0
      %267 = vmatpush1.bf16.msra.mxu0 0
      %268 = vmatprep.mubr.bf16.mxu0 0
      %269 = vmatmul.mubr.bf16.gmra.mrb[0].mxu0 %v234
      %v270 = vpop.f32.mrb[0].mxu0
      %v271 = vadd.f32 0.0, %v270
      %v272 = vpop.f32.mrb[0].mxu0
      %v273 = vpop.f32.mrb[0].mxu0
      %v274 = vadd.f32 0.0, %v273
      %v275 = vpop.f32.mrb[0].mxu0
      %276 = vdwg.mxu0
      %vm279 = vcmask 1040384
      %v280 = vrot.slane %v271, 7
      %v281 = vrot.slane %v274, 7
      %v282 = vsel %vm279, %v280, %v281
      %v286 = vsel %vm279, 0.0, %v280
      %v287 = vadd.f32 %v286, %v205
      %v288 = vadd.f32 %v282, %v206
      %v289 = vadd.f32 %v281, %v207
      %v290 = vld [vmem:[%s2] sm:$0xf]
      %v291 = vld [vmem:[%s2 + $0x4] sm:$0xf]
      %v292 = vld [vmem:[%s2 + $0x8] sm:$0xf]
      %v293 = vld [vmem:[%s2 + $0xc] sm:$0xf]
      %v294 = vld [vmem:[%s2 + $0x10] sm:$0xf]
      %v295 = vld [vmem:[%s2 + $0x14] sm:$0xf]
      %v296 = vld [vmem:[%s2 + $0x18] sm:$0xf]
      %v297 = vld [vmem:[%s2 + $0x1c] sm:$0xf]
      %v298 = vld [vmem:[%s2 + $0x20] sm:$0xf]
      %v299 = vld [vmem:[%s2 + $0x24] sm:$0xf]
      %v300 = vld [vmem:[%s2 + $0x28] sm:$0xf]
      %v301 = vld [vmem:[%s2 + $0x2c] sm:$0xf]
      %v302 = vld [vmem:[%s2 + $0x30] sm:$0xf]
      %v303 = vld [vmem:[%s2 + $0x34] sm:$0xf]
      %v304 = vld [vmem:[%s2 + $0x38] sm:$0xf]
      %v305 = vld [vmem:[%s2 + $0x3c] sm:$0xf]
      %v306 = vld [vmem:[%s2 + $0x40] sm:$0xf]
      %v307 = vld [vmem:[%s2 + $0x44] sm:$0xf]
      %v308 = vld [vmem:[%s2 + $0x48] sm:$0xf]
      %v309 = vld [vmem:[%s2 + $0x4c] sm:$0xf]
      %v310 = vld [vmem:[%s2 + $0x50] sm:$0xf]
      %v311 = vld [vmem:[%s2 + $0x54] sm:$0xf]
      %v312 = vld [vmem:[%s2 + $0x58] sm:$0xf]
      %v313 = vld [vmem:[%s2 + $0x5c] sm:$0xf]
      %v314 = vld [vmem:[%s2 + $0x60] sm:$0xf]
      %v315 = vld [vmem:[%s2 + $0x64] sm:$0xf]
      %v316 = vld [vmem:[%s2 + $0x68] sm:$0xf]
      %v317 = vld [vmem:[%s2 + $0x6c] sm:$0xf]
      %v318 = vld [vmem:[%s3 + $0x14] sm:$0xff]
      %vm319 = vcmask 261120
      %v320 = vsel %vm319, %v287, 0.0
      %321 = vadd.xlane.f32.xlu0 %v320
      %v322 = vpop.xlane.xlu0 %321
      %v323 = vsel %vm319, %v288, 0.0
      %324 = vadd.xlane.f32.xlu0 %v323
      %v325 = vpop.xlane.xlu0 %324
      %vm326 = vcmask 253952
      %v327 = vsel %vm326, %v289, 0.0
      %328 = vadd.xlane.f32.xlu0 %v327
      %v329 = vpop.xlane.xlu0 %328
      %v330 = vrcp.pop 32.0
      %v331 = vmul.f32 %v322, %v330
      %v332 = vmul.f32 %v325, %v330
      %v333 = vmul.f32 %v329, %v330
      %v334 = vsub.f32 %v287, %v331
      %v335 = vsub.f32 %v288, %v332
      %v336 = vsub.f32 %v289, %v333
      %v337 = vmul.f32 %v334, %v334
      %v338 = vmul.f32 %v335, %v335
      %v339 = vmul.f32 %v336, %v336
      %v340 = vsel %vm319, %v337, 0.0
      %341 = vadd.xlane.f32.xlu0 %v340
      %v342 = vpop.xlane.xlu0 %341
      %v343 = vsel %vm319, %v338, 0.0
      %344 = vadd.xlane.f32.xlu0 %v343
      %v345 = vpop.xlane.xlu0 %344
      %v346 = vsel %vm326, %v339, 0.0
      %347 = vadd.xlane.f32.xlu0 %v346
      %v348 = vpop.xlane.xlu0 %347
      %v349 = vmul.f32 %v342, %v330
      %v350 = vmul.f32 %v345, %v330
      %v351 = vmul.f32 %v348, %v330
      %v352 = vadd.f32 %v349, 1e-12
      %v353 = vadd.f32 %v350, 1e-12
      %v354 = vadd.f32 %v351, 1e-12
      %v355 = vrsqrt.pop %v352
      %v356 = vrsqrt.pop %v353
      %v357 = vrsqrt.pop %v354
      %v358 = vmul.f32 %v334, %v355
      %v359 = vmul.f32 %v335, %v356
      %v360 = vmul.f32 %v336, %v357
      %v361 = vlaneseq
      %v362 = vshrl.u32 %v361, 7
      %v363 = vsub.s32 0, %v362
      %v364 = vrot.slane %v318, %v363
      %v365 = vmul.f32 %v358, %v364
      %v366 = vmul.f32 %v359, %v364
      %v367 = vmul.f32 %v360, %v364
      %v368 = vlaneseq
      %v369 = vshrl.u32 %v368, 7
      %v370 = vsub.s32 1, %v369
      %v371 = vrot.slane %v318, %v370
      %v372 = vadd.f32 %v365, %v371
      %v373 = vadd.f32 %v366, %v371
      %v374 = vadd.f32 %v367, %v371
      %v375 = vpack.c.bf16 %v373, %v372
      %v376 = vpack.c.bf16 %v374, %v374
      %v377 = vlaneseq
      %v378 = vshrl.u32 %v377, 7
      %v379 = vsub.s32 2, %v378
      %v380 = vrot.slane %v318, %v379
      %v385 = vunpack.c.l.b16 %v290
      %v386 = vunpack.c.l.b16 %v291
      %v387 = vunpack.c.l.b16 %v292
      %v388 = vunpack.c.l.b16 %v293
      %v389 = vpack.c.b16 %v386, %v385
      %v390 = vpack.c.b16 %v388, %v387
      %v394 = vsel %vm319, %v375, 0
      %v397 = vsel %vm319, %v376, 0
      %399 = vmatprep.subr.bf16.mxu0 0
      %400 = vmatpush1.bf16.msra.mxu0 %v389
      %401 = vmatprep.subr.bf16.mxu0 0
      %402 = vmatpush1.bf16.msra.mxu0 %v390
      %403 = vmatprep.subr.bf16.mxu0 0
      %404 = vmatpush1.bf16.msra.mxu0 0
      %405 = vmatprep.subr.bf16.mxu0 0
      %406 = vmatpush1.bf16.msra.mxu0 0
      %407 = vmatprep.subr.bf16.mxu0 0
      %408 = vmatpush1.bf16.msra.mxu0 0
      %409 = vmatprep.subr.bf16.mxu0 0
      %410 = vmatpush1.bf16.msra.mxu0 0
      %411 = vmatprep.subr.bf16.mxu0 0
      %412 = vmatpush1.bf16.msra.mxu0 0
      %413 = vmatprep.subr.bf16.mxu0 0
      %414 = vmatpush1.bf16.msra.mxu0 0
      %415 = vmatprep.subr.bf16.mxu0 0
      %416 = vmatpush1.bf16.msra.mxu0 0
      %417 = vmatprep.subr.bf16.mxu0 0
      %418 = vmatpush1.bf16.msra.mxu0 0
      %419 = vmatprep.subr.bf16.mxu0 0
      %420 = vmatpush1.bf16.msra.mxu0 0
      %421 = vmatprep.subr.bf16.mxu0 0
      %422 = vmatpush1.bf16.msra.mxu0 0
      %423 = vmatprep.subr.bf16.mxu0 0
      %424 = vmatpush1.bf16.msra.mxu0 0
      %425 = vmatprep.subr.bf16.mxu0 0
      %426 = vmatpush1.bf16.msra.mxu0 0
      %427 = vmatprep.subr.bf16.mxu0 0
      %428 = vmatpush1.bf16.msra.mxu0 0
      %429 = vmatprep.subr.bf16.mxu0 0
      %430 = vmatpush1.bf16.msra.mxu0 0
      %431 = vmatprep.mubr.bf16.mxu0 0
      %432 = vmatmul.mubr.bf16.gmra.mrb[0].mxu0 %v394
      %v433 = vpop.f32.mrb[0].mxu0
      %v434 = vadd.f32 %v380, %v433
      %v435 = vpop.f32.mrb[0].mxu0
      %v436 = vpop.f32.mrb[0].mxu0
      %v437 = vadd.f32 %v380, %v436
      %v438 = vpop.f32.mrb[0].mxu0
      %439 = vmatprep.mubr.bf16.mxu0 0
      %440 = vmatmul.mubr.bf16.gmra.mrb[0].mxu0 %v397
      %v441 = vpop.f32.mrb[0].mxu0
      %v442 = vadd.f32 %v380, %v441
      %v443 = vpop.f32.mrb[0].mxu0
      %v444 = vpop.f32.mrb[0].mxu0
      %v445 = vpop.f32.mrb[0].mxu0
      %446 = vdwg.mxu0
      %450 = vrot.lane.b32.xlu0 %v434, 96
      %v451 = vpop.permute.xlu0 %450
      %452 = vrot.lane.b32.xlu0 %v437, 96
      %v453 = vpop.permute.xlu0 %452
      %454 = vrot.lane.b32.xlu0 %v442, 96
      %v455 = vpop.permute.xlu0 %454
      %vm456 = vcmask 130048
      %v457 = vsel %vm456, %v434, 0
      %v459 = vsel %vm456, %v437, 0
      %v461 = vsel %vm456, %v442, 0
      %v463 = vsel %vm456, %v451, 0
      %v465 = vsel %vm456, %v453, 0
      %v467 = vsel %vm456, %v455, 0
      %469 = vmatprep.subr.mxu0 0.0
      %470 = vmatpush1.xpose.msra.mxu0 %v463
      %471 = vmatprep.subr.mxu0 0.0
      %472 = vmatpush1.xpose.msra.mxu0 %v465
      %473 = vmatprep.subr.mxu0 0.0
      %474 = vmatpush1.xpose.msra.mxu0 %v467
      %475 = vmatprep.subr.mxu0 0.0
      %476 = vmatpush1.xpose.msra.mxu0 0.0
      %477 = vmatprep.subr.mxu0 0.0
      %478 = vmatpush1.xpose.msra.mxu0 0.0
      %479 = vmatprep.subr.mxu0 0.0
      %480 = vmatpush1.xpose.msra.mxu0 0.0
      %481 = vmatprep.subr.mxu0 0.0
      %482 = vmatpush1.xpose.msra.mxu0 0.0
      %483 = vmatprep.subr.mxu0 0.0
      %484 = vmatpush1.xpose.msra.mxu0 0.0
      %485 = vmatprep.subr.mxu0 0.0
      %486 = vmatpush1.xpose.msra.mxu0 0.0
      %487 = vmatprep.subr.mxu0 0.0
      %488 = vmatpush1.xpose.msra.mxu0 0.0
      %489 = vmatprep.subr.mxu0 0.0
      %490 = vmatpush1.xpose.msra.mxu0 0.0
      %491 = vmatprep.subr.mxu0 0.0
      %492 = vmatpush1.xpose.msra.mxu0 0.0
      %493 = vmatprep.subr.mxu0 0.0
      %494 = vmatpush1.xpose.msra.mxu0 0.0
      %495 = vmatprep.subr.mxu0 0.0
      %496 = vmatpush1.xpose.msra.mxu0 0.0
      %497 = vmatprep.subr.mxu0 0.0
      %498 = vmatpush1.xpose.msra.mxu0 0.0
      %499 = vmatprep.subr.mxu0 0.0
      %500 = vmatpush1.xpose.msra.mxu0 0.0
      %501 = vmatprep.subr.mxu0 0.0
      %502 = vmatpush1.xpose.msra.mxu0 0.0
      %503 = vmatprep.subr.mxu0 0.0
      %504 = vmatpush1.xpose.msra.mxu0 0.0
      %505 = vmatprep.subr.mxu0 0.0
      %506 = vmatpush1.xpose.msra.mxu0 0.0
      %507 = vmatprep.subr.mxu0 0.0
      %508 = vmatpush1.xpose.msra.mxu0 0.0
      %509 = vmatprep.subr.mxu0 0.0
      %510 = vmatpush1.xpose.msra.mxu0 0.0
      %511 = vmatprep.subr.mxu0 0.0
      %512 = vmatpush1.xpose.msra.mxu0 0.0
      %513 = vmatprep.subr.mxu0 0.0
      %514 = vmatpush1.xpose.msra.mxu0 0.0
      %515 = vmatprep.subr.mxu0 0.0
      %516 = vmatpush1.xpose.msra.mxu0 0.0
      %517 = vmatprep.subr.mxu0 0.0
      %518 = vmatpush1.xpose.msra.mxu0 0.0
      %519 = vmatprep.subr.mxu0 0.0
      %520 = vmatpush1.xpose.msra.mxu0 0.0
      %521 = vmatprep.subr.mxu0 0.0
      %522 = vmatpush1.xpose.msra.mxu0 0.0
      %523 = vmatprep.subr.mxu0 0.0
      %524 = vmatpush1.xpose.msra.mxu0 0.0
      %525 = vmatprep.subr.mxu0 0.0
      %526 = vmatpush1.xpose.msra.mxu0 0.0
      %527 = vmatprep.subr.mxu0 0.0
      %528 = vmatpush1.xpose.msra.mxu0 0.0
      %529 = vmatprep.subr.mxu0 0.0
      %530 = vmatpush1.xpose.msra.mxu0 0.0
      %531 = vmatprep.subr.mxu0 0.0
      %532 = vmatpush1.xpose.msra.mxu0 0.0
      %533 = vmatprep.mubr.f32.mxu0 0.0
      %534 = vmatmul.mubr.f32.gmra.mrb[0].mxu0 %v457
      %v535 = vpop.f32.mrb[0].mxu0
      %v536 = vadd.f32 0.0, %v535
      %v537 = vpop.f32.mrb[0].mxu0
      %538 = vmatprep.mubr.f32.mxu0 0.0
      %539 = vmatmul.mubr.f32.gmra.mrb[0].mxu0 %v459
      %v540 = vpop.f32.mrb[0].mxu0
      %v541 = vadd.f32 0.0, %v540
      %v542 = vpop.f32.mrb[0].mxu0
      %543 = vmatprep.mubr.f32.mxu0 0.0
      %544 = vmatmul.mubr.f32.gmra.mrb[0].mxu0 %v461
      %v545 = vpop.f32.mrb[0].mxu0
      %v546 = vadd.f32 0.0, %v545
      %v547 = vpop.f32.mrb[0].mxu0
      %548 = vdwg.mxu0
      %v549 = vmul.f32 %v536, 0.25
      %v550 = vmul.f32 %v541, 0.25
      %v551 = vmul.f32 %v546, 0.25
      %vm552 = vcmask 138240
      %v553 = vsel %vm552, %v549, -inf
      %554 = vmax.xlane.f32.xlu0 %v553
      %v555 = vpop.xlane.xlu0 %554
      %v556 = vsel %vm552, %v550, -inf
      %557 = vmax.xlane.f32.xlu0 %v556
      %v558 = vpop.xlane.xlu0 %557
      %vm559 = vcmask 131072
      %v560 = vsel %vm559, %v551, -inf
      %561 = vmax.xlane.f32.xlu0 %v560
      %v562 = vpop.xlane.xlu0 %561
      %v563 = vsub.f32 %v549, %v555
      %v564 = vsub.f32 %v550, %v558
      %v565 = vsub.f32 %v551, %v562
      %v566 = vmul.f32 %v563, 1.442695
      %v567 = vpow.pop %v566
      %v568 = vmul.f32 %v564, 1.442695
      %v569 = vpow.pop %v568
      %v570 = vmul.f32 %v565, 1.442695
      %v571 = vpow.pop %v570
      %v572 = vsel %vm552, %v567, 0.0
      %573 = vadd.xlane.f32.xlu0 %v572
      %v574 = vpop.xlane.xlu0 %573
      %v575 = vsel %vm552, %v569, 0.0
      %576 = vadd.xlane.f32.xlu0 %v575
      %v577 = vpop.xlane.xlu0 %576
      %v578 = vsel %vm559, %v571, 0.0
      %579 = vadd.xlane.f32.xlu0 %v578
      %v580 = vpop.xlane.xlu0 %579
      %v581 = vrcp.pop %v574
      %v582 = vrcp.pop %v577
      %v583 = vrcp.pop %v580
      %v584 = vmul.f32 %v567, %v581
      %v585 = vmul.f32 %v569, %v582
      %v586 = vmul.f32 %v571, %v583
      %587 = vrot.lane.b32.xlu0 %v434, 64
      %v588 = vpop.permute.xlu0 %587
      %589 = vrot.lane.b32.xlu0 %v437, 64
      %v590 = vpop.permute.xlu0 %589
      %591 = vrot.lane.b32.xlu0 %v442, 64
      %v592 = vpop.permute.xlu0 %591
      %v596 = vsel %vm552, %v584, 0
      %v599 = vsel %vm552, %v585, 0
      %v602 = vsel %vm552, %v586, 0
      %v604 = vsel %vm279, %v592, 0
      %606 = vmatprep.subr.mxu0 0.0
      %607 = vmatpush1.msra.mxu0 %v588
      %608 = vmatprep.subr.mxu0 0.0
      %609 = vmatpush1.msra.mxu0 %v590
      %610 = vmatprep.subr.mxu0 0.0
      %611 = vmatpush1.msra.mxu0 %v604
      %612 = vmatprep.subr.mxu0 0.0
      %613 = vmatpush1.msra.mxu0 0.0
      %614 = vmatprep.subr.mxu0 0.0
      %615 = vmatpush1.msra.mxu0 0.0
      %616 = vmatprep.subr.mxu0 0.0
      %617 = vmatpush1.msra.mxu0 0.0
      %618 = vmatprep.subr.mxu0 0.0
      %619 = vmatpush1.msra.mxu0 0.0
      %620 = vmatprep.subr.mxu0 0.0
      %621 = vmatpush1.msra.mxu0 0.0
      %622 = vmatprep.subr.mxu0 0.0
      %623 = vmatpush1.msra.mxu0 0.0
      %624 = vmatprep.subr.mxu0 0.0
      %625 = vmatpush1.msra.mxu0 0.0
      %626 = vmatprep.subr.mxu0 0.0
      %627 = vmatpush1.msra.mxu0 0.0
      %628 = vmatprep.subr.mxu0 0.0
      %629 = vmatpush1.msra.mxu0 0.0
      %630 = vmatprep.subr.mxu0 0.0
      %631 = vmatpush1.msra.mxu0 0.0
      %632 = vmatprep.subr.mxu0 0.0
      %633 = vmatpush1.msra.mxu0 0.0
      %634 = vmatprep.subr.mxu0 0.0
      %635 = vmatpush1.msra.mxu0 0.0
      %636 = vmatprep.subr.mxu0 0.0
      %637 = vmatpush1.msra.mxu0 0.0
      %638 = vmatprep.subr.mxu0 0.0
      %639 = vmatpush1.msra.mxu0 0.0
      %640 = vmatprep.subr.mxu0 0.0
      %641 = vmatpush1.msra.mxu0 0.0
      %642 = vmatprep.subr.mxu0 0.0
      %643 = vmatpush1.msra.mxu0 0.0
      %644 = vmatprep.subr.mxu0 0.0
      %645 = vmatpush1.msra.mxu0 0.0
      %646 = vmatprep.subr.mxu0 0.0
      %647 = vmatpush1.msra.mxu0 0.0
      %648 = vmatprep.subr.mxu0 0.0
      %649 = vmatpush1.msra.mxu0 0.0
      %650 = vmatprep.subr.mxu0 0.0
      %651 = vmatpush1.msra.mxu0 0.0
      %652 = vmatprep.subr.mxu0 0.0
      %653 = vmatpush1.msra.mxu0 0.0
      %654 = vmatprep.subr.mxu0 0.0
      %655 = vmatpush1.msra.mxu0 0.0
      %656 = vmatprep.subr.mxu0 0.0
      %657 = vmatpush1.msra.mxu0 0.0
      %658 = vmatprep.subr.mxu0 0.0
      %659 = vmatpush1.msra.mxu0 0.0
      %660 = vmatprep.subr.mxu0 0.0
      %661 = vmatpush1.msra.mxu0 0.0
      %662 = vmatprep.subr.mxu0 0.0
      %663 = vmatpush1.msra.mxu0 0.0
      %664 = vmatprep.subr.mxu0 0.0
      %665 = vmatpush1.msra.mxu0 0.0
      %666 = vmatprep.subr.mxu0 0.0
      %667 = vmatpush1.msra.mxu0 0.0
      %668 = vmatprep.subr.mxu0 0.0
      %669 = vmatpush1.msra.mxu0 0.0
      %670 = vmatprep.mubr.f32.mxu0 0.0
      %671 = vmatmul.mubr.f32.gmra.mrb[0].mxu0 %v596
      %v672 = vpop.f32.mrb[0].mxu0
      %v673 = vadd.f32 0.0, %v672
      %v674 = vpop.f32.mrb[0].mxu0
      %675 = vmatprep.mubr.f32.mxu0 0.0
      %676 = vmatmul.mubr.f32.gmra.mrb[0].mxu0 %v599
      %v677 = vpop.f32.mrb[0].mxu0
      %v678 = vadd.f32 0.0, %v677
      %v679 = vpop.f32.mrb[0].mxu0
      %680 = vmatprep.mubr.f32.mxu0 0.0
      %681 = vmatmul.mubr.f32.gmra.mrb[0].mxu0 %v602
      %v682 = vpop.f32.mrb[0].mxu0
      %v683 = vadd.f32 0.0, %v682
      %v684 = vpop.f32.mrb[0].mxu0
      %685 = vdwg.mxu0
      %686 = vrot.lane.b32.xlu0 %v434, 112
      %v687 = vpop.permute.xlu0 %686
      %688 = vrot.lane.b32.xlu0 %v437, 112
      %v689 = vpop.permute.xlu0 %688
      %690 = vrot.lane.b32.xlu0 %v442, 112
      %v691 = vpop.permute.xlu0 %690
      %692 = vrot.lane.b32.xlu0 %v434, 80
      %v693 = vpop.permute.xlu0 %692
      %694 = vrot.lane.b32.xlu0 %v437, 80
      %v695 = vpop.permute.xlu0 %694
      %696 = vrot.lane.b32.xlu0 %v442, 80
      %v697 = vpop.permute.xlu0 %696
      %v698 = vsel %vm456, %v687, 0
      %v700 = vsel %vm456, %v689, 0
      %v702 = vsel %vm456, %v691, 0
      %v704 = vsel %vm456, %v693, 0
      %v706 = vsel %vm456, %v695, 0
      %v708 = vsel %vm456, %v697, 0
      %710 = vmatprep.subr.mxu0 0.0
      %711 = vmatpush1.xpose.msra.mxu0 %v704
      %712 = vmatprep.subr.mxu0 0.0
      %713 = vmatpush1.xpose.msra.mxu0 %v706
      %714 = vmatprep.subr.mxu0 0.0
      %715 = vmatpush1.xpose.msra.mxu0 %v708
      %716 = vmatprep.subr.mxu0 0.0
      %717 = vmatpush1.xpose.msra.mxu0 0.0
      %718 = vmatprep.subr.mxu0 0.0
      %719 = vmatpush1.xpose.msra.mxu0 0.0
      %720 = vmatprep.subr.mxu0 0.0
      %721 = vmatpush1.xpose.msra.mxu0 0.0
      %722 = vmatprep.subr.mxu0 0.0
      %723 = vmatpush1.xpose.msra.mxu0 0.0
      %724 = vmatprep.subr.mxu0 0.0
      %725 = vmatpush1.xpose.msra.mxu0 0.0
      %726 = vmatprep.subr.mxu0 0.0
      %727 = vmatpush1.xpose.msra.mxu0 0.0
      %728 = vmatprep.subr.mxu0 0.0
      %729 = vmatpush1.xpose.msra.mxu0 0.0
      %730 = vmatprep.subr.mxu0 0.0
      %731 = vmatpush1.xpose.msra.mxu0 0.0
      %732 = vmatprep.subr.mxu0 0.0
      %733 = vmatpush1.xpose.msra.mxu0 0.0
      %734 = vmatprep.subr.mxu0 0.0
      %735 = vmatpush1.xpose.msra.mxu0 0.0
      %736 = vmatprep.subr.mxu0 0.0
      %737 = vmatpush1.xpose.msra.mxu0 0.0
      %738 = vmatprep.subr.mxu0 0.0
      %739 = vmatpush1.xpose.msra.mxu0 0.0
      %740 = vmatprep.subr.mxu0 0.0
      %741 = vmatpush1.xpose.msra.mxu0 0.0
      %742 = vmatprep.subr.mxu0 0.0
      %743 = vmatpush1.xpose.msra.mxu0 0.0
      %744 = vmatprep.subr.mxu0 0.0
      %745 = vmatpush1.xpose.msra.mxu0 0.0
      %746 = vmatprep.subr.mxu0 0.0
      %747 = vmatpush1.xpose.msra.mxu0 0.0
      %748 = vmatprep.subr.mxu0 0.0
      %749 = vmatpush1.xpose.msra.mxu0 0.0
      %750 = vmatprep.subr.mxu0 0.0
      %751 = vmatpush1.xpose.msra.mxu0 0.0
      %752 = vmatprep.subr.mxu0 0.0
      %753 = vmatpush1.xpose.msra.mxu0 0.0
      %754 = vmatprep.subr.mxu0 0.0
      %755 = vmatpush1.xpose.msra.mxu0 0.0
      %756 = vmatprep.subr.mxu0 0.0
      %757 = vmatpush1.xpose.msra.mxu0 0.0
      %758 = vmatprep.subr.mxu0 0.0
      %759 = vmatpush1.xpose.msra.mxu0 0.0
      %760 = vmatprep.subr.mxu0 0.0
      %761 = vmatpush1.xpose.msra.mxu0 0.0
      %762 = vmatprep.subr.mxu0 0.0
      %763 = vmatpush1.xpose.msra.mxu0 0.0
      %764 = vmatprep.subr.mxu0 0.0
      %765 = vmatpush1.xpose.msra.mxu0 0.0
      %766 = vmatprep.subr.mxu0 0.0
      %767 = vmatpush1.xpose.msra.mxu0 0.0
      %768 = vmatprep.subr.mxu0 0.0
      %769 = vmatpush1.xpose.msra.mxu0 0.0
      %770 = vmatprep.subr.mxu0 0.0
      %771 = vmatpush1.xpose.msra.mxu0 0.0
      %772 = vmatprep.subr.mxu0 0.0
      %773 = vmatpush1.xpose.msra.mxu0 0.0
      %774 = vmatprep.mubr.f32.mxu0 0.0
      %775 = vmatmul.mubr.f32.gmra.mrb[0].mxu0 %v698
      %v776 = vpop.f32.mrb[0].mxu0
      %v777 = vadd.f32 0.0, %v776
      %v778 = vpop.f32.mrb[0].mxu0
      %779 = vmatprep.mubr.f32.mxu0 0.0
      %780 = vmatmul.mubr.f32.gmra.mrb[0].mxu0 %v700
      %v781 = vpop.f32.mrb[0].mxu0
      %v782 = vadd.f32 0.0, %v781
      %v783 = vpop.f32.mrb[0].mxu0
      %784 = vmatprep.mubr.f32.mxu0 0.0
      %785 = vmatmul.mubr.f32.gmra.mrb[0].mxu0 %v702
      %v786 = vpop.f32.mrb[0].mxu0
      %v787 = vadd.f32 0.0, %v786
      %v788 = vpop.f32.mrb[0].mxu0
      %789 = vdwg.mxu0
      %v790 = vmul.f32 %v777, 0.25
      %v791 = vmul.f32 %v782, 0.25
      %v792 = vmul.f32 %v787, 0.25
      %v793 = vsel %vm552, %v790, -inf
      %794 = vmax.xlane.f32.xlu0 %v793
      %v795 = vpop.xlane.xlu0 %794
      %v796 = vsel %vm552, %v791, -inf
      %797 = vmax.xlane.f32.xlu0 %v796
      %v798 = vpop.xlane.xlu0 %797
      %v799 = vsel %vm559, %v792, -inf
      %800 = vmax.xlane.f32.xlu0 %v799
      %v801 = vpop.xlane.xlu0 %800
      %v802 = vsub.f32 %v790, %v795
      %v803 = vsub.f32 %v791, %v798
      %v804 = vsub.f32 %v792, %v801
      %v805 = vmul.f32 %v802, 1.442695
      %v806 = vpow.pop %v805
      %v807 = vmul.f32 %v803, 1.442695
      %v808 = vpow.pop %v807
      %v809 = vmul.f32 %v804, 1.442695
      %v810 = vpow.pop %v809
      %v811 = vsel %vm552, %v806, 0.0
      %812 = vadd.xlane.f32.xlu0 %v811
      %v813 = vpop.xlane.xlu0 %812
      %v814 = vsel %vm552, %v808, 0.0
      %815 = vadd.xlane.f32.xlu0 %v814
      %v816 = vpop.xlane.xlu0 %815
      %v817 = vsel %vm559, %v810, 0.0
      %818 = vadd.xlane.f32.xlu0 %v817
      %v819 = vpop.xlane.xlu0 %818
      %v820 = vrcp.pop %v813
      %v821 = vrcp.pop %v816
      %v822 = vrcp.pop %v819
      %v823 = vmul.f32 %v806, %v820
      %v824 = vmul.f32 %v808, %v821
      %v825 = vmul.f32 %v810, %v822
      %826 = vrot.lane.b32.xlu0 %v434, 48
      %v827 = vpop.permute.xlu0 %826
      %828 = vrot.lane.b32.xlu0 %v437, 48
      %v829 = vpop.permute.xlu0 %828
      %830 = vrot.lane.b32.xlu0 %v442, 48
      %v831 = vpop.permute.xlu0 %830
      %v835 = vsel %vm552, %v823, 0
      %v838 = vsel %vm552, %v824, 0
      %v841 = vsel %vm552, %v825, 0
      %v843 = vsel %vm279, %v831, 0
      %845 = vmatprep.subr.mxu0 0.0
      %846 = vmatpush1.msra.mxu0 %v827
      %847 = vmatprep.subr.mxu0 0.0
      %848 = vmatpush1.msra.mxu0 %v829
      %849 = vmatprep.subr.mxu0 0.0
      %850 = vmatpush1.msra.mxu0 %v843
      %851 = vmatprep.subr.mxu0 0.0
      %852 = vmatpush1.msra.mxu0 0.0
      %853 = vmatprep.subr.mxu0 0.0
      %854 = vmatpush1.msra.mxu0 0.0
      %855 = vmatprep.subr.mxu0 0.0
      %856 = vmatpush1.msra.mxu0 0.0
      %857 = vmatprep.subr.mxu0 0.0
      %858 = vmatpush1.msra.mxu0 0.0
      %859 = vmatprep.subr.mxu0 0.0
      %860 = vmatpush1.msra.mxu0 0.0
      %861 = vmatprep.subr.mxu0 0.0
      %862 = vmatpush1.msra.mxu0 0.0
      %863 = vmatprep.subr.mxu0 0.0
      %864 = vmatpush1.msra.mxu0 0.0
      %865 = vmatprep.subr.mxu0 0.0
      %866 = vmatpush1.msra.mxu0 0.0
      %867 = vmatprep.subr.mxu0 0.0
      %868 = vmatpush1.msra.mxu0 0.0
      %869 = vmatprep.subr.mxu0 0.0
      %870 = vmatpush1.msra.mxu0 0.0
      %871 = vmatprep.subr.mxu0 0.0
      %872 = vmatpush1.msra.mxu0 0.0
      %873 = vmatprep.subr.mxu0 0.0
      %874 = vmatpush1.msra.mxu0 0.0
      %875 = vmatprep.subr.mxu0 0.0
      %876 = vmatpush1.msra.mxu0 0.0
      %877 = vmatprep.subr.mxu0 0.0
      %878 = vmatpush1.msra.mxu0 0.0
      %879 = vmatprep.subr.mxu0 0.0
      %880 = vmatpush1.msra.mxu0 0.0
      %881 = vmatprep.subr.mxu0 0.0
      %882 = vmatpush1.msra.mxu0 0.0
      %883 = vmatprep.subr.mxu0 0.0
      %884 = vmatpush1.msra.mxu0 0.0
      %885 = vmatprep.subr.mxu0 0.0
      %886 = vmatpush1.msra.mxu0 0.0
      %887 = vmatprep.subr.mxu0 0.0
      %888 = vmatpush1.msra.mxu0 0.0
      %889 = vmatprep.subr.mxu0 0.0
      %890 = vmatpush1.msra.mxu0 0.0
      %891 = vmatprep.subr.mxu0 0.0
      %892 = vmatpush1.msra.mxu0 0.0
      %893 = vmatprep.subr.mxu0 0.0
      %894 = vmatpush1.msra.mxu0 0.0
      %895 = vmatprep.subr.mxu0 0.0
      %896 = vmatpush1.msra.mxu0 0.0
      %897 = vmatprep.subr.mxu0 0.0
      %898 = vmatpush1.msra.mxu0 0.0
      %899 = vmatprep.subr.mxu0 0.0
      %900 = vmatpush1.msra.mxu0 0.0
      %901 = vmatprep.subr.mxu0 0.0
      %902 = vmatpush1.msra.mxu0 0.0
      %903 = vmatprep.subr.mxu0 0.0
      %904 = vmatpush1.msra.mxu0 0.0
      %905 = vmatprep.subr.mxu0 0.0
      %906 = vmatpush1.msra.mxu0 0.0
      %907 = vmatprep.subr.mxu0 0.0
      %908 = vmatpush1.msra.mxu0 0.0
      %909 = vmatprep.mubr.f32.mxu0 0.0
      %910 = vmatmul.mubr.f32.gmra.mrb[0].mxu0 %v835
      %v911 = vpop.f32.mrb[0].mxu0
      %v912 = vadd.f32 0.0, %v911
      %v913 = vpop.f32.mrb[0].mxu0
      %914 = vmatprep.mubr.f32.mxu0 0.0
      %915 = vmatmul.mubr.f32.gmra.mrb[0].mxu0 %v838
      %v916 = vpop.f32.mrb[0].mxu0
      %v917 = vadd.f32 0.0, %v916
      %v918 = vpop.f32.mrb[0].mxu0
      %919 = vmatprep.mubr.f32.mxu0 0.0
      %920 = vmatmul.mubr.f32.gmra.mrb[0].mxu0 %v841
      %v921 = vpop.f32.mrb[0].mxu0
      %v922 = vadd.f32 0.0, %v921
      %v923 = vpop.f32.mrb[0].mxu0
      %924 = vdwg.mxu0
      %928 = vrot.lane.b32.xlu0 %v912, 16
      %v929 = vpop.permute.xlu0 %928
      %930 = vrot.lane.b32.xlu0 %v917, 16
      %v931 = vpop.permute.xlu0 %930
      %932 = vrot.lane.b32.xlu0 %v922, 16
      %v933 = vpop.permute.xlu0 %932
      %v937 = vsel %vm456, %v673, %v929
      %v938 = vsel %vm456, %v678, %v931
      %v939 = vsel %vm456, %v683, %v933
      %v940 = vpack.c.bf16 %v938, %v937
      %v941 = vpack.c.bf16 %v939, %v939
      %v946 = vunpack.c.l.b16 %v294
      %v947 = vunpack.c.l.b16 %v295
      %v948 = vunpack.c.l.b16 %v296
      %v949 = vunpack.c.l.b16 %v297
      %v950 = vpack.c.b16 %v947, %v946
      %v951 = vpack.c.b16 %v949, %v948
      %v955 = vsel %vm319, %v940, 0
      %v958 = vsel %vm319, %v941, 0
      %960 = vmatprep.subr.bf16.mxu0 0
      %961 = vmatpush1.bf16.msra.mxu0 %v950
      %962 = vmatprep.subr.bf16.mxu0 0
      %963 = vmatpush1.bf16.msra.mxu0 %v951
      %964 = vmatprep.subr.bf16.mxu0 0
      %965 = vmatpush1.bf16.msra.mxu0 0
      %966 = vmatprep.subr.bf16.mxu0 0
      %967 = vmatpush1.bf16.msra.mxu0 0
      %968 = vmatprep.subr.bf16.mxu0 0
      %969 = vmatpush1.bf16.msra.mxu0 0
      %970 = vmatprep.subr.bf16.mxu0 0
      %971 = vmatpush1.bf16.msra.mxu0 0
      %972 = vmatprep.subr.bf16.mxu0 0
      %973 = vmatpush1.bf16.msra.mxu0 0
      %974 = vmatprep.subr.bf16.mxu0 0
      %975 = vmatpush1.bf16.msra.mxu0 0
      %976 = vmatprep.subr.bf16.mxu0 0
      %977 = vmatpush1.bf16.msra.mxu0 0
      %978 = vmatprep.subr.bf16.mxu0 0
      %979 = vmatpush1.bf16.msra.mxu0 0
      %980 = vmatprep.subr.bf16.mxu0 0
      %981 = vmatpush1.bf16.msra.mxu0 0
      %982 = vmatprep.subr.bf16.mxu0 0
      %983 = vmatpush1.bf16.msra.mxu0 0
      %984 = vmatprep.subr.bf16.mxu0 0
      %985 = vmatpush1.bf16.msra.mxu0 0
      %986 = vmatprep.subr.bf16.mxu0 0
      %987 = vmatpush1.bf16.msra.mxu0 0
      %988 = vmatprep.subr.bf16.mxu0 0
      %989 = vmatpush1.bf16.msra.mxu0 0
      %990 = vmatprep.subr.bf16.mxu0 0
      %991 = vmatpush1.bf16.msra.mxu0 0
      %992 = vmatprep.mubr.bf16.mxu0 0
      %993 = vmatmul.mubr.bf16.gmra.mrb[0].mxu0 %v955
      %v994 = vpop.f32.mrb[0].mxu0
      %v995 = vadd.f32 0.0, %v994
      %v996 = vpop.f32.mrb[0].mxu0
      %v997 = vpop.f32.mrb[0].mxu0
      %v998 = vadd.f32 0.0, %v997
      %v999 = vpop.f32.mrb[0].mxu0
      %1000 = vmatprep.mubr.bf16.mxu0 0
      %1001 = vmatmul.mubr.bf16.gmra.mrb[0].mxu0 %v958
      %v1002 = vpop.f32.mrb[0].mxu0
      %v1003 = vadd.f32 0.0, %v1002
      %v1004 = vpop.f32.mrb[0].mxu0
      %v1005 = vpop.f32.mrb[0].mxu0
      %v1006 = vpop.f32.mrb[0].mxu0
      %1007 = vdwg.mxu0
      %v1008 = vadd.f32 %v287, %v995
      %v1009 = vadd.f32 %v288, %v998
      %v1010 = vadd.f32 %v289, %v1003
      %v1011 = vlaneseq
      %v1012 = vshrl.u32 %v1011, 7
      %v1013 = vsub.s32 3, %v1012
      %v1014 = vrot.slane %v318, %v1013
      %v1015 = vadd.f32 %v1008, %v1014
      %v1016 = vadd.f32 %v1009, %v1014
      %v1017 = vadd.f32 %v1010, %v1014
      %v1018 = vsel %vm319, %v1015, 0.0
      %1019 = vadd.xlane.f32.xlu0 %v1018
      %v1020 = vpop.xlane.xlu0 %1019
      %v1021 = vsel %vm319, %v1016, 0.0
      %1022 = vadd.xlane.f32.xlu0 %v1021
      %v1023 = vpop.xlane.xlu0 %1022
      %v1024 = vsel %vm326, %v1017, 0.0
      %1025 = vadd.xlane.f32.xlu0 %v1024
      %v1026 = vpop.xlane.xlu0 %1025
      %v1027 = vmul.f32 %v1020, %v330
      %v1028 = vmul.f32 %v1023, %v330
      %v1029 = vmul.f32 %v1026, %v330
      %v1030 = vsub.f32 %v1015, %v1027
      %v1031 = vsub.f32 %v1016, %v1028
      %v1032 = vsub.f32 %v1017, %v1029
      %v1033 = vmul.f32 %v1030, %v1030
      %v1034 = vmul.f32 %v1031, %v1031
      %v1035 = vmul.f32 %v1032, %v1032
      %v1036 = vsel %vm319, %v1033, 0.0
      %1037 = vadd.xlane.f32.xlu0 %v1036
      %v1038 = vpop.xlane.xlu0 %1037
      %v1039 = vsel %vm319, %v1034, 0.0
      %1040 = vadd.xlane.f32.xlu0 %v1039
      %v1041 = vpop.xlane.xlu0 %1040
      %v1042 = vsel %vm326, %v1035, 0.0
      %1043 = vadd.xlane.f32.xlu0 %v1042
      %v1044 = vpop.xlane.xlu0 %1043
      %v1045 = vmul.f32 %v1038, %v330
      %v1046 = vmul.f32 %v1041, %v330
      %v1047 = vmul.f32 %v1044, %v330
      %v1048 = vadd.f32 %v1045, 1e-12
      %v1049 = vadd.f32 %v1046, 1e-12
      %v1050 = vadd.f32 %v1047, 1e-12
      %v1051 = vrsqrt.pop %v1048
      %v1052 = vrsqrt.pop %v1049
      %v1053 = vrsqrt.pop %v1050
      %v1054 = vmul.f32 %v1030, %v1051
      %v1055 = vmul.f32 %v1031, %v1052
      %v1056 = vmul.f32 %v1032, %v1053
      %v1057 = vlaneseq
      %v1058 = vshrl.u32 %v1057, 7
      %v1059 = vsub.s32 4, %v1058
      %v1060 = vrot.slane %v318, %v1059
      %v1061 = vmul.f32 %v1054, %v1060
      %v1062 = vmul.f32 %v1055, %v1060
      %v1063 = vmul.f32 %v1056, %v1060
      %v1064 = vlaneseq
      %v1065 = vshrl.u32 %v1064, 7
      %v1066 = vsub.s32 5, %v1065
      %v1067 = vrot.slane %v318, %v1066
      %v1068 = vadd.f32 %v1061, %v1067
      %v1069 = vadd.f32 %v1062, %v1067
      %v1070 = vadd.f32 %v1063, %v1067
      %v1071 = vpack.c.bf16 %v1069, %v1068
      %v1072 = vpack.c.bf16 %v1070, %v1070
      %v1073 = vlaneseq
      %v1074 = vshrl.u32 %v1073, 7
      %v1075 = vsub.s32 6, %v1074
      %v1076 = vrot.slane %v318, %v1075
      %v1081 = vunpack.c.l.b16 %v298
      %v1082 = vunpack.c.l.b16 %v299
      %v1083 = vunpack.c.l.b16 %v300
      %v1084 = vunpack.c.l.b16 %v301
      %v1085 = vpack.c.b16 %v1082, %v1081
      %v1086 = vpack.c.b16 %v1084, %v1083
      %v1090 = vsel %vm319, %v1071, 0
      %v1093 = vsel %vm319, %v1072, 0
      %1095 = vmatprep.subr.bf16.mxu0 0
      %1096 = vmatpush1.bf16.msra.mxu0 %v1085
      %1097 = vmatprep.subr.bf16.mxu0 0
      %1098 = vmatpush1.bf16.msra.mxu0 %v1086
      %1099 = vmatprep.subr.bf16.mxu0 0
      %1100 = vmatpush1.bf16.msra.mxu0 0
      %1101 = vmatprep.subr.bf16.mxu0 0
      %1102 = vmatpush1.bf16.msra.mxu0 0
      %1103 = vmatprep.subr.bf16.mxu0 0
      %1104 = vmatpush1.bf16.msra.mxu0 0
      %1105 = vmatprep.subr.bf16.mxu0 0
      %1106 = vmatpush1.bf16.msra.mxu0 0
      %1107 = vmatprep.subr.bf16.mxu0 0
      %1108 = vmatpush1.bf16.msra.mxu0 0
      %1109 = vmatprep.subr.bf16.mxu0 0
      %1110 = vmatpush1.bf16.msra.mxu0 0
      %1111 = vmatprep.subr.bf16.mxu0 0
      %1112 = vmatpush1.bf16.msra.mxu0 0
      %1113 = vmatprep.subr.bf16.mxu0 0
      %1114 = vmatpush1.bf16.msra.mxu0 0
      %1115 = vmatprep.subr.bf16.mxu0 0
      %1116 = vmatpush1.bf16.msra.mxu0 0
      %1117 = vmatprep.subr.bf16.mxu0 0
      %1118 = vmatpush1.bf16.msra.mxu0 0
      %1119 = vmatprep.subr.bf16.mxu0 0
      %1120 = vmatpush1.bf16.msra.mxu0 0
      %1121 = vmatprep.subr.bf16.mxu0 0
      %1122 = vmatpush1.bf16.msra.mxu0 0
      %1123 = vmatprep.subr.bf16.mxu0 0
      %1124 = vmatpush1.bf16.msra.mxu0 0
      %1125 = vmatprep.subr.bf16.mxu0 0
      %1126 = vmatpush1.bf16.msra.mxu0 0
      %1127 = vmatprep.mubr.bf16.mxu0 0
      %1128 = vmatmul.mubr.bf16.gmra.mrb[0].mxu0 %v1090
      %v1129 = vpop.f32.mrb[0].mxu0
      %v1130 = vadd.f32 %v1076, %v1129
      %v1131 = vpop.f32.mrb[0].mxu0
      %v1132 = vpop.f32.mrb[0].mxu0
      %v1133 = vadd.f32 %v1076, %v1132
      %v1134 = vpop.f32.mrb[0].mxu0
      %1135 = vmatprep.mubr.bf16.mxu0 0
      %1136 = vmatmul.mubr.bf16.gmra.mrb[0].mxu0 %v1093
      %v1137 = vpop.f32.mrb[0].mxu0
      %v1138 = vadd.f32 %v1076, %v1137
      %v1139 = vpop.f32.mrb[0].mxu0
      %v1140 = vpop.f32.mrb[0].mxu0
      %v1141 = vpop.f32.mrb[0].mxu0
      %1142 = vdwg.mxu0
      %v1143 = vmul.f32 %v1130, 0.5
      %v1144 = vmul.f32 %v1133, 0.5
      %v1145 = vmul.f32 %v1138, 0.5
      %v1146 = vmul.f32 %v1130, 0.044715
      %v1147 = vmul.f32 %v1133, 0.044715
      %v1148 = vmul.f32 %v1138, 0.044715
      %v1149 = vmul.f32 %v1146, %v1130
      %v1150 = vmul.f32 %v1147, %v1133
      %v1151 = vmul.f32 %v1148, %v1138
      %v1152 = vmul.f32 %v1149, %v1130
      %v1153 = vmul.f32 %v1150, %v1133
      %v1154 = vmul.f32 %v1151, %v1138
      %v1155 = vadd.f32 %v1130, %v1152
      %v1156 = vadd.f32 %v1133, %v1153
      %v1157 = vadd.f32 %v1138, %v1154
      %v1158 = vmul.f32 %v1155, 0.7978846
      %v1159 = vmul.f32 %v1156, 0.7978846
      %v1160 = vmul.f32 %v1157, 0.7978846
      %v1161 = vtanh.pop %v1158
      %v1162 = vtanh.pop %v1159
      %v1163 = vtanh.pop %v1160
      %v1164 = vadd.f32 %v1161, 1.0
      %v1165 = vadd.f32 %v1162, 1.0
      %v1166 = vadd.f32 %v1163, 1.0
      %v1167 = vmul.f32 %v1143, %v1164
      %v1168 = vmul.f32 %v1144, %v1165
      %v1169 = vmul.f32 %v1145, %v1166
      %v1170 = vpack.c.bf16 %v1168, %v1167
      %v1171 = vpack.c.bf16 %v1169, %v1169
      %v1188 = vunpack.c.l.b16 %v302
      %v1189 = vunpack.c.l.b16 %v303
      %v1190 = vunpack.c.l.b16 %v304
      %v1191 = vunpack.c.l.b16 %v305
      %v1192 = vunpack.c.l.b16 %v306
      %v1193 = vunpack.c.l.b16 %v307
      %v1194 = vunpack.c.l.b16 %v308
      %v1195 = vunpack.c.l.b16 %v309
      %v1196 = vunpack.c.l.b16 %v310
      %v1197 = vunpack.c.l.b16 %v311
      %v1198 = vunpack.c.l.b16 %v312
      %v1199 = vunpack.c.l.b16 %v313
      %v1200 = vunpack.c.l.b16 %v314
      %v1201 = vunpack.c.l.b16 %v315
      %v1202 = vunpack.c.l.b16 %v316
      %v1203 = vunpack.c.l.b16 %v317
      %v1204 = vpack.c.b16 %v1189, %v1188
      %v1205 = vpack.c.b16 %v1191, %v1190
      %v1206 = vpack.c.b16 %v1193, %v1192
      %v1207 = vpack.c.b16 %v1195, %v1194
      %v1208 = vpack.c.b16 %v1197, %v1196
      %v1209 = vpack.c.b16 %v1199, %v1198
      %v1210 = vpack.c.b16 %v1201, %v1200
      %v1211 = vpack.c.b16 %v1203, %v1202
      %1220 = vmatprep.subr.bf16.mxu0 0
      %1221 = vmatpush1.bf16.msra.mxu0 %v1204
      %1222 = vmatprep.subr.bf16.mxu0 0
      %1223 = vmatpush1.bf16.msra.mxu0 %v1205
      %1224 = vmatprep.subr.bf16.mxu0 0
      %1225 = vmatpush1.bf16.msra.mxu0 %v1206
      %1226 = vmatprep.subr.bf16.mxu0 0
      %1227 = vmatpush1.bf16.msra.mxu0 %v1207
      %1228 = vmatprep.subr.bf16.mxu0 0
      %1229 = vmatpush1.bf16.msra.mxu0 %v1208
      %1230 = vmatprep.subr.bf16.mxu0 0
      %1231 = vmatpush1.bf16.msra.mxu0 %v1209
      %1232 = vmatprep.subr.bf16.mxu0 0
      %1233 = vmatpush1.bf16.msra.mxu0 %v1210
      %1234 = vmatprep.subr.bf16.mxu0 0
      %1235 = vmatpush1.bf16.msra.mxu0 %v1211
      %1236 = vmatprep.subr.bf16.mxu0 0
      %1237 = vmatpush1.bf16.msra.mxu0 0
      %1238 = vmatprep.subr.bf16.mxu0 0
      %1239 = vmatpush1.bf16.msra.mxu0 0
      %1240 = vmatprep.subr.bf16.mxu0 0
      %1241 = vmatpush1.bf16.msra.mxu0 0
      %1242 = vmatprep.subr.bf16.mxu0 0
      %1243 = vmatpush1.bf16.msra.mxu0 0
      %1244 = vmatprep.subr.bf16.mxu0 0
      %1245 = vmatpush1.bf16.msra.mxu0 0
      %1246 = vmatprep.subr.bf16.mxu0 0
      %1247 = vmatpush1.bf16.msra.mxu0 0
      %1248 = vmatprep.subr.bf16.mxu0 0
      %1249 = vmatpush1.bf16.msra.mxu0 0
      %1250 = vmatprep.subr.bf16.mxu0 0
      %1251 = vmatpush1.bf16.msra.mxu0 0
      %1252 = vmatprep.mubr.bf16.mxu0 0
      %1253 = vmatmul.mubr.bf16.gmra.mrb[0].mxu0 %v1170
      %v1254 = vpop.f32.mrb[0].mxu0
      %v1255 = vadd.f32 0.0, %v1254
      %v1256 = vpop.f32.mrb[0].mxu0
      %v1257 = vpop.f32.mrb[0].mxu0
      %v1258 = vadd.f32 0.0, %v1257
      %v1259 = vpop.f32.mrb[0].mxu0
      %1260 = vmatprep.mubr.bf16.mxu0 0
      %1261 = vmatmul.mubr.bf16.gmra.mrb[0].mxu0 %v1171
      %v1262 = vpop.f32.mrb[0].mxu0
      %v1263 = vadd.f32 0.0, %v1262
      %v1264 = vpop.f32.mrb[0].mxu0
      %v1265 = vpop.f32.mrb[0].mxu0
      %v1266 = vpop.f32.mrb[0].mxu0
      %1267 = vdwg.mxu0
      %v1268 = vadd.f32 %v1015, %v1255
      %v1269 = vadd.f32 %v1016, %v1258
      %v1270 = vadd.f32 %v1017, %v1263
      %v1271 = vlaneseq
      %v1272 = vshrl.u32 %v1271, 7
      %v1273 = vsub.s32 7, %v1272
      %v1274 = vrot.slane %v318, %v1273
      %v1275 = vadd.f32 %v1268, %v1274
      %v1276 = vadd.f32 %v1269, %v1274
      %v1277 = vadd.f32 %v1270, %v1274
      %s1278 = scalar_lea.vmem %s2, 112
      %v1279 = vld [vmem:[%s1278] sm:$0xf]
      %v1280 = vld [vmem:[%s1278 + $0x4] sm:$0xf]
      %v1281 = vld [vmem:[%s1278 + $0x8] sm:$0xf]
      %v1282 = vld [vmem:[%s1278 + $0xc] sm:$0xf]
      %v1283 = vld [vmem:[%s1278 + $0x10] sm:$0xf]
      %v1284 = vld [vmem:[%s1278 + $0x14] sm:$0xf]
      %v1285 = vld [vmem:[%s1278 + $0x18] sm:$0xf]
      %v1286 = vld [vmem:[%s1278 + $0x1c] sm:$0xf]
      %v1287 = vld [vmem:[%s1278 + $0x20] sm:$0xf]
      %v1288 = vld [vmem:[%s1278 + $0x24] sm:$0xf]
      %v1289 = vld [vmem:[%s1278 + $0x28] sm:$0xf]
      %v1290 = vld [vmem:[%s1278 + $0x2c] sm:$0xf]
      %v1291 = vld [vmem:[%s1278 + $0x30] sm:$0xf]
      %v1292 = vld [vmem:[%s1278 + $0x34] sm:$0xf]
      %v1293 = vld [vmem:[%s1278 + $0x38] sm:$0xf]
      %v1294 = vld [vmem:[%s1278 + $0x3c] sm:$0xf]
      %v1295 = vld [vmem:[%s1278 + $0x40] sm:$0xf]
      %v1296 = vld [vmem:[%s1278 + $0x44] sm:$0xf]
      %v1297 = vld [vmem:[%s1278 + $0x48] sm:$0xf]
      %v1298 = vld [vmem:[%s1278 + $0x4c] sm:$0xf]
      %v1299 = vld [vmem:[%s1278 + $0x50] sm:$0xf]
      %v1300 = vld [vmem:[%s1278 + $0x54] sm:$0xf]
      %v1301 = vld [vmem:[%s1278 + $0x58] sm:$0xf]
      %v1302 = vld [vmem:[%s1278 + $0x5c] sm:$0xf]
      %v1303 = vld [vmem:[%s1278 + $0x60] sm:$0xf]
      %v1304 = vld [vmem:[%s1278 + $0x64] sm:$0xf]
      %v1305 = vld [vmem:[%s1278 + $0x68] sm:$0xf]
      %v1306 = vld [vmem:[%s1278 + $0x6c] sm:$0xf]
      %v1307 = vld [vmem:[%s3 + $0x1c] sm:$0xff]
      %v1308 = vsel %vm319, %v1275, 0.0
      %1309 = vadd.xlane.f32.xlu0 %v1308
      %v1310 = vpop.xlane.xlu0 %1309
      %v1311 = vsel %vm319, %v1276, 0.0
      %1312 = vadd.xlane.f32.xlu0 %v1311
      %v1313 = vpop.xlane.xlu0 %1312
      %v1314 = vsel %vm326, %v1277, 0.0
      %1315 = vadd.xlane.f32.xlu0 %v1314
      %v1316 = vpop.xlane.xlu0 %1315
      %v1317 = vmul.f32 %v1310, %v330
      %v1318 = vmul.f32 %v1313, %v330
      %v1319 = vmul.f32 %v1316, %v330
      %v1320 = vsub.f32 %v1275, %v1317
      %v1321 = vsub.f32 %v1276, %v1318
      %v1322 = vsub.f32 %v1277, %v1319
      %v1323 = vmul.f32 %v1320, %v1320
      %v1324 = vmul.f32 %v1321, %v1321
      %v1325 = vmul.f32 %v1322, %v1322
      %v1326 = vsel %vm319, %v1323, 0.0
      %1327 = vadd.xlane.f32.xlu0 %v1326
      %v1328 = vpop.xlane.xlu0 %1327
      %v1329 = vsel %vm319, %v1324, 0.0
      %1330 = vadd.xlane.f32.xlu0 %v1329
      %v1331 = vpop.xlane.xlu0 %1330
      %v1332 = vsel %vm326, %v1325, 0.0
      %1333 = vadd.xlane.f32.xlu0 %v1332
      %v1334 = vpop.xlane.xlu0 %1333
      %v1335 = vmul.f32 %v1328, %v330
      %v1336 = vmul.f32 %v1331, %v330
      %v1337 = vmul.f32 %v1334, %v330
      %v1338 = vadd.f32 %v1335, 1e-12
      %v1339 = vadd.f32 %v1336, 1e-12
      %v1340 = vadd.f32 %v1337, 1e-12
      %v1341 = vrsqrt.pop %v1338
      %v1342 = vrsqrt.pop %v1339
      %v1343 = vrsqrt.pop %v1340
      %v1344 = vmul.f32 %v1320, %v1341
      %v1345 = vmul.f32 %v1321, %v1342
      %v1346 = vmul.f32 %v1322, %v1343
      %v1347 = vlaneseq
      %v1348 = vshrl.u32 %v1347, 7
      %v1349 = vsub.s32 0, %v1348
      %v1350 = vrot.slane %v1307, %v1349
      %v1351 = vmul.f32 %v1344, %v1350
      %v1352 = vmul.f32 %v1345, %v1350
      %v1353 = vmul.f32 %v1346, %v1350
      %v1354 = vlaneseq
      %v1355 = vshrl.u32 %v1354, 7
      %v1356 = vsub.s32 1, %v1355
      %v1357 = vrot.slane %v1307, %v1356
      %v1358 = vadd.f32 %v1351, %v1357
      %v1359 = vadd.f32 %v1352, %v1357
      %v1360 = vadd.f32 %v1353, %v1357
      %v1361 = vpack.c.bf16 %v1359, %v1358
      %v1362 = vpack.c.bf16 %v1360, %v1360
      %v1363 = vlaneseq
      %v1364 = vshrl.u32 %v1363, 7
      %v1365 = vsub.s32 2, %v1364
      %v1366 = vrot.slane %v1307, %v1365
      %v1371 = vunpack.c.l.b16 %v1279
      %v1372 = vunpack.c.l.b16 %v1280
      %v1373 = vunpack.c.l.b16 %v1281
      %v1374 = vunpack.c.l.b16 %v1282
      %v1375 = vpack.c.b16 %v1372, %v1371
      %v1376 = vpack.c.b16 %v1374, %v1373
      %v1380 = vsel %vm319, %v1361, 0
      %v1383 = vsel %vm319, %v1362, 0
      %1385 = vmatprep.subr.bf16.mxu0 0
      %1386 = vmatpush1.bf16.msra.mxu0 %v1375
      %1387 = vmatprep.subr.bf16.mxu0 0
      %1388 = vmatpush1.bf16.msra.mxu0 %v1376
      %1389 = vmatprep.subr.bf16.mxu0 0
      %1390 = vmatpush1.bf16.msra.mxu0 0
      %1391 = vmatprep.subr.bf16.mxu0 0
      %1392 = vmatpush1.bf16.msra.mxu0 0
      %1393 = vmatprep.subr.bf16.mxu0 0
      %1394 = vmatpush1.bf16.msra.mxu0 0
      %1395 = vmatprep.subr.bf16.mxu0 0
      %1396 = vmatpush1.bf16.msra.mxu0 0
      %1397 = vmatprep.subr.bf16.mxu0 0
      %1398 = vmatpush1.bf16.msra.mxu0 0
      %1399 = vmatprep.subr.bf16.mxu0 0
      %1400 = vmatpush1.bf16.msra.mxu0 0
      %1401 = vmatprep.subr.bf16.mxu0 0
      %1402 = vmatpush1.bf16.msra.mxu0 0
      %1403 = vmatprep.subr.bf16.mxu0 0
      %1404 = vmatpush1.bf16.msra.mxu0 0
      %1405 = vmatprep.subr.bf16.mxu0 0
      %1406 = vmatpush1.bf16.msra.mxu0 0
      %1407 = vmatprep.subr.bf16.mxu0 0
      %1408 = vmatpush1.bf16.msra.mxu0 0
      %1409 = vmatprep.subr.bf16.mxu0 0
      %1410 = vmatpush1.bf16.msra.mxu0 0
      %1411 = vmatprep.subr.bf16.mxu0 0
      %1412 = vmatpush1.bf16.msra.mxu0 0
      %1413 = vmatprep.subr.bf16.mxu0 0
      %1414 = vmatpush1.bf16.msra.mxu0 0
      %1415 = vmatprep.subr.bf16.mxu0 0
      %1416 = vmatpush1.bf16.msra.mxu0 0
      %1417 = vmatprep.mubr.bf16.mxu0 0
      %1418 = vmatmul.mubr.bf16.gmra.mrb[0].mxu0 %v1380
      %v1419 = vpop.f32.mrb[0].mxu0
      %v1420 = vadd.f32 %v1366, %v1419
      %v1421 = vpop.f32.mrb[0].mxu0
      %v1422 = vpop.f32.mrb[0].mxu0
      %v1423 = vadd.f32 %v1366, %v1422
      %v1424 = vpop.f32.mrb[0].mxu0
      %1425 = vmatprep.mubr.bf16.mxu0 0
      %1426 = vmatmul.mubr.bf16.gmra.mrb[0].mxu0 %v1383
      %v1427 = vpop.f32.mrb[0].mxu0
      %v1428 = vadd.f32 %v1366, %v1427
      %v1429 = vpop.f32.mrb[0].mxu0
      %v1430 = vpop.f32.mrb[0].mxu0
      %v1431 = vpop.f32.mrb[0].mxu0
      %1432 = vdwg.mxu0
      %1436 = vrot.lane.b32.xlu0 %v1420, 96
      %v1437 = vpop.permute.xlu0 %1436
      %1438 = vrot.lane.b32.xlu0 %v1423, 96
      %v1439 = vpop.permute.xlu0 %1438
      %1440 = vrot.lane.b32.xlu0 %v1428, 96
      %v1441 = vpop.permute.xlu0 %1440
      %v1442 = vsel %vm456, %v1420, 0
      %v1444 = vsel %vm456, %v1423, 0
      %v1446 = vsel %vm456, %v1428, 0
      %v1448 = vsel %vm456, %v1437, 0
      %v1450 = vsel %vm456, %v1439, 0
      %v1452 = vsel %vm456, %v1441, 0
      %1454 = vmatprep.subr.mxu0 0.0
      %1455 = vmatpush1.xpose.msra.mxu0 %v1448
      %1456 = vmatprep.subr.mxu0 0.0
      %1457 = vmatpush1.xpose.msra.mxu0 %v1450
      %1458 = vmatprep.subr.mxu0 0.0
      %1459 = vmatpush1.xpose.msra.mxu0 %v1452
      %1460 = vmatprep.subr.mxu0 0.0
      %1461 = vmatpush1.xpose.msra.mxu0 0.0
      %1462 = vmatprep.subr.mxu0 0.0
      %1463 = vmatpush1.xpose.msra.mxu0 0.0
      %1464 = vmatprep.subr.mxu0 0.0
      %1465 = vmatpush1.xpose.msra.mxu0 0.0
      %1466 = vmatprep.subr.mxu0 0.0
      %1467 = vmatpush1.xpose.msra.mxu0 0.0
      %1468 = vmatprep.subr.mxu0 0.0
      %1469 = vmatpush1.xpose.msra.mxu0 0.0
      %1470 = vmatprep.subr.mxu0 0.0
      %1471 = vmatpush1.xpose.msra.mxu0 0.0
      %1472 = vmatprep.subr.mxu0 0.0
      %1473 = vmatpush1.xpose.msra.mxu0 0.0
      %1474 = vmatprep.subr.mxu0 0.0
      %1475 = vmatpush1.xpose.msra.mxu0 0.0
      %1476 = vmatprep.subr.mxu0 0.0
      %1477 = vmatpush1.xpose.msra.mxu0 0.0
      %1478 = vmatprep.subr.mxu0 0.0
      %1479 = vmatpush1.xpose.msra.mxu0 0.0
      %1480 = vmatprep.subr.mxu0 0.0
      %1481 = vmatpush1.xpose.msra.mxu0 0.0
      %1482 = vmatprep.subr.mxu0 0.0
      %1483 = vmatpush1.xpose.msra.mxu0 0.0
      %1484 = vmatprep.subr.mxu0 0.0
      %1485 = vmatpush1.xpose.msra.mxu0 0.0
      %1486 = vmatprep.subr.mxu0 0.0
      %1487 = vmatpush1.xpose.msra.mxu0 0.0
      %1488 = vmatprep.subr.mxu0 0.0
      %1489 = vmatpush1.xpose.msra.mxu0 0.0
      %1490 = vmatprep.subr.mxu0 0.0
      %1491 = vmatpush1.xpose.msra.mxu0 0.0
      %1492 = vmatprep.subr.mxu0 0.0
      %1493 = vmatpush1.xpose.msra.mxu0 0.0
      %1494 = vmatprep.subr.mxu0 0.0
      %1495 = vmatpush1.xpose.msra.mxu0 0.0
      %1496 = vmatprep.subr.mxu0 0.0
      %1497 = vmatpush1.xpose.msra.mxu0 0.0
      %1498 = vmatprep.subr.mxu0 0.0
      %1499 = vmatpush1.xpose.msra.mxu0 0.0
      %1500 = vmatprep.subr.mxu0 0.0
      %1501 = vmatpush1.xpose.msra.mxu0 0.0
      %1502 = vmatprep.subr.mxu0 0.0
      %1503 = vmatpush1.xpose.msra.mxu0 0.0
      %1504 = vmatprep.subr.mxu0 0.0
      %1505 = vmatpush1.xpose.msra.mxu0 0.0
      %1506 = vmatprep.subr.mxu0 0.0
      %1507 = vmatpush1.xpose.msra.mxu0 0.0
      %1508 = vmatprep.subr.mxu0 0.0
      %1509 = vmatpush1.xpose.msra.mxu0 0.0
      %1510 = vmatprep.subr.mxu0 0.0
      %1511 = vmatpush1.xpose.msra.mxu0 0.0
      %1512 = vmatprep.subr.mxu0 0.0
      %1513 = vmatpush1.xpose.msra.mxu0 0.0
      %1514 = vmatprep.subr.mxu0 0.0
      %1515 = vmatpush1.xpose.msra.mxu0 0.0
      %1516 = vmatprep.subr.mxu0 0.0
      %1517 = vmatpush1.xpose.msra.mxu0 0.0
      %1518 = vmatprep.mubr.f32.mxu0 0.0
      %1519 = vmatmul.mubr.f32.gmra.mrb[0].mxu0 %v1442
      %v1520 = vpop.f32.mrb[0].mxu0
      %v1521 = vadd.f32 0.0, %v1520
      %v1522 = vpop.f32.mrb[0].mxu0
      %1523 = vmatprep.mubr.f32.mxu0 0.0
      %1524 = vmatmul.mubr.f32.gmra.mrb[0].mxu0 %v1444
      %v1525 = vpop.f32.mrb[0].mxu0
      %v1526 = vadd.f32 0.0, %v1525
      %v1527 = vpop.f32.mrb[0].mxu0
      %1528 = vmatprep.mubr.f32.mxu0 0.0
      %1529 = vmatmul.mubr.f32.gmra.mrb[0].mxu0 %v1446
      %v1530 = vpop.f32.mrb[0].mxu0
      %v1531 = vadd.f32 0.0, %v1530
      %v1532 = vpop.f32.mrb[0].mxu0
      %1533 = vdwg.mxu0
      %v1534 = vmul.f32 %v1521, 0.25
      %v1535 = vmul.f32 %v1526, 0.25
      %v1536 = vmul.f32 %v1531, 0.25
      %v1537 = vsel %vm552, %v1534, -inf
      %1538 = vmax.xlane.f32.xlu0 %v1537
      %v1539 = vpop.xlane.xlu0 %1538
      %v1540 = vsel %vm552, %v1535, -inf
      %1541 = vmax.xlane.f32.xlu0 %v1540
      %v1542 = vpop.xlane.xlu0 %1541
      %v1543 = vsel %vm559, %v1536, -inf
      %1544 = vmax.xlane.f32.xlu0 %v1543
      %v1545 = vpop.xlane.xlu0 %1544
      %v1546 = vsub.f32 %v1534, %v1539
      %v1547 = vsub.f32 %v1535, %v1542
      %v1548 = vsub.f32 %v1536, %v1545
      %v1549 = vmul.f32 %v1546, 1.442695
      %v1550 = vpow.pop %v1549
      %v1551 = vmul.f32 %v1547, 1.442695
      %v1552 = vpow.pop %v1551
      %v1553 = vmul.f32 %v1548, 1.442695
      %v1554 = vpow.pop %v1553
      %v1555 = vsel %vm552, %v1550, 0.0
      %1556 = vadd.xlane.f32.xlu0 %v1555
      %v1557 = vpop.xlane.xlu0 %1556
      %v1558 = vsel %vm552, %v1552, 0.0
      %1559 = vadd.xlane.f32.xlu0 %v1558
      %v1560 = vpop.xlane.xlu0 %1559
      %v1561 = vsel %vm559, %v1554, 0.0
      %1562 = vadd.xlane.f32.xlu0 %v1561
      %v1563 = vpop.xlane.xlu0 %1562
      %v1564 = vrcp.pop %v1557
      %v1565 = vrcp.pop %v1560
      %v1566 = vrcp.pop %v1563
      %v1567 = vmul.f32 %v1550, %v1564
      %v1568 = vmul.f32 %v1552, %v1565
      %v1569 = vmul.f32 %v1554, %v1566
      %1570 = vrot.lane.b32.xlu0 %v1420, 64
      %v1571 = vpop.permute.xlu0 %1570
      %1572 = vrot.lane.b32.xlu0 %v1423, 64
      %v1573 = vpop.permute.xlu0 %1572
      %1574 = vrot.lane.b32.xlu0 %v1428, 64
      %v1575 = vpop.permute.xlu0 %1574
      %v1579 = vsel %vm552, %v1567, 0
      %v1582 = vsel %vm552, %v1568, 0
      %v1585 = vsel %vm552, %v1569, 0
      %v1587 = vsel %vm279, %v1575, 0
      %1589 = vmatprep.subr.mxu0 0.0
      %1590 = vmatpush1.msra.mxu0 %v1571
      %1591 = vmatprep.subr.mxu0 0.0
      %1592 = vmatpush1.msra.mxu0 %v1573
      %1593 = vmatprep.subr.mxu0 0.0
      %1594 = vmatpush1.msra.mxu0 %v1587
      %1595 = vmatprep.subr.mxu0 0.0
      %1596 = vmatpush1.msra.mxu0 0.0
      %1597 = vmatprep.subr.mxu0 0.0
      %1598 = vmatpush1.msra.mxu0 0.0
      %1599 = vmatprep.subr.mxu0 0.0
      %1600 = vmatpush1.msra.mxu0 0.0
      %1601 = vmatprep.subr.mxu0 0.0
      %1602 = vmatpush1.msra.mxu0 0.0
      %1603 = vmatprep.subr.mxu0 0.0
      %1604 = vmatpush1.msra.mxu0 0.0
      %1605 = vmatprep.subr.mxu0 0.0
      %1606 = vmatpush1.msra.mxu0 0.0
      %1607 = vmatprep.subr.mxu0 0.0
      %1608 = vmatpush1.msra.mxu0 0.0
      %1609 = vmatprep.subr.mxu0 0.0
      %1610 = vmatpush1.msra.mxu0 0.0
      %1611 = vmatprep.subr.mxu0 0.0
      %1612 = vmatpush1.msra.mxu0 0.0
      %1613 = vmatprep.subr.mxu0 0.0
      %1614 = vmatpush1.msra.mxu0 0.0
      %1615 = vmatprep.subr.mxu0 0.0
      %1616 = vmatpush1.msra.mxu0 0.0
      %1617 = vmatprep.subr.mxu0 0.0
      %1618 = vmatpush1.msra.mxu0 0.0
      %1619 = vmatprep.subr.mxu0 0.0
      %1620 = vmatpush1.msra.mxu0 0.0
      %1621 = vmatprep.subr.mxu0 0.0
      %1622 = vmatpush1.msra.mxu0 0.0
      %1623 = vmatprep.subr.mxu0 0.0
      %1624 = vmatpush1.msra.mxu0 0.0
      %1625 = vmatprep.subr.mxu0 0.0
      %1626 = vmatpush1.msra.mxu0 0.0
      %1627 = vmatprep.subr.mxu0 0.0
      %1628 = vmatpush1.msra.mxu0 0.0
      %1629 = vmatprep.subr.mxu0 0.0
      %1630 = vmatpush1.msra.mxu0 0.0
      %1631 = vmatprep.subr.mxu0 0.0
      %1632 = vmatpush1.msra.mxu0 0.0
      %1633 = vmatprep.subr.mxu0 0.0
      %1634 = vmatpush1.msra.mxu0 0.0
      %1635 = vmatprep.subr.mxu0 0.0
      %1636 = vmatpush1.msra.mxu0 0.0
      %1637 = vmatprep.subr.mxu0 0.0
      %1638 = vmatpush1.msra.mxu0 0.0
      %1639 = vmatprep.subr.mxu0 0.0
      %1640 = vmatpush1.msra.mxu0 0.0
      %1641 = vmatprep.subr.mxu0 0.0
      %1642 = vmatpush1.msra.mxu0 0.0
      %1643 = vmatprep.subr.mxu0 0.0
      %1644 = vmatpush1.msra.mxu0 0.0
      %1645 = vmatprep.subr.mxu0 0.0
      %1646 = vmatpush1.msra.mxu0 0.0
      %1647 = vmatprep.subr.mxu0 0.0
      %1648 = vmatpush1.msra.mxu0 0.0
      %1649 = vmatprep.subr.mxu0 0.0
      %1650 = vmatpush1.msra.mxu0 0.0
      %1651 = vmatprep.subr.mxu0 0.0
      %1652 = vmatpush1.msra.mxu0 0.0
      %1653 = vmatprep.mubr.f32.mxu0 0.0
      %1654 = vmatmul.mubr.f32.gmra.mrb[0].mxu0 %v1579
      %v1655 = vpop.f32.mrb[0].mxu0
      %v1656 = vadd.f32 0.0, %v1655
      %v1657 = vpop.f32.mrb[0].mxu0
      %1658 = vmatprep.mubr.f32.mxu0 0.0
      %1659 = vmatmul.mubr.f32.gmra.mrb[0].mxu0 %v1582
      %v1660 = vpop.f32.mrb[0].mxu0
      %v1661 = vadd.f32 0.0, %v1660
      %v1662 = vpop.f32.mrb[0].mxu0
      %1663 = vmatprep.mubr.f32.mxu0 0.0
      %1664 = vmatmul.mubr.f32.gmra.mrb[0].mxu0 %v1585
      %v1665 = vpop.f32.mrb[0].mxu0
      %v1666 = vadd.f32 0.0, %v1665
      %v1667 = vpop.f32.mrb[0].mxu0
      %1668 = vdwg.mxu0
      %1669 = vrot.lane.b32.xlu0 %v1420, 112
      %v1670 = vpop.permute.xlu0 %1669
      %1671 = vrot.lane.b32.xlu0 %v1423, 112
      %v1672 = vpop.permute.xlu0 %1671
      %1673 = vrot.lane.b32.xlu0 %v1428, 112
      %v1674 = vpop.permute.xlu0 %1673
      %1675 = vrot.lane.b32.xlu0 %v1420, 80
      %v1676 = vpop.permute.xlu0 %1675
      %1677 = vrot.lane.b32.xlu0 %v1423, 80
      %v1678 = vpop.permute.xlu0 %1677
      %1679 = vrot.lane.b32.xlu0 %v1428, 80
      %v1680 = vpop.permute.xlu0 %1679
      %v1681 = vsel %vm456, %v1670, 0
      %v1683 = vsel %vm456, %v1672, 0
      %v1685 = vsel %vm456, %v1674, 0
      %v1687 = vsel %vm456, %v1676, 0
      %v1689 = vsel %vm456, %v1678, 0
      %v1691 = vsel %vm456, %v1680, 0
      %1693 = vmatprep.subr.mxu0 0.0
      %1694 = vmatpush1.xpose.msra.mxu0 %v1687
      %1695 = vmatprep.subr.mxu0 0.0
      %1696 = vmatpush1.xpose.msra.mxu0 %v1689
      %1697 = vmatprep.subr.mxu0 0.0
      %1698 = vmatpush1.xpose.msra.mxu0 %v1691
      %1699 = vmatprep.subr.mxu0 0.0
      %1700 = vmatpush1.xpose.msra.mxu0 0.0
      %1701 = vmatprep.subr.mxu0 0.0
      %1702 = vmatpush1.xpose.msra.mxu0 0.0
      %1703 = vmatprep.subr.mxu0 0.0
      %1704 = vmatpush1.xpose.msra.mxu0 0.0
      %1705 = vmatprep.subr.mxu0 0.0
      %1706 = vmatpush1.xpose.msra.mxu0 0.0
      %1707 = vmatprep.subr.mxu0 0.0
      %1708 = vmatpush1.xpose.msra.mxu0 0.0
      %1709 = vmatprep.subr.mxu0 0.0
      %1710 = vmatpush1.xpose.msra.mxu0 0.0
      %1711 = vmatprep.subr.mxu0 0.0
      %1712 = vmatpush1.xpose.msra.mxu0 0.0
      %1713 = vmatprep.subr.mxu0 0.0
      %1714 = vmatpush1.xpose.msra.mxu0 0.0
      %1715 = vmatprep.subr.mxu0 0.0
      %1716 = vmatpush1.xpose.msra.mxu0 0.0
      %1717 = vmatprep.subr.mxu0 0.0
      %1718 = vmatpush1.xpose.msra.mxu0 0.0
      %1719 = vmatprep.subr.mxu0 0.0
      %1720 = vmatpush1.xpose.msra.mxu0 0.0
      %1721 = vmatprep.subr.mxu0 0.0
      %1722 = vmatpush1.xpose.msra.mxu0 0.0
      %1723 = vmatprep.subr.mxu0 0.0
      %1724 = vmatpush1.xpose.msra.mxu0 0.0
      %1725 = vmatprep.subr.mxu0 0.0
      %1726 = vmatpush1.xpose.msra.mxu0 0.0
      %1727 = vmatprep.subr.mxu0 0.0
      %1728 = vmatpush1.xpose.msra.mxu0 0.0
      %1729 = vmatprep.subr.mxu0 0.0
      %1730 = vmatpush1.xpose.msra.mxu0 0.0
      %1731 = vmatprep.subr.mxu0 0.0
      %1732 = vmatpush1.xpose.msra.mxu0 0.0
      %1733 = vmatprep.subr.mxu0 0.0
      %1734 = vmatpush1.xpose.msra.mxu0 0.0
      %1735 = vmatprep.subr.mxu0 0.0
      %1736 = vmatpush1.xpose.msra.mxu0 0.0
      %1737 = vmatprep.subr.mxu0 0.0
      %1738 = vmatpush1.xpose.msra.mxu0 0.0
      %1739 = vmatprep.subr.mxu0 0.0
      %1740 = vmatpush1.xpose.msra.mxu0 0.0
      %1741 = vmatprep.subr.mxu0 0.0
      %1742 = vmatpush1.xpose.msra.mxu0 0.0
      %1743 = vmatprep.subr.mxu0 0.0
      %1744 = vmatpush1.xpose.msra.mxu0 0.0
      %1745 = vmatprep.subr.mxu0 0.0
      %1746 = vmatpush1.xpose.msra.mxu0 0.0
      %1747 = vmatprep.subr.mxu0 0.0
      %1748 = vmatpush1.xpose.msra.mxu0 0.0
      %1749 = vmatprep.subr.mxu0 0.0
      %1750 = vmatpush1.xpose.msra.mxu0 0.0
      %1751 = vmatprep.subr.mxu0 0.0
      %1752 = vmatpush1.xpose.msra.mxu0 0.0
      %1753 = vmatprep.subr.mxu0 0.0
      %1754 = vmatpush1.xpose.msra.mxu0 0.0
      %1755 = vmatprep.subr.mxu0 0.0
      %1756 = vmatpush1.xpose.msra.mxu0 0.0
      %1757 = vmatprep.mubr.f32.mxu0 0.0
      %1758 = vmatmul.mubr.f32.gmra.mrb[0].mxu0 %v1681
      %v1759 = vpop.f32.mrb[0].mxu0
      %v1760 = vadd.f32 0.0, %v1759
      %v1761 = vpop.f32.mrb[0].mxu0
      %1762 = vmatprep.mubr.f32.mxu0 0.0
      %1763 = vmatmul.mubr.f32.gmra.mrb[0].mxu0 %v1683
      %v1764 = vpop.f32.mrb[0].mxu0
      %v1765 = vadd.f32 0.0, %v1764
      %v1766 = vpop.f32.mrb[0].mxu0
      %1767 = vmatprep.mubr.f32.mxu0 0.0
      %1768 = vmatmul.mubr.f32.gmra.mrb[0].mxu0 %v1685
      %v1769 = vpop.f32.mrb[0].mxu0
      %v1770 = vadd.f32 0.0, %v1769
      %v1771 = vpop.f32.mrb[0].mxu0
      %1772 = vdwg.mxu0
      %v1773 = vmul.f32 %v1760, 0.25
      %v1774 = vmul.f32 %v1765, 0.25
      %v1775 = vmul.f32 %v1770, 0.25
      %v1776 = vsel %vm552, %v1773, -inf
      %1777 = vmax.xlane.f32.xlu0 %v1776
      %v1778 = vpop.xlane.xlu0 %1777
      %v1779 = vsel %vm552, %v1774, -inf
      %1780 = vmax.xlane.f32.xlu0 %v1779
      %v1781 = vpop.xlane.xlu0 %1780
      %v1782 = vsel %vm559, %v1775, -inf
      %1783 = vmax.xlane.f32.xlu0 %v1782
      %v1784 = vpop.xlane.xlu0 %1783
      %v1785 = vsub.f32 %v1773, %v1778
      %v1786 = vsub.f32 %v1774, %v1781
      %v1787 = vsub.f32 %v1775, %v1784
      %v1788 = vmul.f32 %v1785, 1.442695
      %v1789 = vpow.pop %v1788
      %v1790 = vmul.f32 %v1786, 1.442695
      %v1791 = vpow.pop %v1790
      %v1792 = vmul.f32 %v1787, 1.442695
      %v1793 = vpow.pop %v1792
      %v1794 = vsel %vm552, %v1789, 0.0
      %1795 = vadd.xlane.f32.xlu0 %v1794
      %v1796 = vpop.xlane.xlu0 %1795
      %v1797 = vsel %vm552, %v1791, 0.0
      %1798 = vadd.xlane.f32.xlu0 %v1797
      %v1799 = vpop.xlane.xlu0 %1798
      %v1800 = vsel %vm559, %v1793, 0.0
      %1801 = vadd.xlane.f32.xlu0 %v1800
      %v1802 = vpop.xlane.xlu0 %1801
      %v1803 = vrcp.pop %v1796
      %v1804 = vrcp.pop %v1799
      %v1805 = vrcp.pop %v1802
      %v1806 = vmul.f32 %v1789, %v1803
      %v1807 = vmul.f32 %v1791, %v1804
      %v1808 = vmul.f32 %v1793, %v1805
      %1809 = vrot.lane.b32.xlu0 %v1420, 48
      %v1810 = vpop.permute.xlu0 %1809
      %1811 = vrot.lane.b32.xlu0 %v1423, 48
      %v1812 = vpop.permute.xlu0 %1811
      %1813 = vrot.lane.b32.xlu0 %v1428, 48
      %v1814 = vpop.permute.xlu0 %1813
      %v1818 = vsel %vm552, %v1806, 0
      %v1821 = vsel %vm552, %v1807, 0
      %v1824 = vsel %vm552, %v1808, 0
      %v1826 = vsel %vm279, %v1814, 0
      %1828 = vmatprep.subr.mxu0 0.0
      %1829 = vmatpush1.msra.mxu0 %v1810
      %1830 = vmatprep.subr.mxu0 0.0
      %1831 = vmatpush1.msra.mxu0 %v1812
      %1832 = vmatprep.subr.mxu0 0.0
      %1833 = vmatpush1.msra.mxu0 %v1826
      %1834 = vmatprep.subr.mxu0 0.0
      %1835 = vmatpush1.msra.mxu0 0.0
      %1836 = vmatprep.subr.mxu0 0.0
      %1837 = vmatpush1.msra.mxu0 0.0
      %1838 = vmatprep.subr.mxu0 0.0
      %1839 = vmatpush1.msra.mxu0 0.0
      %1840 = vmatprep.subr.mxu0 0.0
      %1841 = vmatpush1.msra.mxu0 0.0
      %1842 = vmatprep.subr.mxu0 0.0
      %1843 = vmatpush1.msra.mxu0 0.0
      %1844 = vmatprep.subr.mxu0 0.0
      %1845 = vmatpush1.msra.mxu0 0.0
      %1846 = vmatprep.subr.mxu0 0.0
      %1847 = vmatpush1.msra.mxu0 0.0
      %1848 = vmatprep.subr.mxu0 0.0
      %1849 = vmatpush1.msra.mxu0 0.0
      %1850 = vmatprep.subr.mxu0 0.0
      %1851 = vmatpush1.msra.mxu0 0.0
      %1852 = vmatprep.subr.mxu0 0.0
      %1853 = vmatpush1.msra.mxu0 0.0
      %1854 = vmatprep.subr.mxu0 0.0
      %1855 = vmatpush1.msra.mxu0 0.0
      %1856 = vmatprep.subr.mxu0 0.0
      %1857 = vmatpush1.msra.mxu0 0.0
      %1858 = vmatprep.subr.mxu0 0.0
      %1859 = vmatpush1.msra.mxu0 0.0
      %1860 = vmatprep.subr.mxu0 0.0
      %1861 = vmatpush1.msra.mxu0 0.0
      %1862 = vmatprep.subr.mxu0 0.0
      %1863 = vmatpush1.msra.mxu0 0.0
      %1864 = vmatprep.subr.mxu0 0.0
      %1865 = vmatpush1.msra.mxu0 0.0
      %1866 = vmatprep.subr.mxu0 0.0
      %1867 = vmatpush1.msra.mxu0 0.0
      %1868 = vmatprep.subr.mxu0 0.0
      %1869 = vmatpush1.msra.mxu0 0.0
      %1870 = vmatprep.subr.mxu0 0.0
      %1871 = vmatpush1.msra.mxu0 0.0
      %1872 = vmatprep.subr.mxu0 0.0
      %1873 = vmatpush1.msra.mxu0 0.0
      %1874 = vmatprep.subr.mxu0 0.0
      %1875 = vmatpush1.msra.mxu0 0.0
      %1876 = vmatprep.subr.mxu0 0.0
      %1877 = vmatpush1.msra.mxu0 0.0
      %1878 = vmatprep.subr.mxu0 0.0
      %1879 = vmatpush1.msra.mxu0 0.0
      %1880 = vmatprep.subr.mxu0 0.0
      %1881 = vmatpush1.msra.mxu0 0.0
      %1882 = vmatprep.subr.mxu0 0.0
      %1883 = vmatpush1.msra.mxu0 0.0
      %1884 = vmatprep.subr.mxu0 0.0
      %1885 = vmatpush1.msra.mxu0 0.0
      %1886 = vmatprep.subr.mxu0 0.0
      %1887 = vmatpush1.msra.mxu0 0.0
      %1888 = vmatprep.subr.mxu0 0.0
      %1889 = vmatpush1.msra.mxu0 0.0
      %1890 = vmatprep.subr.mxu0 0.0
      %1891 = vmatpush1.msra.mxu0 0.0
      %1892 = vmatprep.mubr.f32.mxu0 0.0
      %1893 = vmatmul.mubr.f32.gmra.mrb[0].mxu0 %v1818
      %v1894 = vpop.f32.mrb[0].mxu0
      %v1895 = vadd.f32 0.0, %v1894
      %v1896 = vpop.f32.mrb[0].mxu0
      %1897 = vmatprep.mubr.f32.mxu0 0.0
      %1898 = vmatmul.mubr.f32.gmra.mrb[0].mxu0 %v1821
      %v1899 = vpop.f32.mrb[0].mxu0
      %v1900 = vadd.f32 0.0, %v1899
      %v1901 = vpop.f32.mrb[0].mxu0
      %1902 = vmatprep.mubr.f32.mxu0 0.0
      %1903 = vmatmul.mubr.f32.gmra.mrb[0].mxu0 %v1824
      %v1904 = vpop.f32.mrb[0].mxu0
      %v1905 = vadd.f32 0.0, %v1904
      %v1906 = vpop.f32.mrb[0].mxu0
      %1907 = vdwg.mxu0
      %1911 = vrot.lane.b32.xlu0 %v1895, 16
      %v1912 = vpop.permute.xlu0 %1911
      %1913 = vrot.lane.b32.xlu0 %v1900, 16
      %v1914 = vpop.permute.xlu0 %1913
      %1915 = vrot.lane.b32.xlu0 %v1905, 16
      %v1916 = vpop.permute.xlu0 %1915
      %v1920 = vsel %vm456, %v1656, %v1912
      %v1921 = vsel %vm456, %v1661, %v1914
      %v1922 = vsel %vm456, %v1666, %v1916
      %v1923 = vpack.c.bf16 %v1921, %v1920
      %v1924 = vpack.c.bf16 %v1922, %v1922
      %v1929 = vunpack.c.l.b16 %v1283
      %v1930 = vunpack.c.l.b16 %v1284
      %v1931 = vunpack.c.l.b16 %v1285
      %v1932 = vunpack.c.l.b16 %v1286
      %v1933 = vpack.c.b16 %v1930, %v1929
      %v1934 = vpack.c.b16 %v1932, %v1931
      %v1938 = vsel %vm319, %v1923, 0
      %v1941 = vsel %vm319, %v1924, 0
      %1943 = vmatprep.subr.bf16.mxu0 0
      %1944 = vmatpush1.bf16.msra.mxu0 %v1933
      %1945 = vmatprep.subr.bf16.mxu0 0
      %1946 = vmatpush1.bf16.msra.mxu0 %v1934
      %1947 = vmatprep.subr.bf16.mxu0 0
      %1948 = vmatpush1.bf16.msra.mxu0 0
      %1949 = vmatprep.subr.bf16.mxu0 0
      %1950 = vmatpush1.bf16.msra.mxu0 0
      %1951 = vmatprep.subr.bf16.mxu0 0
      %1952 = vmatpush1.bf16.msra.mxu0 0
      %1953 = vmatprep.subr.bf16.mxu0 0
      %1954 = vmatpush1.bf16.msra.mxu0 0
      %1955 = vmatprep.subr.bf16.mxu0 0
      %1956 = vmatpush1.bf16.msra.mxu0 0
      %1957 = vmatprep.subr.bf16.mxu0 0
      %1958 = vmatpush1.bf16.msra.mxu0 0
      %1959 = vmatprep.subr.bf16.mxu0 0
      %1960 = vmatpush1.bf16.msra.mxu0 0
      %1961 = vmatprep.subr.bf16.mxu0 0
      %1962 = vmatpush1.bf16.msra.mxu0 0
      %1963 = vmatprep.subr.bf16.mxu0 0
      %1964 = vmatpush1.bf16.msra.mxu0 0
      %1965 = vmatprep.subr.bf16.mxu0 0
      %1966 = vmatpush1.bf16.msra.mxu0 0
      %1967 = vmatprep.subr.bf16.mxu0 0
      %1968 = vmatpush1.bf16.msra.mxu0 0
      %1969 = vmatprep.subr.bf16.mxu0 0
      %1970 = vmatpush1.bf16.msra.mxu0 0
      %1971 = vmatprep.subr.bf16.mxu0 0
      %1972 = vmatpush1.bf16.msra.mxu0 0
      %1973 = vmatprep.subr.bf16.mxu0 0
      %1974 = vmatpush1.bf16.msra.mxu0 0
      %1975 = vmatprep.mubr.bf16.mxu0 0
      %1976 = vmatmul.mubr.bf16.gmra.mrb[0].mxu0 %v1938
      %v1977 = vpop.f32.mrb[0].mxu0
      %v1978 = vadd.f32 0.0, %v1977
      %v1979 = vpop.f32.mrb[0].mxu0
      %v1980 = vpop.f32.mrb[0].mxu0
      %v1981 = vadd.f32 0.0, %v1980
      %v1982 = vpop.f32.mrb[0].mxu0
      %1983 = vmatprep.mubr.bf16.mxu0 0
      %1984 = vmatmul.mubr.bf16.gmra.mrb[0].mxu0 %v1941
      %v1985 = vpop.f32.mrb[0].mxu0
      %v1986 = vadd.f32 0.0, %v1985
      %v1987 = vpop.f32.mrb[0].mxu0
      %v1988 = vpop.f32.mrb[0].mxu0
      %v1989 = vpop.f32.mrb[0].mxu0
      %1990 = vdwg.mxu0
      %v1991 = vadd.f32 %v1275, %v1978
      %v1992 = vadd.f32 %v1276, %v1981
      %v1993 = vadd.f32 %v1277, %v1986
      %v1994 = vlaneseq
      %v1995 = vshrl.u32 %v1994, 7
      %v1996 = vsub.s32 3, %v1995
      %v1997 = vrot.slane %v1307, %v1996
      %v1998 = vadd.f32 %v1991, %v1997
      %v1999 = vadd.f32 %v1992, %v1997
      %v2000 = vadd.f32 %v1993, %v1997
      %v2001 = vsel %vm319, %v1998, 0.0
      %2002 = vadd.xlane.f32.xlu0 %v2001
      %v2003 = vpop.xlane.xlu0 %2002
      %v2004 = vsel %vm319, %v1999, 0.0
      %2005 = vadd.xlane.f32.xlu0 %v2004
      %v2006 = vpop.xlane.xlu0 %2005
      %v2007 = vsel %vm326, %v2000, 0.0
      %2008 = vadd.xlane.f32.xlu0 %v2007
      %v2009 = vpop.xlane.xlu0 %2008
      %v2010 = vmul.f32 %v2003, %v330
      %v2011 = vmul.f32 %v2006, %v330
      %v2012 = vmul.f32 %v2009, %v330
      %v2013 = vsub.f32 %v1998, %v2010
      %v2014 = vsub.f32 %v1999, %v2011
      %v2015 = vsub.f32 %v2000, %v2012
      %v2016 = vmul.f32 %v2013, %v2013
      %v2017 = vmul.f32 %v2014, %v2014
      %v2018 = vmul.f32 %v2015, %v2015
      %v2019 = vsel %vm319, %v2016, 0.0
      %2020 = vadd.xlane.f32.xlu0 %v2019
      %v2021 = vpop.xlane.xlu0 %2020
      %v2022 = vsel %vm319, %v2017, 0.0
      %2023 = vadd.xlane.f32.xlu0 %v2022
      %v2024 = vpop.xlane.xlu0 %2023
      %v2025 = vsel %vm326, %v2018, 0.0
      %2026 = vadd.xlane.f32.xlu0 %v2025
      %v2027 = vpop.xlane.xlu0 %2026
      %v2028 = vmul.f32 %v2021, %v330
      %v2029 = vmul.f32 %v2024, %v330
      %v2030 = vmul.f32 %v2027, %v330
      %v2031 = vadd.f32 %v2028, 1e-12
      %v2032 = vadd.f32 %v2029, 1e-12
      %v2033 = vadd.f32 %v2030, 1e-12
      %v2034 = vrsqrt.pop %v2031
      %v2035 = vrsqrt.pop %v2032
      %v2036 = vrsqrt.pop %v2033
      %v2037 = vmul.f32 %v2013, %v2034
      %v2038 = vmul.f32 %v2014, %v2035
      %v2039 = vmul.f32 %v2015, %v2036
      %v2040 = vlaneseq
      %v2041 = vshrl.u32 %v2040, 7
      %v2042 = vsub.s32 4, %v2041
      %v2043 = vrot.slane %v1307, %v2042
      %v2044 = vmul.f32 %v2037, %v2043
      %v2045 = vmul.f32 %v2038, %v2043
      %v2046 = vmul.f32 %v2039, %v2043
      %v2047 = vlaneseq
      %v2048 = vshrl.u32 %v2047, 7
      %v2049 = vsub.s32 5, %v2048
      %v2050 = vrot.slane %v1307, %v2049
      %v2051 = vadd.f32 %v2044, %v2050
      %v2052 = vadd.f32 %v2045, %v2050
      %v2053 = vadd.f32 %v2046, %v2050
      %v2054 = vpack.c.bf16 %v2052, %v2051
      %v2055 = vpack.c.bf16 %v2053, %v2053
      %v2056 = vlaneseq
      %v2057 = vshrl.u32 %v2056, 7
      %v2058 = vsub.s32 6, %v2057
      %v2059 = vrot.slane %v1307, %v2058
      %v2064 = vunpack.c.l.b16 %v1287
      %v2065 = vunpack.c.l.b16 %v1288
      %v2066 = vunpack.c.l.b16 %v1289
      %v2067 = vunpack.c.l.b16 %v1290
      %v2068 = vpack.c.b16 %v2065, %v2064
      %v2069 = vpack.c.b16 %v2067, %v2066
      %v2073 = vsel %vm319, %v2054, 0
      %v2076 = vsel %vm319, %v2055, 0
      %2078 = vmatprep.subr.bf16.mxu0 0
      %2079 = vmatpush1.bf16.msra.mxu0 %v2068
      %2080 = vmatprep.subr.bf16.mxu0 0
      %2081 = vmatpush1.bf16.msra.mxu0 %v2069
      %2082 = vmatprep.subr.bf16.mxu0 0
      %2083 = vmatpush1.bf16.msra.mxu0 0
      %2084 = vmatprep.subr.bf16.mxu0 0
      %2085 = vmatpush1.bf16.msra.mxu0 0
      %2086 = vmatprep.subr.bf16.mxu0 0
      %2087 = vmatpush1.bf16.msra.mxu0 0
      %2088 = vmatprep.subr.bf16.mxu0 0
      %2089 = vmatpush1.bf16.msra.mxu0 0
      %2090 = vmatprep.subr.bf16.mxu0 0
      %2091 = vmatpush1.bf16.msra.mxu0 0
      %2092 = vmatprep.subr.bf16.mxu0 0
      %2093 = vmatpush1.bf16.msra.mxu0 0
      %2094 = vmatprep.subr.bf16.mxu0 0
      %2095 = vmatpush1.bf16.msra.mxu0 0
      %2096 = vmatprep.subr.bf16.mxu0 0
      %2097 = vmatpush1.bf16.msra.mxu0 0
      %2098 = vmatprep.subr.bf16.mxu0 0
      %2099 = vmatpush1.bf16.msra.mxu0 0
      %2100 = vmatprep.subr.bf16.mxu0 0
      %2101 = vmatpush1.bf16.msra.mxu0 0
      %2102 = vmatprep.subr.bf16.mxu0 0
      %2103 = vmatpush1.bf16.msra.mxu0 0
      %2104 = vmatprep.subr.bf16.mxu0 0
      %2105 = vmatpush1.bf16.msra.mxu0 0
      %2106 = vmatprep.subr.bf16.mxu0 0
      %2107 = vmatpush1.bf16.msra.mxu0 0
      %2108 = vmatprep.subr.bf16.mxu0 0
      %2109 = vmatpush1.bf16.msra.mxu0 0
      %2110 = vmatprep.mubr.bf16.mxu0 0
      %2111 = vmatmul.mubr.bf16.gmra.mrb[0].mxu0 %v2073
      %v2112 = vpop.f32.mrb[0].mxu0
      %v2113 = vadd.f32 %v2059, %v2112
      %v2114 = vpop.f32.mrb[0].mxu0
      %v2115 = vpop.f32.mrb[0].mxu0
      %v2116 = vadd.f32 %v2059, %v2115
      %v2117 = vpop.f32.mrb[0].mxu0
      %2118 = vmatprep.mubr.bf16.mxu0 0
      %2119 = vmatmul.mubr.bf16.gmra.mrb[0].mxu0 %v2076
      %v2120 = vpop.f32.mrb[0].mxu0
      %v2121 = vadd.f32 %v2059, %v2120
      %v2122 = vpop.f32.mrb[0].mxu0
      %v2123 = vpop.f32.mrb[0].mxu0
      %v2124 = vpop.f32.mrb[0].mxu0
      %2125 = vdwg.mxu0
      %v2126 = vmul.f32 %v2113, 0.5
      %v2127 = vmul.f32 %v2116, 0.5
      %v2128 = vmul.f32 %v2121, 0.5
      %v2129 = vmul.f32 %v2113, 0.044715
      %v2130 = vmul.f32 %v2116, 0.044715
      %v2131 = vmul.f32 %v2121, 0.044715
      %v2132 = vmul.f32 %v2129, %v2113
      %v2133 = vmul.f32 %v2130, %v2116
      %v2134 = vmul.f32 %v2131, %v2121
      %v2135 = vmul.f32 %v2132, %v2113
      %v2136 = vmul.f32 %v2133, %v2116
      %v2137 = vmul.f32 %v2134, %v2121
      %v2138 = vadd.f32 %v2113, %v2135
      %v2139 = vadd.f32 %v2116, %v2136
      %v2140 = vadd.f32 %v2121, %v2137
      %v2141 = vmul.f32 %v2138, 0.7978846
      %v2142 = vmul.f32 %v2139, 0.7978846
      %v2143 = vmul.f32 %v2140, 0.7978846
      %v2144 = vtanh.pop %v2141
      %v2145 = vtanh.pop %v2142
      %v2146 = vtanh.pop %v2143
      %v2147 = vadd.f32 %v2144, 1.0
      %v2148 = vadd.f32 %v2145, 1.0
      %v2149 = vadd.f32 %v2146, 1.0
      %v2150 = vmul.f32 %v2126, %v2147
      %v2151 = vmul.f32 %v2127, %v2148
      %v2152 = vmul.f32 %v2128, %v2149
      %v2153 = vpack.c.bf16 %v2151, %v2150
      %v2154 = vpack.c.bf16 %v2152, %v2152
      %v2171 = vunpack.c.l.b16 %v1291
      %v2172 = vunpack.c.l.b16 %v1292
      %v2173 = vunpack.c.l.b16 %v1293
      %v2174 = vunpack.c.l.b16 %v1294
      %v2175 = vunpack.c.l.b16 %v1295
      %v2176 = vunpack.c.l.b16 %v1296
      %v2177 = vunpack.c.l.b16 %v1297
      %v2178 = vunpack.c.l.b16 %v1298
      %v2179 = vunpack.c.l.b16 %v1299
      %v2180 = vunpack.c.l.b16 %v1300
      %v2181 = vunpack.c.l.b16 %v1301
      %v2182 = vunpack.c.l.b16 %v1302
      %v2183 = vunpack.c.l.b16 %v1303
      %v2184 = vunpack.c.l.b16 %v1304
      %v2185 = vunpack.c.l.b16 %v1305
      %v2186 = vunpack.c.l.b16 %v1306
      %v2187 = vpack.c.b16 %v2172, %v2171
      %v2188 = vpack.c.b16 %v2174, %v2173
      %v2189 = vpack.c.b16 %v2176, %v2175
      %v2190 = vpack.c.b16 %v2178, %v2177
      %v2191 = vpack.c.b16 %v2180, %v2179
      %v2192 = vpack.c.b16 %v2182, %v2181
      %v2193 = vpack.c.b16 %v2184, %v2183
      %v2194 = vpack.c.b16 %v2186, %v2185
      %2203 = vmatprep.subr.bf16.mxu0 0
      %2204 = vmatpush1.bf16.msra.mxu0 %v2187
      %2205 = vmatprep.subr.bf16.mxu0 0
      %2206 = vmatpush1.bf16.msra.mxu0 %v2188
      %2207 = vmatprep.subr.bf16.mxu0 0
      %2208 = vmatpush1.bf16.msra.mxu0 %v2189
      %2209 = vmatprep.subr.bf16.mxu0 0
      %2210 = vmatpush1.bf16.msra.mxu0 %v2190
      %2211 = vmatprep.subr.bf16.mxu0 0
      %2212 = vmatpush1.bf16.msra.mxu0 %v2191
      %2213 = vmatprep.subr.bf16.mxu0 0
      %2214 = vmatpush1.bf16.msra.mxu0 %v2192
      %2215 = vmatprep.subr.bf16.mxu0 0
      %2216 = vmatpush1.bf16.msra.mxu0 %v2193
      %2217 = vmatprep.subr.bf16.mxu0 0
      %2218 = vmatpush1.bf16.msra.mxu0 %v2194
      %2219 = vmatprep.subr.bf16.mxu0 0
      %2220 = vmatpush1.bf16.msra.mxu0 0
      %2221 = vmatprep.subr.bf16.mxu0 0
      %2222 = vmatpush1.bf16.msra.mxu0 0
      %2223 = vmatprep.subr.bf16.mxu0 0
      %2224 = vmatpush1.bf16.msra.mxu0 0
      %2225 = vmatprep.subr.bf16.mxu0 0
      %2226 = vmatpush1.bf16.msra.mxu0 0
      %2227 = vmatprep.subr.bf16.mxu0 0
      %2228 = vmatpush1.bf16.msra.mxu0 0
      %2229 = vmatprep.subr.bf16.mxu0 0
      %2230 = vmatpush1.bf16.msra.mxu0 0
      %2231 = vmatprep.subr.bf16.mxu0 0
      %2232 = vmatpush1.bf16.msra.mxu0 0
      %2233 = vmatprep.subr.bf16.mxu0 0
      %2234 = vmatpush1.bf16.msra.mxu0 0
      %2235 = vmatprep.mubr.bf16.mxu0 0
      %2236 = vmatmul.mubr.bf16.gmra.mrb[0].mxu0 %v2153
      %v2237 = vpop.f32.mrb[0].mxu0
      %v2238 = vadd.f32 0.0, %v2237
      %v2239 = vpop.f32.mrb[0].mxu0
      %v2240 = vpop.f32.mrb[0].mxu0
      %v2241 = vpop.f32.mrb[0].mxu0
      %2242 = vmatprep.mubr.bf16.mxu0 0
      %2243 = vmatmul.mubr.bf16.gmra.mrb[0].mxu0 %v2154
      %v2244 = vpop.f32.mrb[0].mxu0
      %v2245 = vpop.f32.mrb[0].mxu0
      %v2246 = vpop.f32.mrb[0].mxu0
      %v2247 = vpop.f32.mrb[0].mxu0
      %2248 = vdwg.mxu0
      %v2249 = vadd.f32 %v1998, %v2238
      %v2250 = vlaneseq
      %v2251 = vshrl.u32 %v2250, 7
      %v2252 = vsub.s32 7, %v2251
      %v2253 = vrot.slane %v1307, %v2252
      %v2254 = vadd.f32 %v2249, %v2253
      %v2255 = vsel %vm326, %v2254, 0.0
      %2256 = vadd.xlane.f32.xlu0 %v2255
      %v2257 = vpop.xlane.xlu0 %2256
      %v2258 = vmul.f32 %v2257, %v330
      %v2259 = vsub.f32 %v2254, %v2258
      %v2260 = vmul.f32 %v2259, %v2259
      %v2261 = vsel %vm326, %v2260, 0.0
      %2262 = vadd.xlane.f32.xlu0 %v2261
      %v2263 = vpop.xlane.xlu0 %2262
      %v2264 = vmul.f32 %v2263, %v330
      %v2265 = vadd.f32 %v2264, 1e-12
      %v2266 = vrsqrt.pop %v2265
      %v2267 = vmul.f32 %v2259, %v2266
      %v2268 = vmul.f32 %v2267, %v208
      %v2269 = vadd.f32 %v2268, %v209
      %v2270 = vpack.c.bf16 %v2269, %v2269
      %v2275 = vunpack.c.l.b16 %v201
      %v2276 = vunpack.c.l.b16 %v202
      %v2277 = vunpack.c.l.b16 %v203
      %v2278 = vunpack.c.l.b16 %v204
      %v2279 = vpack.c.b16 %v2276, %v2275
      %v2280 = vpack.c.b16 %v2278, %v2277
      %v2284 = vsel %vm319, %v2270, 0
      %2286 = vmatprep.subr.bf16.mxu0 0
      %2287 = vmatpush1.bf16.msra.mxu0 %v2279
      %2288 = vmatprep.subr.bf16.mxu0 0
      %2289 = vmatpush1.bf16.msra.mxu0 %v2280
      %2290 = vmatprep.subr.bf16.mxu0 0
      %2291 = vmatpush1.bf16.msra.mxu0 0
      %2292 = vmatprep.subr.bf16.mxu0 0
      %2293 = vmatpush1.bf16.msra.mxu0 0
      %2294 = vmatprep.subr.bf16.mxu0 0
      %2295 = vmatpush1.bf16.msra.mxu0 0
      %2296 = vmatprep.subr.bf16.mxu0 0
      %2297 = vmatpush1.bf16.msra.mxu0 0
      %2298 = vmatprep.subr.bf16.mxu0 0
      %2299 = vmatpush1.bf16.msra.mxu0 0
      %2300 = vmatprep.subr.bf16.mxu0 0
      %2301 = vmatpush1.bf16.msra.mxu0 0
      %2302 = vmatprep.subr.bf16.mxu0 0
      %2303 = vmatpush1.bf16.msra.mxu0 0
      %2304 = vmatprep.subr.bf16.mxu0 0
      %2305 = vmatpush1.bf16.msra.mxu0 0
      %2306 = vmatprep.subr.bf16.mxu0 0
      %2307 = vmatpush1.bf16.msra.mxu0 0
      %2308 = vmatprep.subr.bf16.mxu0 0
      %2309 = vmatpush1.bf16.msra.mxu0 0
      %2310 = vmatprep.subr.bf16.mxu0 0
      %2311 = vmatpush1.bf16.msra.mxu0 0
      %2312 = vmatprep.subr.bf16.mxu0 0
      %2313 = vmatpush1.bf16.msra.mxu0 0
      %2314 = vmatprep.subr.bf16.mxu0 0
      %2315 = vmatpush1.bf16.msra.mxu0 0
      %2316 = vmatprep.subr.bf16.mxu0 0
      %2317 = vmatpush1.bf16.msra.mxu0 0
      %2318 = vmatprep.mubr.bf16.mxu0 0
      %2319 = vmatmul.mubr.bf16.gmra.mrb[0].mxu0 %v2284
      %v2320 = vpop.f32.mrb[0].mxu0
      %v2321 = vadd.f32 %v210, %v2320
      %v2322 = vpop.f32.mrb[0].mxu0
      %v2323 = vpop.f32.mrb[0].mxu0
      %v2324 = vpop.f32.mrb[0].mxu0
      %2325 = vdwg.mxu0
      %2326 = vst [vmem:[%s193] sm:$0x1] %v2321
      %p2327 = scmp.lt.s32.totalorder %s15, 1
      %s2328 = scalar_select %p2327, %s15, 1
      %s2329 = scalar_lea.vmem %s4, %s2328
      // Predicated region
      $region37: #{vit_forward.1} parent=35 // pred_check
        %p2330 = pneg %p122
      $region38: #{vit_forward.1} parent=35 // pred_check_branch
        %2332 = sbr.rel (%p2330) target = $region40
      $region39: #{vit_forward.1} parent=35 // pred_region
        _
      $region40: #{vit_forward.1} parent=35 // pred_fallthru
        _
    $region36: #{vit_forward.1} parent=5 // pred_fallthru
      _
    %p2333 = scmp.le.s32.totalorder 2, %s10
    // Predicated region
    $region41: #{vit_forward.1} parent=5 // pred_check
      %p2334 = pneg %p2333
    $region42: #{vit_forward.1} parent=5 // pred_check_branch
      %2336 = sbr.rel (%p2334) target = $region44
    $region43: #{vit_forward.1} parent=5 // pred_region
      %s2337 = ssub.s32 %s10, 2
      // Predicated region
      $region45: #{vit_forward.1} parent=43 // pred_check
        %p2338 = pneg %p128
      $region46: #{vit_forward.1} parent=43 // pred_check_branch
        %2340 = sbr.rel (%p2338) target = $region48
      $region47: #{vit_forward.1} parent=43 // pred_region
        %p2341 = scmp.lt.s32.totalorder %s16, 1
        %s2342 = scalar_select %p2341, %s16, 1
        %s2343 = scalar_lea.vmem %s4, %s2342
      $region48: #{vit_forward.1} parent=43 // pred_fallthru
        _
    $region44: #{vit_forward.1} parent=5 // pred_fallthru
      _
  $region6: #{vit_forward.1} parent=0 // loop_footer
    %s14 = sadd.s32 1, %s10
  $region7: #{vit_forward.1} parent=0 // loop_footer_branch
    %9 = sbr.rel target = $region3
  $region8: #{vit_forward.1} parent=0 // loop_exit
    _

</llo_original>
